<compile_context>
chip_gen: v6e
topology: v6e:2x2x1
jax: 0.10.0
libtpu: 0.0.40
codegen_flags: <defaults>
</compile_context>

<pallas_src>
import functools

import jax
import jax.numpy as jnp
from jax.experimental import pallas as pl
from jax.experimental.pallas import tpu as pltpu


def _lstm_kernel(x_ref, wih_ref, whh_ref, b_ref, out_ref, xproj_sc,
                 *, seq_len, b_pad, hidden_pad):
    """Single invocation: input-projection prologue + statically unrolled recurrence."""
    Hp = hidden_pad

    # Prologue: project ALL timesteps at once:  (T*B_pad, E) @ (E, 4*Hp) + bias
    xproj_sc[...] = (
        jnp.dot(x_ref[...], wih_ref[...], preferred_element_type=jnp.float32)
        + b_ref[...]
    )

    h = jnp.zeros((b_pad, Hp), jnp.float32)
    c = jnp.zeros((b_pad, Hp), jnp.float32)

    # Static (fully unrolled) time loop; every slice below is static and
    # sublane/lane aligned (b_pad == 8, Hp a multiple of 128).
    for t in range(seq_len):
        g_x = xproj_sc[t * b_pad:(t + 1) * b_pad, :]                  # (B_pad, 4Hp)
        gates = g_x + jnp.dot(h, whh_ref[...],
                              preferred_element_type=jnp.float32)     # (B_pad, 4Hp)

        i_g = jax.nn.sigmoid(gates[:, 0:Hp])
        f_g = jax.nn.sigmoid(gates[:, Hp:2 * Hp])
        g_g = jnp.tanh(gates[:, 2 * Hp:3 * Hp])
        o_g = jax.nn.sigmoid(gates[:, 3 * Hp:4 * Hp])

        c = f_g * c + i_g * g_g
        h = o_g * jnp.tanh(c)

    out_ref[...] = h                                                   # (B_pad, Hp)


def _pad_gate_cols(w, H, Hp):
    """Zero-pad each of the 4 gate blocks (width H) along the last axis to width Hp."""
    parts = []
    for g in range(4):
        blk = w[..., g * H:(g + 1) * H]
        pad_width = [(0, 0)] * (w.ndim - 1) + [(0, Hp - H)]
        parts.append(jnp.pad(blk, pad_width))
    return jnp.concatenate(parts, axis=-1)


def lstm_model_forward(x_tokens, params):
    """x_tokens: (B, T) int32 token ids. Returns (B, 2) f32 logits."""
    emb_table = params["embedding"]          # (V, E)
    w_ih = params["w_ih"]                    # (E, 4H)   (PyTorch W_ih transposed)
    w_hh = params["w_hh"]                    # (H, 4H)   (PyTorch W_hh transposed)
    bias = params["bias"]                    # (1, 4H)   (b_ih + b_hh)
    w_fc = params["w_fc"]                    # (H, 2)
    b_fc = params["b_fc"]                    # (1, 2)

    B, T = x_tokens.shape
    E = emb_table.shape[1]
    H = w_hh.shape[0]

    # Lane-align hidden size and sublane-align batch.
    Hp = ((H + 127) // 128) * 128            # 196 -> 256
    B_pad = max(8, ((B + 7) // 8) * 8)       # 2   -> 8

    # Per-gate zero padding keeps padded h/c lanes exactly zero through the recurrence.
    w_ih_p = _pad_gate_cols(w_ih, H, Hp)                                   # (E, 4Hp)
    w_hh_p = jnp.pad(_pad_gate_cols(w_hh, H, Hp), ((0, Hp - H), (0, 0)))   # (Hp, 4Hp)
    bias_p = _pad_gate_cols(bias, H, Hp)                                   # (1, 4Hp)

    # --- glue: embedding lookup + dropout (identity at eval) ---
    embedded = jnp.take(emb_table, x_tokens, axis=0)                  # (B, T, E)
    x_tm = jnp.transpose(embedded, (1, 0, 2))                         # (T, B, E)
    x_tm = jnp.pad(x_tm, ((0, 0), (0, B_pad - B), (0, 0)))            # (T, B_pad, E)
    x2d = x_tm.reshape(T * B_pad, E)                                  # (T*B_pad, E)

    kernel = functools.partial(_lstm_kernel, seq_len=T, b_pad=B_pad, hidden_pad=Hp)

    h_last = pl.pallas_call(
        kernel,
        out_shape=jax.ShapeDtypeStruct((B_pad, Hp), jnp.float32),
        grid_spec=pltpu.PrefetchScalarGridSpec(
            num_scalar_prefetch=0,
            grid=(1,),
            in_specs=[
                pl.BlockSpec((T * B_pad, E), lambda i: (0, 0)),   # x (all timesteps)
                pl.BlockSpec((E, 4 * Hp), lambda i: (0, 0)),      # W_ih (padded)
                pl.BlockSpec((Hp, 4 * Hp), lambda i: (0, 0)),     # W_hh (padded)
                pl.BlockSpec((1, 4 * Hp), lambda i: (0, 0)),      # bias (padded)
            ],
            out_specs=pl.BlockSpec((B_pad, Hp), lambda i: (0, 0)),
            scratch_shapes=[
                pltpu.VMEM((T * B_pad, 4 * Hp), jnp.float32),     # hoisted x-projection
            ],
        ),
        compiler_params=pltpu.CompilerParams(
            dimension_semantics=("arbitrary",),
        ),
    )(x2d, w_ih_p, w_hh_p, bias_p)

    # Final linear layer (tiny (H,2) projection) on the un-padded last hidden state.
    logits = jnp.dot(h_last[:B, :H], w_fc,
                     preferred_element_type=jnp.float32) + b_fc       # (B, 2)
    return logits


def init_params(key, vocab_size, embed_dim, lstm_out):
    """Deterministic init mimicking PyTorch default shapes/distributions."""
    k_emb, k_wih, k_whh, k_bih, k_bhh, k_wfc, k_bfc = jax.random.split(key, 7)
    H = lstm_out
    s_lstm = 1.0 / jnp.sqrt(H)
    s_fc = 1.0 / jnp.sqrt(H)

    emb = jax.random.normal(k_emb, (vocab_size, embed_dim), jnp.float32)
    # PyTorch stores W_ih as (4H, E); we store transposed (E, 4H) for x @ W.
    w_ih = jax.random.uniform(k_wih, (embed_dim, 4 * H), jnp.float32,
                              -s_lstm, s_lstm)
    w_hh = jax.random.uniform(k_whh, (H, 4 * H), jnp.float32, -s_lstm, s_lstm)
    b_ih = jax.random.uniform(k_bih, (4 * H,), jnp.float32, -s_lstm, s_lstm)
    b_hh = jax.random.uniform(k_bhh, (4 * H,), jnp.float32, -s_lstm, s_lstm)
    w_fc = jax.random.uniform(k_wfc, (H, 2), jnp.float32, -s_fc, s_fc)
    b_fc = jax.random.uniform(k_bfc, (2,), jnp.float32, -s_fc, s_fc)

    return {
        "embedding": emb,
        "w_ih": w_ih,
        "w_hh": w_hh,
        "bias": (b_ih + b_hh).reshape(1, 4 * H),
        "w_fc": w_fc,
        "b_fc": b_fc.reshape(1, 2),
    }


if __name__ == "__main__":
    vocab_size = 50
    embed_dim = 128
    lstm_out = 196
    B, T = 2, 8

    key = jax.random.PRNGKey(0)
    k_x, k_p = jax.random.split(key)

    params = init_params(k_p, vocab_size, embed_dim, lstm_out)
    x = jax.random.randint(k_x, (B, T), 0, vocab_size, dtype=jnp.int32)

    logits = lstm_model_forward(x, params)
    jax.block_until_ready(logits)
    assert logits.shape == (B, 2)
    assert bool(jnp.all(jnp.isfinite(logits)))
    print("KERNEL_OK")
</pallas_src>

<mosaic_0001>
module attributes {stable_mosaic.version = 11 : i64} {
  func.func @_lstm_kernel(%arg0: i32, %arg1: memref<64x128xf32, #tpu.memory_space<vmem>>, %arg2: memref<128x1024xf32, #tpu.memory_space<vmem>>, %arg3: memref<256x1024xf32, #tpu.memory_space<vmem>>, %arg4: memref<1x1024xf32, #tpu.memory_space<vmem>>, %arg5: memref<8x256xf32, #tpu.memory_space<vmem>>, %arg6: memref<64x1024xf32, #tpu.memory_space<vmem>>) attributes {dimension_semantics = [#tpu.dimension_semantics<arbitrary>], iteration_bounds = array<i64: 1>, scalar_prefetch = 0 : i64, scratch_operands = 1 : i64, tpu.core_type = #tpu.core_type<tc>, window_params = [{pipeline_mode = #tpu.pipeline_mode<synchronous>, transform_indices = @transform_0, window_bounds = array<i64: 64, 128>}, {pipeline_mode = #tpu.pipeline_mode<synchronous>, transform_indices = @transform_1, window_bounds = array<i64: 128, 1024>}, {pipeline_mode = #tpu.pipeline_mode<synchronous>, transform_indices = @transform_2, window_bounds = array<i64: 256, 1024>}, {pipeline_mode = #tpu.pipeline_mode<synchronous>, transform_indices = @transform_3, window_bounds = array<i64: 1, 1024>}, {pipeline_mode = #tpu.pipeline_mode<synchronous>, transform_indices = @transform_4, window_bounds = array<i64: 8, 256>}]} {
    %c0 = arith.constant 0 : index
    %c0_0 = arith.constant 0 : index
    %0 = vector.load %arg1[%c0, %c0_0] : memref<64x128xf32, #tpu.memory_space<vmem>>, vector<64x128xf32>
    %c0_1 = arith.constant 0 : index
    %c0_2 = arith.constant 0 : index
    %1 = vector.load %arg2[%c0_1, %c0_2] : memref<128x1024xf32, #tpu.memory_space<vmem>>, vector<128x1024xf32>
    %cst = arith.constant dense<0.000000e+00> : vector<64x1024xf32>
    %2 = tpu.matmul %0, %1, %cst {dimension_numbers = #tpu.dot_dimension_numbers<[1], [0], [0], [1], [0, 0, 1, 1], [], []>} : vector<64x128xf32>, vector<128x1024xf32>, vector<64x1024xf32> -> vector<64x1024xf32>
    %c0_3 = arith.constant 0 : index
    %c0_4 = arith.constant 0 : index
    %3 = vector.load %arg4[%c0_3, %c0_4] : memref<1x1024xf32, #tpu.memory_space<vmem>>, vector<1x1024xf32>
    %4 = vector.broadcast %3 : vector<1x1024xf32> to vector<64x1024xf32>
    %5 = arith.addf %2, %4 : vector<64x1024xf32>
    %c0_5 = arith.constant 0 : index
    %c0_6 = arith.constant 0 : index
    %6 = vector.load %arg6[%c0_5, %c0_6] : memref<64x1024xf32, #tpu.memory_space<vmem>>, vector<64x1024xf32>
    tpu.vector_store %arg6[%c0_5, %c0_6], %5 {strides = array<i32>} : memref<64x1024xf32, #tpu.memory_space<vmem>>, vector<64x1024xf32>,
    %cst_7 = arith.constant 0.000000e+00 : f32
    %7 = vector.broadcast %cst_7 : f32 to vector<8x256xf32>
    %cst_8 = arith.constant 0.000000e+00 : f32
    %8 = vector.broadcast %cst_8 : f32 to vector<8x256xf32>
    %c0_9 = arith.constant 0 : index
    %c0_10 = arith.constant 0 : index
    %9 = vector.load %arg6[%c0_9, %c0_10] : memref<64x1024xf32, #tpu.memory_space<vmem>>, vector<8x1024xf32>
    %c0_11 = arith.constant 0 : index
    %c0_12 = arith.constant 0 : index
    %10 = vector.load %arg3[%c0_11, %c0_12] : memref<256x1024xf32, #tpu.memory_space<vmem>>, vector<256x1024xf32>
    %cst_13 = arith.constant dense<0.000000e+00> : vector<8x1024xf32>
    %11 = tpu.matmul %7, %10, %cst_13 {dimension_numbers = #tpu.dot_dimension_numbers<[1], [0], [0], [1], [0, 0, 1, 1], [], []>} : vector<8x256xf32>, vector<256x1024xf32>, vector<8x1024xf32> -> vector<8x1024xf32>
    %12 = arith.addf %9, %11 : vector<8x1024xf32>
    %13 = vector.extract_strided_slice %12 {offsets = [0, 0], sizes = [8, 256], strides = [1, 1]} : vector<8x1024xf32> to vector<8x256xf32>
    %14 = arith.negf %13 : vector<8x256xf32>
    %15 = math.exp %14 : vector<8x256xf32>
    %cst_14 = arith.constant 1.000000e+00 : f32
    %16 = vector.broadcast %cst_14 : f32 to vector<8x256xf32>
    %17 = arith.addf %16, %15 : vector<8x256xf32>
    %18 = arith.divf %16, %17 : vector<8x256xf32>
    %19 = vector.extract_strided_slice %12 {offsets = [0, 256], sizes = [8, 256], strides = [1, 1]} : vector<8x1024xf32> to vector<8x256xf32>
    %20 = arith.negf %19 : vector<8x256xf32>
    %21 = math.exp %20 : vector<8x256xf32>
    %cst_15 = arith.constant 1.000000e+00 : f32
    %22 = vector.broadcast %cst_15 : f32 to vector<8x256xf32>
    %23 = arith.addf %22, %21 : vector<8x256xf32>
    %24 = arith.divf %22, %23 : vector<8x256xf32>
    %25 = vector.extract_strided_slice %12 {offsets = [0, 512], sizes = [8, 256], strides = [1, 1]} : vector<8x1024xf32> to vector<8x256xf32>
    %26 = math.tanh %25 : vector<8x256xf32>
    %27 = vector.extract_strided_slice %12 {offsets = [0, 768], sizes = [8, 256], strides = [1, 1]} : vector<8x1024xf32> to vector<8x256xf32>
    %28 = arith.negf %27 : vector<8x256xf32>
    %29 = math.exp %28 : vector<8x256xf32>
    %cst_16 = arith.constant 1.000000e+00 : f32
    %30 = vector.broadcast %cst_16 : f32 to vector<8x256xf32>
    %31 = arith.addf %30, %29 : vector<8x256xf32>
    %32 = arith.divf %30, %31 : vector<8x256xf32>
    %33 = arith.mulf %24, %8 : vector<8x256xf32>
    %34 = arith.mulf %18, %26 : vector<8x256xf32>
    %35 = arith.addf %33, %34 : vector<8x256xf32>
    %36 = math.tanh %35 : vector<8x256xf32>
    %37 = arith.mulf %32, %36 : vector<8x256xf32>
    %c8 = arith.constant 8 : index
    %c0_17 = arith.constant 0 : index
    %38 = vector.load %arg6[%c8, %c0_17] : memref<64x1024xf32, #tpu.memory_space<vmem>>, vector<8x1024xf32>
    %c0_18 = arith.constant 0 : index
    %c0_19 = arith.constant 0 : index
    %39 = vector.load %arg3[%c0_18, %c0_19] : memref<256x1024xf32, #tpu.memory_space<vmem>>, vector<256x1024xf32>
    %cst_20 = arith.constant dense<0.000000e+00> : vector<8x1024xf32>
    %40 = tpu.matmul %37, %39, %cst_20 {dimension_numbers = #tpu.dot_dimension_numbers<[1], [0], [0], [1], [0, 0, 1, 1], [], []>} : vector<8x256xf32>, vector<256x1024xf32>, vector<8x1024xf32> -> vector<8x1024xf32>
    %41 = arith.addf %38, %40 : vector<8x1024xf32>
    %42 = vector.extract_strided_slice %41 {offsets = [0, 0], sizes = [8, 256], strides = [1, 1]} : vector<8x1024xf32> to vector<8x256xf32>
    %43 = arith.negf %42 : vector<8x256xf32>
    %44 = math.exp %43 : vector<8x256xf32>
    %cst_21 = arith.constant 1.000000e+00 : f32
    %45 = vector.broadcast %cst_21 : f32 to vector<8x256xf32>
    %46 = arith.addf %45, %44 : vector<8x256xf32>
    %47 = arith.divf %45, %46 : vector<8x256xf32>
    %48 = vector.extract_strided_slice %41 {offsets = [0, 256], sizes = [8, 256], strides = [1, 1]} : vector<8x1024xf32> to vector<8x256xf32>
    %49 = arith.negf %48 : vector<8x256xf32>
    %50 = math.exp %49 : vector<8x256xf32>
    %cst_22 = arith.constant 1.000000e+00 : f32
    %51 = vector.broadcast %cst_22 : f32 to vector<8x256xf32>
    %52 = arith.addf %51, %50 : vector<8x256xf32>
    %53 = arith.divf %51, %52 : vector<8x256xf32>
    %54 = vector.extract_strided_slice %41 {offsets = [0, 512], sizes = [8, 256], strides = [1, 1]} : vector<8x1024xf32> to vector<8x256xf32>
    %55 = math.tanh %54 : vector<8x256xf32>
    %56 = vector.extract_strided_slice %41 {offsets = [0, 768], sizes = [8, 256], strides = [1, 1]} : vector<8x1024xf32> to vector<8x256xf32>
    %57 = arith.negf %56 : vector<8x256xf32>
    %58 = math.exp %57 : vector<8x256xf32>
    %cst_23 = arith.constant 1.000000e+00 : f32
    %59 = vector.broadcast %cst_23 : f32 to vector<8x256xf32>
    %60 = arith.addf %59, %58 : vector<8x256xf32>
    %61 = arith.divf %59, %60 : vector<8x256xf32>
    %62 = arith.mulf %53, %35 : vector<8x256xf32>
    %63 = arith.mulf %47, %55 : vector<8x256xf32>
    %64 = arith.addf %62, %63 : vector<8x256xf32>
    %65 = math.tanh %64 : vector<8x256xf32>
    %66 = arith.mulf %61, %65 : vector<8x256xf32>
    %c16 = arith.constant 16 : index
    %c0_24 = arith.constant 0 : index
    %67 = vector.load %arg6[%c16, %c0_24] : memref<64x1024xf32, #tpu.memory_space<vmem>>, vector<8x1024xf32>
    %c0_25 = arith.constant 0 : index
    %c0_26 = arith.constant 0 : index
    %68 = vector.load %arg3[%c0_25, %c0_26] : memref<256x1024xf32, #tpu.memory_space<vmem>>, vector<256x1024xf32>
    %cst_27 = arith.constant dense<0.000000e+00> : vector<8x1024xf32>
    %69 = tpu.matmul %66, %68, %cst_27 {dimension_numbers = #tpu.dot_dimension_numbers<[1], [0], [0], [1], [0, 0, 1, 1], [], []>} : vector<8x256xf32>, vector<256x1024xf32>, vector<8x1024xf32> -> vector<8x1024xf32>
    %70 = arith.addf %67, %69 : vector<8x1024xf32>
    %71 = vector.extract_strided_slice %70 {offsets = [0, 0], sizes = [8, 256], strides = [1, 1]} : vector<8x1024xf32> to vector<8x256xf32>
    %72 = arith.negf %71 : vector<8x256xf32>
    %73 = math.exp %72 : vector<8x256xf32>
    %cst_28 = arith.constant 1.000000e+00 : f32
    %74 = vector.broadcast %cst_28 : f32 to vector<8x256xf32>
    %75 = arith.addf %74, %73 : vector<8x256xf32>
    %76 = arith.divf %74, %75 : vector<8x256xf32>
    %77 = vector.extract_strided_slice %70 {offsets = [0, 256], sizes = [8, 256], strides = [1, 1]} : vector<8x1024xf32> to vector<8x256xf32>
    %78 = arith.negf %77 : vector<8x256xf32>
    %79 = math.exp %78 : vector<8x256xf32>
    %cst_29 = arith.constant 1.000000e+00 : f32
    %80 = vector.broadcast %cst_29 : f32 to vector<8x256xf32>
    %81 = arith.addf %80, %79 : vector<8x256xf32>
    %82 = arith.divf %80, %81 : vector<8x256xf32>
    %83 = vector.extract_strided_slice %70 {offsets = [0, 512], sizes = [8, 256], strides = [1, 1]} : vector<8x1024xf32> to vector<8x256xf32>
    %84 = math.tanh %83 : vector<8x256xf32>
    %85 = vector.extract_strided_slice %70 {offsets = [0, 768], sizes = [8, 256], strides = [1, 1]} : vector<8x1024xf32> to vector<8x256xf32>
    %86 = arith.negf %85 : vector<8x256xf32>
    %87 = math.exp %86 : vector<8x256xf32>
    %cst_30 = arith.constant 1.000000e+00 : f32
    %88 = vector.broadcast %cst_30 : f32 to vector<8x256xf32>
    %89 = arith.addf %88, %87 : vector<8x256xf32>
    %90 = arith.divf %88, %89 : vector<8x256xf32>
    %91 = arith.mulf %82, %64 : vector<8x256xf32>
    %92 = arith.mulf %76, %84 : vector<8x256xf32>
    %93 = arith.addf %91, %92 : vector<8x256xf32>
    %94 = math.tanh %93 : vector<8x256xf32>
    %95 = arith.mulf %90, %94 : vector<8x256xf32>
    %c24 = arith.constant 24 : index
    %c0_31 = arith.constant 0 : index
    %96 = vector.load %arg6[%c24, %c0_31] : memref<64x1024xf32, #tpu.memory_space<vmem>>, vector<8x1024xf32>
    %c0_32 = arith.constant 0 : index
    %c0_33 = arith.constant 0 : index
    %97 = vector.load %arg3[%c0_32, %c0_33] : memref<256x1024xf32, #tpu.memory_space<vmem>>, vector<256x1024xf32>
    %cst_34 = arith.constant dense<0.000000e+00> : vector<8x1024xf32>
    %98 = tpu.matmul %95, %97, %cst_34 {dimension_numbers = #tpu.dot_dimension_numbers<[1], [0], [0], [1], [0, 0, 1, 1], [], []>} : vector<8x256xf32>, vector<256x1024xf32>, vector<8x1024xf32> -> vector<8x1024xf32>
    %99 = arith.addf %96, %98 : vector<8x1024xf32>
    %100 = vector.extract_strided_slice %99 {offsets = [0, 0], sizes = [8, 256], strides = [1, 1]} : vector<8x1024xf32> to vector<8x256xf32>
    %101 = arith.negf %100 : vector<8x256xf32>
    %102 = math.exp %101 : vector<8x256xf32>
    %cst_35 = arith.constant 1.000000e+00 : f32
    %103 = vector.broadcast %cst_35 : f32 to vector<8x256xf32>
    %104 = arith.addf %103, %102 : vector<8x256xf32>
    %105 = arith.divf %103, %104 : vector<8x256xf32>
    %106 = vector.extract_strided_slice %99 {offsets = [0, 256], sizes = [8, 256], strides = [1, 1]} : vector<8x1024xf32> to vector<8x256xf32>
    %107 = arith.negf %106 : vector<8x256xf32>
    %108 = math.exp %107 : vector<8x256xf32>
    %cst_36 = arith.constant 1.000000e+00 : f32
    %109 = vector.broadcast %cst_36 : f32 to vector<8x256xf32>
    %110 = arith.addf %109, %108 : vector<8x256xf32>
    %111 = arith.divf %109, %110 : vector<8x256xf32>
    %112 = vector.extract_strided_slice %99 {offsets = [0, 512], sizes = [8, 256], strides = [1, 1]} : vector<8x1024xf32> to vector<8x256xf32>
    %113 = math.tanh %112 : vector<8x256xf32>
    %114 = vector.extract_strided_slice %99 {offsets = [0, 768], sizes = [8, 256], strides = [1, 1]} : vector<8x1024xf32> to vector<8x256xf32>
    %115 = arith.negf %114 : vector<8x256xf32>
    %116 = math.exp %115 : vector<8x256xf32>
    %cst_37 = arith.constant 1.000000e+00 : f32
    %117 = vector.broadcast %cst_37 : f32 to vector<8x256xf32>
    %118 = arith.addf %117, %116 : vector<8x256xf32>
    %119 = arith.divf %117, %118 : vector<8x256xf32>
    %120 = arith.mulf %111, %93 : vector<8x256xf32>
    %121 = arith.mulf %105, %113 : vector<8x256xf32>
    %122 = arith.addf %120, %121 : vector<8x256xf32>
    %123 = math.tanh %122 : vector<8x256xf32>
    %124 = arith.mulf %119, %123 : vector<8x256xf32>
    %c32 = arith.constant 32 : index
    %c0_38 = arith.constant 0 : index
    %125 = vector.load %arg6[%c32, %c0_38] : memref<64x1024xf32, #tpu.memory_space<vmem>>, vector<8x1024xf32>
    %c0_39 = arith.constant 0 : index
    %c0_40 = arith.constant 0 : index
    %126 = vector.load %arg3[%c0_39, %c0_40] : memref<256x1024xf32, #tpu.memory_space<vmem>>, vector<256x1024xf32>
    %cst_41 = arith.constant dense<0.000000e+00> : vector<8x1024xf32>
    %127 = tpu.matmul %124, %126, %cst_41 {dimension_numbers = #tpu.dot_dimension_numbers<[1], [0], [0], [1], [0, 0, 1, 1], [], []>} : vector<8x256xf32>, vector<256x1024xf32>, vector<8x1024xf32> -> vector<8x1024xf32>
    %128 = arith.addf %125, %127 : vector<8x1024xf32>
    %129 = vector.extract_strided_slice %128 {offsets = [0, 0], sizes = [8, 256], strides = [1, 1]} : vector<8x1024xf32> to vector<8x256xf32>
    %130 = arith.negf %129 : vector<8x256xf32>
    %131 = math.exp %130 : vector<8x256xf32>
    %cst_42 = arith.constant 1.000000e+00 : f32
    %132 = vector.broadcast %cst_42 : f32 to vector<8x256xf32>
    %133 = arith.addf %132, %131 : vector<8x256xf32>
    %134 = arith.divf %132, %133 : vector<8x256xf32>
    %135 = vector.extract_strided_slice %128 {offsets = [0, 256], sizes = [8, 256], strides = [1, 1]} : vector<8x1024xf32> to vector<8x256xf32>
    %136 = arith.negf %135 : vector<8x256xf32>
    %137 = math.exp %136 : vector<8x256xf32>
    %cst_43 = arith.constant 1.000000e+00 : f32
    %138 = vector.broadcast %cst_43 : f32 to vector<8x256xf32>
    %139 = arith.addf %138, %137 : vector<8x256xf32>
    %140 = arith.divf %138, %139 : vector<8x256xf32>
    %141 = vector.extract_strided_slice %128 {offsets = [0, 512], sizes = [8, 256], strides = [1, 1]} : vector<8x1024xf32> to vector<8x256xf32>
    %142 = math.tanh %141 : vector<8x256xf32>
    %143 = vector.extract_strided_slice %128 {offsets = [0, 768], sizes = [8, 256], strides = [1, 1]} : vector<8x1024xf32> to vector<8x256xf32>
    %144 = arith.negf %143 : vector<8x256xf32>
    %145 = math.exp %144 : vector<8x256xf32>
    %cst_44 = arith.constant 1.000000e+00 : f32
    %146 = vector.broadcast %cst_44 : f32 to vector<8x256xf32>
    %147 = arith.addf %146, %145 : vector<8x256xf32>
    %148 = arith.divf %146, %147 : vector<8x256xf32>
    %149 = arith.mulf %140, %122 : vector<8x256xf32>
    %150 = arith.mulf %134, %142 : vector<8x256xf32>
    %151 = arith.addf %149, %150 : vector<8x256xf32>
    %152 = math.tanh %151 : vector<8x256xf32>
    %153 = arith.mulf %148, %152 : vector<8x256xf32>
    %c40 = arith.constant 40 : index
    %c0_45 = arith.constant 0 : index
    %154 = vector.load %arg6[%c40, %c0_45] : memref<64x1024xf32, #tpu.memory_space<vmem>>, vector<8x1024xf32>
    %c0_46 = arith.constant 0 : index
    %c0_47 = arith.constant 0 : index
    %155 = vector.load %arg3[%c0_46, %c0_47] : memref<256x1024xf32, #tpu.memory_space<vmem>>, vector<256x1024xf32>
    %cst_48 = arith.constant dense<0.000000e+00> : vector<8x1024xf32>
    %156 = tpu.matmul %153, %155, %cst_48 {dimension_numbers = #tpu.dot_dimension_numbers<[1], [0], [0], [1], [0, 0, 1, 1], [], []>} : vector<8x256xf32>, vector<256x1024xf32>, vector<8x1024xf32> -> vector<8x1024xf32>
    %157 = arith.addf %154, %156 : vector<8x1024xf32>
    %158 = vector.extract_strided_slice %157 {offsets = [0, 0], sizes = [8, 256], strides = [1, 1]} : vector<8x1024xf32> to vector<8x256xf32>
    %159 = arith.negf %158 : vector<8x256xf32>
    %160 = math.exp %159 : vector<8x256xf32>
    %cst_49 = arith.constant 1.000000e+00 : f32
    %161 = vector.broadcast %cst_49 : f32 to vector<8x256xf32>
    %162 = arith.addf %161, %160 : vector<8x256xf32>
    %163 = arith.divf %161, %162 : vector<8x256xf32>
    %164 = vector.extract_strided_slice %157 {offsets = [0, 256], sizes = [8, 256], strides = [1, 1]} : vector<8x1024xf32> to vector<8x256xf32>
    %165 = arith.negf %164 : vector<8x256xf32>
    %166 = math.exp %165 : vector<8x256xf32>
    %cst_50 = arith.constant 1.000000e+00 : f32
    %167 = vector.broadcast %cst_50 : f32 to vector<8x256xf32>
    %168 = arith.addf %167, %166 : vector<8x256xf32>
    %169 = arith.divf %167, %168 : vector<8x256xf32>
    %170 = vector.extract_strided_slice %157 {offsets = [0, 512], sizes = [8, 256], strides = [1, 1]} : vector<8x1024xf32> to vector<8x256xf32>
    %171 = math.tanh %170 : vector<8x256xf32>
    %172 = vector.extract_strided_slice %157 {offsets = [0, 768], sizes = [8, 256], strides = [1, 1]} : vector<8x1024xf32> to vector<8x256xf32>
    %173 = arith.negf %172 : vector<8x256xf32>
    %174 = math.exp %173 : vector<8x256xf32>
    %cst_51 = arith.constant 1.000000e+00 : f32
    %175 = vector.broadcast %cst_51 : f32 to vector<8x256xf32>
    %176 = arith.addf %175, %174 : vector<8x256xf32>
    %177 = arith.divf %175, %176 : vector<8x256xf32>
    %178 = arith.mulf %169, %151 : vector<8x256xf32>
    %179 = arith.mulf %163, %171 : vector<8x256xf32>
    %180 = arith.addf %178, %179 : vector<8x256xf32>
    %181 = math.tanh %180 : vector<8x256xf32>
    %182 = arith.mulf %177, %181 : vector<8x256xf32>
    %c48 = arith.constant 48 : index
    %c0_52 = arith.constant 0 : index
    %183 = vector.load %arg6[%c48, %c0_52] : memref<64x1024xf32, #tpu.memory_space<vmem>>, vector<8x1024xf32>
    %c0_53 = arith.constant 0 : index
    %c0_54 = arith.constant 0 : index
    %184 = vector.load %arg3[%c0_53, %c0_54] : memref<256x1024xf32, #tpu.memory_space<vmem>>, vector<256x1024xf32>
    %cst_55 = arith.constant dense<0.000000e+00> : vector<8x1024xf32>
    %185 = tpu.matmul %182, %184, %cst_55 {dimension_numbers = #tpu.dot_dimension_numbers<[1], [0], [0], [1], [0, 0, 1, 1], [], []>} : vector<8x256xf32>, vector<256x1024xf32>, vector<8x1024xf32> -> vector<8x1024xf32>
    %186 = arith.addf %183, %185 : vector<8x1024xf32>
    %187 = vector.extract_strided_slice %186 {offsets = [0, 0], sizes = [8, 256], strides = [1, 1]} : vector<8x1024xf32> to vector<8x256xf32>
    %188 = arith.negf %187 : vector<8x256xf32>
    %189 = math.exp %188 : vector<8x256xf32>
    %cst_56 = arith.constant 1.000000e+00 : f32
    %190 = vector.broadcast %cst_56 : f32 to vector<8x256xf32>
    %191 = arith.addf %190, %189 : vector<8x256xf32>
    %192 = arith.divf %190, %191 : vector<8x256xf32>
    %193 = vector.extract_strided_slice %186 {offsets = [0, 256], sizes = [8, 256], strides = [1, 1]} : vector<8x1024xf32> to vector<8x256xf32>
    %194 = arith.negf %193 : vector<8x256xf32>
    %195 = math.exp %194 : vector<8x256xf32>
    %cst_57 = arith.constant 1.000000e+00 : f32
    %196 = vector.broadcast %cst_57 : f32 to vector<8x256xf32>
    %197 = arith.addf %196, %195 : vector<8x256xf32>
    %198 = arith.divf %196, %197 : vector<8x256xf32>
    %199 = vector.extract_strided_slice %186 {offsets = [0, 512], sizes = [8, 256], strides = [1, 1]} : vector<8x1024xf32> to vector<8x256xf32>
    %200 = math.tanh %199 : vector<8x256xf32>
    %201 = vector.extract_strided_slice %186 {offsets = [0, 768], sizes = [8, 256], strides = [1, 1]} : vector<8x1024xf32> to vector<8x256xf32>
    %202 = arith.negf %201 : vector<8x256xf32>
    %203 = math.exp %202 : vector<8x256xf32>
    %cst_58 = arith.constant 1.000000e+00 : f32
    %204 = vector.broadcast %cst_58 : f32 to vector<8x256xf32>
    %205 = arith.addf %204, %203 : vector<8x256xf32>
    %206 = arith.divf %204, %205 : vector<8x256xf32>
    %207 = arith.mulf %198, %180 : vector<8x256xf32>
    %208 = arith.mulf %192, %200 : vector<8x256xf32>
    %209 = arith.addf %207, %208 : vector<8x256xf32>
    %210 = math.tanh %209 : vector<8x256xf32>
    %211 = arith.mulf %206, %210 : vector<8x256xf32>
    %c56 = arith.constant 56 : index
    %c0_59 = arith.constant 0 : index
    %212 = vector.load %arg6[%c56, %c0_59] : memref<64x1024xf32, #tpu.memory_space<vmem>>, vector<8x1024xf32>
    %c0_60 = arith.constant 0 : index
    %c0_61 = arith.constant 0 : index
    %213 = vector.load %arg3[%c0_60, %c0_61] : memref<256x1024xf32, #tpu.memory_space<vmem>>, vector<256x1024xf32>
    %cst_62 = arith.constant dense<0.000000e+00> : vector<8x1024xf32>
    %214 = tpu.matmul %211, %213, %cst_62 {dimension_numbers = #tpu.dot_dimension_numbers<[1], [0], [0], [1], [0, 0, 1, 1], [], []>} : vector<8x256xf32>, vector<256x1024xf32>, vector<8x1024xf32> -> vector<8x1024xf32>
    %215 = arith.addf %212, %214 : vector<8x1024xf32>
    %216 = vector.extract_strided_slice %215 {offsets = [0, 0], sizes = [8, 256], strides = [1, 1]} : vector<8x1024xf32> to vector<8x256xf32>
    %217 = arith.negf %216 : vector<8x256xf32>
    %218 = math.exp %217 : vector<8x256xf32>
    %cst_63 = arith.constant 1.000000e+00 : f32
    %219 = vector.broadcast %cst_63 : f32 to vector<8x256xf32>
    %220 = arith.addf %219, %218 : vector<8x256xf32>
    %221 = arith.divf %219, %220 : vector<8x256xf32>
    %222 = vector.extract_strided_slice %215 {offsets = [0, 256], sizes = [8, 256], strides = [1, 1]} : vector<8x1024xf32> to vector<8x256xf32>
    %223 = arith.negf %222 : vector<8x256xf32>
    %224 = math.exp %223 : vector<8x256xf32>
    %cst_64 = arith.constant 1.000000e+00 : f32
    %225 = vector.broadcast %cst_64 : f32 to vector<8x256xf32>
    %226 = arith.addf %225, %224 : vector<8x256xf32>
    %227 = arith.divf %225, %226 : vector<8x256xf32>
    %228 = vector.extract_strided_slice %215 {offsets = [0, 512], sizes = [8, 256], strides = [1, 1]} : vector<8x1024xf32> to vector<8x256xf32>
    %229 = math.tanh %228 : vector<8x256xf32>
    %230 = vector.extract_strided_slice %215 {offsets = [0, 768], sizes = [8, 256], strides = [1, 1]} : vector<8x1024xf32> to vector<8x256xf32>
    %231 = arith.negf %230 : vector<8x256xf32>
    %232 = math.exp %231 : vector<8x256xf32>
    %cst_65 = arith.constant 1.000000e+00 : f32
    %233 = vector.broadcast %cst_65 : f32 to vector<8x256xf32>
    %234 = arith.addf %233, %232 : vector<8x256xf32>
    %235 = arith.divf %233, %234 : vector<8x256xf32>
    %236 = arith.mulf %227, %209 : vector<8x256xf32>
    %237 = arith.mulf %221, %229 : vector<8x256xf32>
    %238 = arith.addf %236, %237 : vector<8x256xf32>
    %239 = math.tanh %238 : vector<8x256xf32>
    %240 = arith.mulf %235, %239 : vector<8x256xf32>
    %c0_66 = arith.constant 0 : index
    %c0_67 = arith.constant 0 : index
    %241 = vector.load %arg5[%c0_66, %c0_67] : memref<8x256xf32, #tpu.memory_space<vmem>>, vector<8x256xf32>
    tpu.vector_store %arg5[%c0_66, %c0_67], %240 {strides = array<i32>} : memref<8x256xf32, #tpu.memory_space<vmem>>, vector<8x256xf32>,
    return
  }
  func.func @transform_0(%arg0: i32) -> (i32, i32) {
    %c0_i32 = arith.constant 0 : i32
    %c0_i32_0 = arith.constant 0 : i32
    %c0_i32_1 = arith.constant 0 : i32
    return %c0_i32, %c0_i32_0 : i32, i32
  }
  func.func @transform_1(%arg0: i32) -> (i32, i32) {
    %c0_i32 = arith.constant 0 : i32
    %c0_i32_0 = arith.constant 0 : i32
    %c0_i32_1 = arith.constant 0 : i32
    return %c0_i32, %c0_i32_0 : i32, i32
  }
  func.func @transform_2(%arg0: i32) -> (i32, i32) {
    %c0_i32 = arith.constant 0 : i32
    %c0_i32_0 = arith.constant 0 : i32
    %c0_i32_1 = arith.constant 0 : i32
    return %c0_i32, %c0_i32_0 : i32, i32
  }
  func.func @transform_3(%arg0: i32) -> (i32, i32) {
    %c0_i32 = arith.constant 0 : i32
    %c0_i32_0 = arith.constant 0 : i32
    %c0_i32_1 = arith.constant 0 : i32
    return %c0_i32, %c0_i32_0 : i32, i32
  }
  func.func @transform_4(%arg0: i32) -> (i32, i32) {
    %c0_i32 = arith.constant 0 : i32
    %c0_i32_0 = arith.constant 0 : i32
    %c0_i32_1 = arith.constant 0 : i32
    return %c0_i32, %c0_i32_0 : i32, i32
  }
}

</mosaic_0001>

<llo_original>
// kernel: tpu_custom_call.1
$region0: #{tpu_custom_call.1}
  #allocation0 [shape = 'u32[]', space=smem, size = 0x4, offset = 0x4, fixed_abs, tag = 'smem constant byte address 0x4 - core index']
  #allocation1 [shape = 'u32[144,128]{1,0:T(1,128)}', space=vmem, size = 0x12000, scoped, tag = 'internal scratch']
  #allocation2 [shape = 'f32[64,1024]{1,0:T(8,128)}', space=vmem, size = 0x40000, scoped, tag = 'scratch operand']
  %s0 = inlined_call_operand.hbm [shape: f32[64,128], index: 0, kind: input, shape index: {}]
  %s1 = inlined_call_operand.hbm [shape: f32[128,1024], index: 1, kind: input, shape index: {}]
  %s2 = inlined_call_operand.hbm [shape: f32[256,1024], index: 2, kind: input, shape index: {}]
  %s3 = inlined_call_operand.hbm [shape: f32[1,1024], index: 3, kind: input, shape index: {}]
  %s4 = inlined_call_operand.hbm [shape: f32[8,256], index: 4, kind: output, shape index: {}]
  %s5 = sld [smem:[#allocation0]]
  $region42: #{tpu_custom_call.1} parent=0
    _
  %s7 = ssub.s32 1, %s5
  %s8 = scalar_select 0, %s7, %s5
  $region1: #{tpu_custom_call.1} parent=0
    #allocation3 [shape = 'u8[32768]{0}', space=vmem, size = 0x8000, scoped, tag = 'input window, operand 0, single buffered']
    #allocation4 [shape = 's32[1]{0}', space=sflag, size = 0x4, scoped, tag = 'scoped memory for tpu_custom_call.1']
    #allocation5 [shape = 's32[1]{0}', space=sflag, size = 0x4, scoped, tag = 'scoped memory for tpu_custom_call.1']
    #allocation6 [shape = 'u8[524288]{0}', space=vmem, size = 0x80000, scoped, tag = 'input window, operand 1, single buffered']
    #allocation7 [shape = 's32[1]{0}', space=sflag, size = 0x4, scoped, tag = 'scoped memory for tpu_custom_call.1']
    #allocation8 [shape = 'u8[1048576]{0}', space=vmem, size = 0x100000, scoped, tag = 'input window, operand 2, single buffered']
    #allocation9 [shape = 'u8[4096]{0}', space=vmem, size = 0x1000, scoped, tag = 'input window, operand 3, single buffered']
    #allocation10 [shape = 's32[1]{0}', space=sflag, size = 0x4, scoped, tag = 'scoped memory for tpu_custom_call.1']
    #allocation11 [shape = 'u8[8192]{0}', space=vmem, size = 0x2000, scoped, tag = 'output window, operand 0, single buffered']
    %9 = vsyncpa [#allocation4], 0
    %10 = vsyncpa [#allocation7], 0
    %11 = vsyncpa [#allocation10], 0
    %12 = vsyncpa [#allocation5], 0
    // Predicated region
    $region2: #{tpu_custom_call.1} parent=1 // pred_check
      _
    $region3: #{tpu_custom_call.1} parent=1 // pred_check_branch
      %14 = sbr.rel (0) target = $region5
    $region4: #{tpu_custom_call.1} parent=1 // pred_region
      %s16 = ssub.s32 1024, 1024
      %17 = vsyncadd [#allocation4], %s16
      %s18 = sshll.u32 [#allocation3], 4
      %s19 = int_to_ptr.vmem [resolvable:$true] %s18
      %24 = dma.hbm_to_vmem [thread:$0]  %s0, 1024, %s19, [#allocation4], 128, 128, 8
    $region5: #{tpu_custom_call.1} parent=1 // pred_fallthru
      _
    // Predicated region
    $region6: #{tpu_custom_call.1} parent=1 // pred_check
      _
    $region7: #{tpu_custom_call.1} parent=1 // pred_check_branch
      %26 = sbr.rel (0) target = $region9
    $region8: #{tpu_custom_call.1} parent=1 // pred_region
      %s28 = ssub.s32 16384, 16384
      %29 = vsyncadd [#allocation7], %s28
      %s30 = sshll.u32 [#allocation6], 4
      %s31 = int_to_ptr.vmem [resolvable:$true] %s30
      %36 = dma.hbm_to_vmem [thread:$0]  %s1, 16384, %s31, [#allocation7], 1024, 1024, 64
    $region9: #{tpu_custom_call.1} parent=1 // pred_fallthru
      _
    // Predicated region
    $region10: #{tpu_custom_call.1} parent=1 // pred_check
      _
    $region11: #{tpu_custom_call.1} parent=1 // pred_check_branch
      %38 = sbr.rel (0) target = $region13
    $region12: #{tpu_custom_call.1} parent=1 // pred_region
      %s40 = ssub.s32 32768, 32768
      %41 = vsyncadd [#allocation7], %s40
      %s42 = sshll.u32 [#allocation8], 4
      %s43 = int_to_ptr.vmem [resolvable:$true] %s42
      %48 = dma.hbm_to_vmem [thread:$0]  %s2, 32768, %s43, [#allocation7], 1024, 1024, 64
    $region13: #{tpu_custom_call.1} parent=1 // pred_fallthru
      _
    // Predicated region
    $region14: #{tpu_custom_call.1} parent=1 // pred_check
      _
    $region15: #{tpu_custom_call.1} parent=1 // pred_check_branch
      %50 = sbr.rel (0) target = $region17
    $region16: #{tpu_custom_call.1} parent=1 // pred_region
      %s52 = ssub.s32 128, 128
      %53 = vsyncadd [#allocation10], %s52
      %s55 = sshll.u32 [#allocation9], 4
      %s56 = int_to_ptr.vmem [resolvable:$true] %s55
      %58 = dma.hbm_to_vmem [thread:$0]  %s3, 128, %s56, [#allocation10]
    $region17: #{tpu_custom_call.1} parent=1 // pred_fallthru
      _
    // Predicated region
    $region18: #{tpu_custom_call.1} parent=1 // pred_check
      _
    $region19: #{tpu_custom_call.1} parent=1 // pred_check_branch
      %60 = sbr.rel (0) target = $region21
    $region20: #{tpu_custom_call.1} parent=1 // pred_region
      %61 = dma.done [#allocation4], 1024
    $region21: #{tpu_custom_call.1} parent=1 // pred_fallthru
      _
    // Predicated region
    $region22: #{tpu_custom_call.1} parent=1 // pred_check
      _
    $region23: #{tpu_custom_call.1} parent=1 // pred_check_branch
      %63 = sbr.rel (0) target = $region25
    $region24: #{tpu_custom_call.1} parent=1 // pred_region
      %64 = dma.done [#allocation7], 16384
    $region25: #{tpu_custom_call.1} parent=1 // pred_fallthru
      _
    // Predicated region
    $region26: #{tpu_custom_call.1} parent=1 // pred_check
      _
    $region27: #{tpu_custom_call.1} parent=1 // pred_check_branch
      %66 = sbr.rel (0) target = $region29
    $region28: #{tpu_custom_call.1} parent=1 // pred_region
      %67 = dma.done [#allocation7], 32768
    $region29: #{tpu_custom_call.1} parent=1 // pred_fallthru
      _
    // Predicated region
    $region30: #{tpu_custom_call.1} parent=1 // pred_check
      _
    $region31: #{tpu_custom_call.1} parent=1 // pred_check_branch
      %69 = sbr.rel (0) target = $region33
    $region32: #{tpu_custom_call.1} parent=1 // pred_region
      %70 = dma.done [#allocation10], 128
    $region33: #{tpu_custom_call.1} parent=1 // pred_fallthru
      _
    %v71 = vld [vmem:[#allocation3] sm:$0xff]
    %v72 = vld [vmem:[#allocation3 + $0x8] sm:$0xff]
    %v73 = vld [vmem:[#allocation3 + $0x10] sm:$0xff]
    %v74 = vld [vmem:[#allocation3 + $0x18] sm:$0xff]
    %v75 = vld [vmem:[#allocation3 + $0x20] sm:$0xff]
    %v76 = vld [vmem:[#allocation3 + $0x28] sm:$0xff]
    %v77 = vld [vmem:[#allocation3 + $0x30] sm:$0xff]
    %v78 = vld [vmem:[#allocation3 + $0x38] sm:$0xff]
    %v79 = vld [vmem:[#allocation6] sm:$0xff]
    %v80 = vld [vmem:[#allocation6 + $0x8] sm:$0xff]
    %v81 = vld [vmem:[#allocation6 + $0x10] sm:$0xff]
    %v82 = vld [vmem:[#allocation6 + $0x18] sm:$0xff]
    %v83 = vld [vmem:[#allocation6 + $0x20] sm:$0xff]
    %v84 = vld [vmem:[#allocation6 + $0x28] sm:$0xff]
    %v85 = vld [vmem:[#allocation6 + $0x30] sm:$0xff]
    %v86 = vld [vmem:[#allocation6 + $0x38] sm:$0xff]
    %v87 = vld [vmem:[#allocation6 + $0x40] sm:$0xff]
    %v88 = vld [vmem:[#allocation6 + $0x48] sm:$0xff]
    %v89 = vld [vmem:[#allocation6 + $0x50] sm:$0xff]
    %v90 = vld [vmem:[#allocation6 + $0x58] sm:$0xff]
    %v91 = vld [vmem:[#allocation6 + $0x60] sm:$0xff]
    %v92 = vld [vmem:[#allocation6 + $0x68] sm:$0xff]
    %v93 = vld [vmem:[#allocation6 + $0x70] sm:$0xff]
    %v94 = vld [vmem:[#allocation6 + $0x78] sm:$0xff]
    %v95 = vld [vmem:[#allocation6 + $0x80] sm:$0xff]
    %v96 = vld [vmem:[#allocation6 + $0x88] sm:$0xff]
    %v97 = vld [vmem:[#allocation6 + $0x90] sm:$0xff]
    %v98 = vld [vmem:[#allocation6 + $0x98] sm:$0xff]
    %v99 = vld [vmem:[#allocation6 + $0xa0] sm:$0xff]
    %v100 = vld [vmem:[#allocation6 + $0xa8] sm:$0xff]
    %v101 = vld [vmem:[#allocation6 + $0xb0] sm:$0xff]
    %v102 = vld [vmem:[#allocation6 + $0xb8] sm:$0xff]
    %v103 = vld [vmem:[#allocation6 + $0xc0] sm:$0xff]
    %v104 = vld [vmem:[#allocation6 + $0xc8] sm:$0xff]
    %v105 = vld [vmem:[#allocation6 + $0xd0] sm:$0xff]
    %v106 = vld [vmem:[#allocation6 + $0xd8] sm:$0xff]
    %v107 = vld [vmem:[#allocation6 + $0xe0] sm:$0xff]
    %v108 = vld [vmem:[#allocation6 + $0xe8] sm:$0xff]
    %v109 = vld [vmem:[#allocation6 + $0xf0] sm:$0xff]
    %v110 = vld [vmem:[#allocation6 + $0xf8] sm:$0xff]
    %v111 = vld [vmem:[#allocation6 + $0x100] sm:$0xff]
    %v112 = vld [vmem:[#allocation6 + $0x108] sm:$0xff]
    %v113 = vld [vmem:[#allocation6 + $0x110] sm:$0xff]
    %v114 = vld [vmem:[#allocation6 + $0x118] sm:$0xff]
    %v115 = vld [vmem:[#allocation6 + $0x120] sm:$0xff]
    %v116 = vld [vmem:[#allocation6 + $0x128] sm:$0xff]
    %v117 = vld [vmem:[#allocation6 + $0x130] sm:$0xff]
    %v118 = vld [vmem:[#allocation6 + $0x138] sm:$0xff]
    %v119 = vld [vmem:[#allocation6 + $0x140] sm:$0xff]
    %v120 = vld [vmem:[#allocation6 + $0x148] sm:$0xff]
    %v121 = vld [vmem:[#allocation6 + $0x150] sm:$0xff]
    %v122 = vld [vmem:[#allocation6 + $0x158] sm:$0xff]
    %v123 = vld [vmem:[#allocation6 + $0x160] sm:$0xff]
    %v124 = vld [vmem:[#allocation6 + $0x168] sm:$0xff]
    %v125 = vld [vmem:[#allocation6 + $0x170] sm:$0xff]
    %v126 = vld [vmem:[#allocation6 + $0x178] sm:$0xff]
    %v127 = vld [vmem:[#allocation6 + $0x180] sm:$0xff]
    %v128 = vld [vmem:[#allocation6 + $0x188] sm:$0xff]
    %v129 = vld [vmem:[#allocation6 + $0x190] sm:$0xff]
    %v130 = vld [vmem:[#allocation6 + $0x198] sm:$0xff]
    %v131 = vld [vmem:[#allocation6 + $0x1a0] sm:$0xff]
    %v132 = vld [vmem:[#allocation6 + $0x1a8] sm:$0xff]
    %v133 = vld [vmem:[#allocation6 + $0x1b0] sm:$0xff]
    %v134 = vld [vmem:[#allocation6 + $0x1b8] sm:$0xff]
    %v135 = vld [vmem:[#allocation6 + $0x1c0] sm:$0xff]
    %v136 = vld [vmem:[#allocation6 + $0x1c8] sm:$0xff]
    %v137 = vld [vmem:[#allocation6 + $0x1d0] sm:$0xff]
    %v138 = vld [vmem:[#allocation6 + $0x1d8] sm:$0xff]
    %v139 = vld [vmem:[#allocation6 + $0x1e0] sm:$0xff]
    %v140 = vld [vmem:[#allocation6 + $0x1e8] sm:$0xff]
    %v141 = vld [vmem:[#allocation6 + $0x1f0] sm:$0xff]
    %v142 = vld [vmem:[#allocation6 + $0x1f8] sm:$0xff]
    %v143 = vld [vmem:[#allocation6 + $0x200] sm:$0xff]
    %v144 = vld [vmem:[#allocation6 + $0x208] sm:$0xff]
    %v145 = vld [vmem:[#allocation6 + $0x210] sm:$0xff]
    %v146 = vld [vmem:[#allocation6 + $0x218] sm:$0xff]
    %v147 = vld [vmem:[#allocation6 + $0x220] sm:$0xff]
    %v148 = vld [vmem:[#allocation6 + $0x228] sm:$0xff]
    %v149 = vld [vmem:[#allocation6 + $0x230] sm:$0xff]
    %v150 = vld [vmem:[#allocation6 + $0x238] sm:$0xff]
    %v151 = vld [vmem:[#allocation6 + $0x240] sm:$0xff]
    %v152 = vld [vmem:[#allocation6 + $0x248] sm:$0xff]
    %v153 = vld [vmem:[#allocation6 + $0x250] sm:$0xff]
    %v154 = vld [vmem:[#allocation6 + $0x258] sm:$0xff]
    %v155 = vld [vmem:[#allocation6 + $0x260] sm:$0xff]
    %v156 = vld [vmem:[#allocation6 + $0x268] sm:$0xff]
    %v157 = vld [vmem:[#allocation6 + $0x270] sm:$0xff]
    %v158 = vld [vmem:[#allocation6 + $0x278] sm:$0xff]
    %v159 = vld [vmem:[#allocation6 + $0x280] sm:$0xff]
    %v160 = vld [vmem:[#allocation6 + $0x288] sm:$0xff]
    %v161 = vld [vmem:[#allocation6 + $0x290] sm:$0xff]
    %v162 = vld [vmem:[#allocation6 + $0x298] sm:$0xff]
    %v163 = vld [vmem:[#allocation6 + $0x2a0] sm:$0xff]
    %v164 = vld [vmem:[#allocation6 + $0x2a8] sm:$0xff]
    %v165 = vld [vmem:[#allocation6 + $0x2b0] sm:$0xff]
    %v166 = vld [vmem:[#allocation6 + $0x2b8] sm:$0xff]
    %v167 = vld [vmem:[#allocation6 + $0x2c0] sm:$0xff]
    %v168 = vld [vmem:[#allocation6 + $0x2c8] sm:$0xff]
    %v169 = vld [vmem:[#allocation6 + $0x2d0] sm:$0xff]
    %v170 = vld [vmem:[#allocation6 + $0x2d8] sm:$0xff]
    %v171 = vld [vmem:[#allocation6 + $0x2e0] sm:$0xff]
    %v172 = vld [vmem:[#allocation6 + $0x2e8] sm:$0xff]
    %v173 = vld [vmem:[#allocation6 + $0x2f0] sm:$0xff]
    %v174 = vld [vmem:[#allocation6 + $0x2f8] sm:$0xff]
    %v175 = vld [vmem:[#allocation6 + $0x300] sm:$0xff]
    %v176 = vld [vmem:[#allocation6 + $0x308] sm:$0xff]
    %v177 = vld [vmem:[#allocation6 + $0x310] sm:$0xff]
    %v178 = vld [vmem:[#allocation6 + $0x318] sm:$0xff]
    %v179 = vld [vmem:[#allocation6 + $0x320] sm:$0xff]
    %v180 = vld [vmem:[#allocation6 + $0x328] sm:$0xff]
    %v181 = vld [vmem:[#allocation6 + $0x330] sm:$0xff]
    %v182 = vld [vmem:[#allocation6 + $0x338] sm:$0xff]
    %v183 = vld [vmem:[#allocation6 + $0x340] sm:$0xff]
    %v184 = vld [vmem:[#allocation6 + $0x348] sm:$0xff]
    %v185 = vld [vmem:[#allocation6 + $0x350] sm:$0xff]
    %v186 = vld [vmem:[#allocation6 + $0x358] sm:$0xff]
    %v187 = vld [vmem:[#allocation6 + $0x360] sm:$0xff]
    %v188 = vld [vmem:[#allocation6 + $0x368] sm:$0xff]
    %v189 = vld [vmem:[#allocation6 + $0x370] sm:$0xff]
    %v190 = vld [vmem:[#allocation6 + $0x378] sm:$0xff]
    %v191 = vld [vmem:[#allocation6 + $0x380] sm:$0xff]
    %v192 = vld [vmem:[#allocation6 + $0x388] sm:$0xff]
    %v193 = vld [vmem:[#allocation6 + $0x390] sm:$0xff]
    %v194 = vld [vmem:[#allocation6 + $0x398] sm:$0xff]
    %v195 = vld [vmem:[#allocation6 + $0x3a0] sm:$0xff]
    %v196 = vld [vmem:[#allocation6 + $0x3a8] sm:$0xff]
    %v197 = vld [vmem:[#allocation6 + $0x3b0] sm:$0xff]
    %v198 = vld [vmem:[#allocation6 + $0x3b8] sm:$0xff]
    %v199 = vld [vmem:[#allocation6 + $0x3c0] sm:$0xff]
    %v200 = vld [vmem:[#allocation6 + $0x3c8] sm:$0xff]
    %v201 = vld [vmem:[#allocation6 + $0x3d0] sm:$0xff]
    %v202 = vld [vmem:[#allocation6 + $0x3d8] sm:$0xff]
    %v203 = vld [vmem:[#allocation6 + $0x3e0] sm:$0xff]
    %v204 = vld [vmem:[#allocation6 + $0x3e8] sm:$0xff]
    %v205 = vld [vmem:[#allocation6 + $0x3f0] sm:$0xff]
    %v206 = vld [vmem:[#allocation6 + $0x3f8] sm:$0xff]
    %v207 = vld [vmem:[#allocation9] sm:$0xff]
    %v209 = vlaneseq
    %v210 = vshrl.u32 %v209, 7
    %v211 = vsub.s32 0, %v210
    %v212 = vrot.slane %v207, %v211
    %v213 = vlaneseq
    %v214 = vshrl.u32 %v213, 7
    %v215 = vsub.s32 1, %v214
    %v216 = vrot.slane %v207, %v215
    %v217 = vlaneseq
    %v218 = vshrl.u32 %v217, 7
    %v219 = vsub.s32 2, %v218
    %v220 = vrot.slane %v207, %v219
    %v221 = vlaneseq
    %v222 = vshrl.u32 %v221, 7
    %v223 = vsub.s32 3, %v222
    %v224 = vrot.slane %v207, %v223
    %v225 = vlaneseq
    %v226 = vshrl.u32 %v225, 7
    %v227 = vsub.s32 4, %v226
    %v228 = vrot.slane %v207, %v227
    %v229 = vlaneseq
    %v230 = vshrl.u32 %v229, 7
    %v231 = vsub.s32 5, %v230
    %v232 = vrot.slane %v207, %v231
    %v233 = vlaneseq
    %v234 = vshrl.u32 %v233, 7
    %v235 = vsub.s32 6, %v234
    %v236 = vrot.slane %v207, %v235
    %v237 = vlaneseq
    %v238 = vshrl.u32 %v237, 7
    %v239 = vsub.s32 7, %v238
    %v240 = vrot.slane %v207, %v239
    %249 = vmatprep.subr.mxu0 %v200
    %250 = vmatpush1.msra.mxu0 %v199
    %251 = vmatprep.subr.mxu0 %v192
    %252 = vmatpush1.msra.mxu0 %v191
    %253 = vmatprep.subr.mxu0 %v184
    %254 = vmatpush1.msra.mxu0 %v183
    %255 = vmatprep.subr.mxu0 %v176
    %256 = vmatpush1.msra.mxu0 %v175
    %257 = vmatprep.subr.mxu0 %v168
    %258 = vmatpush1.msra.mxu0 %v167
    %259 = vmatprep.subr.mxu0 %v160
    %260 = vmatpush1.msra.mxu0 %v159
    %261 = vmatprep.subr.mxu0 %v152
    %262 = vmatpush1.msra.mxu0 %v151
    %263 = vmatprep.subr.mxu0 %v144
    %264 = vmatpush1.msra.mxu0 %v143
    %265 = vmatprep.subr.mxu0 %v136
    %266 = vmatpush1.msra.mxu0 %v135
    %267 = vmatprep.subr.mxu0 %v128
    %268 = vmatpush1.msra.mxu0 %v127
    %269 = vmatprep.subr.mxu0 %v120
    %270 = vmatpush1.msra.mxu0 %v119
    %271 = vmatprep.subr.mxu0 %v112
    %272 = vmatpush1.msra.mxu0 %v111
    %273 = vmatprep.subr.mxu0 %v104
    %274 = vmatpush1.msra.mxu0 %v103
    %275 = vmatprep.subr.mxu0 %v96
    %276 = vmatpush1.msra.mxu0 %v95
    %277 = vmatprep.subr.mxu0 %v88
    %278 = vmatpush1.msra.mxu0 %v87
    %279 = vmatprep.subr.mxu0 %v80
    %280 = vmatpush1.msra.mxu0 %v79
    %281 = vmatprep.subr.mxu0 0.0
    %282 = vmatpush2.msra.mxu0 0.0
    %283 = vmatprep.subr.mxu0 0.0
    %284 = vmatpush2.msra.mxu0 0.0
    %285 = vmatprep.subr.mxu0 0.0
    %286 = vmatpush2.msra.mxu0 0.0
    %287 = vmatprep.subr.mxu0 0.0
    %288 = vmatpush2.msra.mxu0 0.0
    %289 = vmatprep.subr.mxu0 0.0
    %290 = vmatpush2.msra.mxu0 0.0
    %291 = vmatprep.subr.mxu0 0.0
    %292 = vmatpush2.msra.mxu0 0.0
    %293 = vmatprep.subr.mxu0 0.0
    %294 = vmatpush2.msra.mxu0 0.0
    %295 = vmatprep.subr.mxu0 0.0
    %296 = vmatpush2.msra.mxu0 0.0
    %297 = vmatprep.subr.mxu0 0.0
    %298 = vmatpush2.msra.mxu0 0.0
    %299 = vmatprep.subr.mxu0 0.0
    %300 = vmatpush2.msra.mxu0 0.0
    %301 = vmatprep.subr.mxu0 0.0
    %302 = vmatpush2.msra.mxu0 0.0
    %303 = vmatprep.subr.mxu0 0.0
    %304 = vmatpush2.msra.mxu0 0.0
    %305 = vmatprep.subr.mxu0 0.0
    %306 = vmatpush2.msra.mxu0 0.0
    %307 = vmatprep.subr.mxu0 0.0
    %308 = vmatpush2.msra.mxu0 0.0
    %309 = vmatprep.subr.mxu0 0.0
    %310 = vmatpush2.msra.mxu0 0.0
    %311 = vmatprep.subr.mxu0 0.0
    %312 = vmatpush2.msra.mxu0 0.0
    %313 = vmatprep.mubr.f32.mxu0 0.0
    %314 = vmatmul.mubr.f32.gmra.mxu0 %v71
    %v315 = vpop.f32.mrf.mxu0
    %v316 = vadd.f32 %v212, %v315
    %v317 = vpop.f32.mrf.mxu0
    %v318 = vadd.f32 %v216, %v317
    %319 = vmatprep.mubr.f32.mxu0 0.0
    %320 = vmatmul.mubr.f32.gmra.mxu0 %v72
    %v321 = vpop.f32.mrf.mxu0
    %v322 = vadd.f32 %v212, %v321
    %v323 = vpop.f32.mrf.mxu0
    %v324 = vadd.f32 %v216, %v323
    %325 = vmatprep.mubr.f32.mxu0 0.0
    %326 = vmatmul.mubr.f32.gmra.mxu0 %v73
    %v327 = vpop.f32.mrf.mxu0
    %v328 = vadd.f32 %v212, %v327
    %v329 = vpop.f32.mrf.mxu0
    %v330 = vadd.f32 %v216, %v329
    %331 = vmatprep.mubr.f32.mxu0 0.0
    %332 = vmatmul.mubr.f32.gmra.mxu0 %v74
    %v333 = vpop.f32.mrf.mxu0
    %v334 = vadd.f32 %v212, %v333
    %v335 = vpop.f32.mrf.mxu0
    %v336 = vadd.f32 %v216, %v335
    %337 = vmatprep.mubr.f32.mxu0 0.0
    %338 = vmatmul.mubr.f32.gmra.mxu0 %v75
    %v339 = vpop.f32.mrf.mxu0
    %v340 = vadd.f32 %v212, %v339
    %v341 = vpop.f32.mrf.mxu0
    %v342 = vadd.f32 %v216, %v341
    %343 = vmatprep.mubr.f32.mxu0 0.0
    %344 = vmatmul.mubr.f32.gmra.mxu0 %v76
    %v345 = vpop.f32.mrf.mxu0
    %v346 = vadd.f32 %v212, %v345
    %v347 = vpop.f32.mrf.mxu0
    %v348 = vadd.f32 %v216, %v347
    %349 = vmatprep.mubr.f32.mxu0 0.0
    %350 = vmatmul.mubr.f32.gmra.mxu0 %v77
    %v351 = vpop.f32.mrf.mxu0
    %v352 = vadd.f32 %v212, %v351
    %v353 = vpop.f32.mrf.mxu0
    %v354 = vadd.f32 %v216, %v353
    %355 = vmatprep.mubr.f32.mxu0 0.0
    %356 = vmatmul.mubr.f32.gmra.mxu0 %v78
    %v357 = vpop.f32.mrf.mxu0
    %v358 = vadd.f32 %v212, %v357
    %v359 = vpop.f32.mrf.mxu0
    %v360 = vadd.f32 %v216, %v359
    %361 = vdwg.mxu0
    %362 = vmatprep.subr.mxu0 %v202
    %363 = vmatpush1.msra.mxu0 %v201
    %364 = vmatprep.subr.mxu0 %v194
    %365 = vmatpush1.msra.mxu0 %v193
    %366 = vmatprep.subr.mxu0 %v186
    %367 = vmatpush1.msra.mxu0 %v185
    %368 = vmatprep.subr.mxu0 %v178
    %369 = vmatpush1.msra.mxu0 %v177
    %370 = vmatprep.subr.mxu0 %v170
    %371 = vmatpush1.msra.mxu0 %v169
    %372 = vmatprep.subr.mxu0 %v162
    %373 = vmatpush1.msra.mxu0 %v161
    %374 = vmatprep.subr.mxu0 %v154
    %375 = vmatpush1.msra.mxu0 %v153
    %376 = vmatprep.subr.mxu0 %v146
    %377 = vmatpush1.msra.mxu0 %v145
    %378 = vmatprep.subr.mxu0 %v138
    %379 = vmatpush1.msra.mxu0 %v137
    %380 = vmatprep.subr.mxu0 %v130
    %381 = vmatpush1.msra.mxu0 %v129
    %382 = vmatprep.subr.mxu0 %v122
    %383 = vmatpush1.msra.mxu0 %v121
    %384 = vmatprep.subr.mxu0 %v114
    %385 = vmatpush1.msra.mxu0 %v113
    %386 = vmatprep.subr.mxu0 %v106
    %387 = vmatpush1.msra.mxu0 %v105
    %388 = vmatprep.subr.mxu0 %v98
    %389 = vmatpush1.msra.mxu0 %v97
    %390 = vmatprep.subr.mxu0 %v90
    %391 = vmatpush1.msra.mxu0 %v89
    %392 = vmatprep.subr.mxu0 %v82
    %393 = vmatpush1.msra.mxu0 %v81
    %394 = vmatprep.subr.mxu0 0.0
    %395 = vmatpush2.msra.mxu0 0.0
    %396 = vmatprep.subr.mxu0 0.0
    %397 = vmatpush2.msra.mxu0 0.0
    %398 = vmatprep.subr.mxu0 0.0
    %399 = vmatpush2.msra.mxu0 0.0
    %400 = vmatprep.subr.mxu0 0.0
    %401 = vmatpush2.msra.mxu0 0.0
    %402 = vmatprep.subr.mxu0 0.0
    %403 = vmatpush2.msra.mxu0 0.0
    %404 = vmatprep.subr.mxu0 0.0
    %405 = vmatpush2.msra.mxu0 0.0
    %406 = vmatprep.subr.mxu0 0.0
    %407 = vmatpush2.msra.mxu0 0.0
    %408 = vmatprep.subr.mxu0 0.0
    %409 = vmatpush2.msra.mxu0 0.0
    %410 = vmatprep.subr.mxu0 0.0
    %411 = vmatpush2.msra.mxu0 0.0
    %412 = vmatprep.subr.mxu0 0.0
    %413 = vmatpush2.msra.mxu0 0.0
    %414 = vmatprep.subr.mxu0 0.0
    %415 = vmatpush2.msra.mxu0 0.0
    %416 = vmatprep.subr.mxu0 0.0
    %417 = vmatpush2.msra.mxu0 0.0
    %418 = vmatprep.subr.mxu0 0.0
    %419 = vmatpush2.msra.mxu0 0.0
    %420 = vmatprep.subr.mxu0 0.0
    %421 = vmatpush2.msra.mxu0 0.0
    %422 = vmatprep.subr.mxu0 0.0
    %423 = vmatpush2.msra.mxu0 0.0
    %424 = vmatprep.subr.mxu0 0.0
    %425 = vmatpush2.msra.mxu0 0.0
    %426 = vmatprep.mubr.f32.mxu0 0.0
    %427 = vmatmul.mubr.f32.gmra.mxu0 %v71
    %v428 = vpop.f32.mrf.mxu0
    %v429 = vadd.f32 %v220, %v428
    %v430 = vpop.f32.mrf.mxu0
    %v431 = vadd.f32 %v224, %v430
    %432 = vmatprep.mubr.f32.mxu0 0.0
    %433 = vmatmul.mubr.f32.gmra.mxu0 %v72
    %v434 = vpop.f32.mrf.mxu0
    %v435 = vadd.f32 %v220, %v434
    %v436 = vpop.f32.mrf.mxu0
    %v437 = vadd.f32 %v224, %v436
    %438 = vmatprep.mubr.f32.mxu0 0.0
    %439 = vmatmul.mubr.f32.gmra.mxu0 %v73
    %v440 = vpop.f32.mrf.mxu0
    %v441 = vadd.f32 %v220, %v440
    %v442 = vpop.f32.mrf.mxu0
    %v443 = vadd.f32 %v224, %v442
    %444 = vmatprep.mubr.f32.mxu0 0.0
    %445 = vmatmul.mubr.f32.gmra.mxu0 %v74
    %v446 = vpop.f32.mrf.mxu0
    %v447 = vadd.f32 %v220, %v446
    %v448 = vpop.f32.mrf.mxu0
    %v449 = vadd.f32 %v224, %v448
    %450 = vmatprep.mubr.f32.mxu0 0.0
    %451 = vmatmul.mubr.f32.gmra.mxu0 %v75
    %v452 = vpop.f32.mrf.mxu0
    %v453 = vadd.f32 %v220, %v452
    %v454 = vpop.f32.mrf.mxu0
    %v455 = vadd.f32 %v224, %v454
    %456 = vmatprep.mubr.f32.mxu0 0.0
    %457 = vmatmul.mubr.f32.gmra.mxu0 %v76
    %v458 = vpop.f32.mrf.mxu0
    %v459 = vadd.f32 %v220, %v458
    %v460 = vpop.f32.mrf.mxu0
    %v461 = vadd.f32 %v224, %v460
    %462 = vmatprep.mubr.f32.mxu0 0.0
    %463 = vmatmul.mubr.f32.gmra.mxu0 %v77
    %v464 = vpop.f32.mrf.mxu0
    %v465 = vadd.f32 %v220, %v464
    %v466 = vpop.f32.mrf.mxu0
    %v467 = vadd.f32 %v224, %v466
    %468 = vmatprep.mubr.f32.mxu0 0.0
    %469 = vmatmul.mubr.f32.gmra.mxu0 %v78
    %v470 = vpop.f32.mrf.mxu0
    %v471 = vadd.f32 %v220, %v470
    %v472 = vpop.f32.mrf.mxu0
    %v473 = vadd.f32 %v224, %v472
    %474 = vdwg.mxu0
    %475 = vmatprep.subr.mxu0 %v204
    %476 = vmatpush1.msra.mxu0 %v203
    %477 = vmatprep.subr.mxu0 %v196
    %478 = vmatpush1.msra.mxu0 %v195
    %479 = vmatprep.subr.mxu0 %v188
    %480 = vmatpush1.msra.mxu0 %v187
    %481 = vmatprep.subr.mxu0 %v180
    %482 = vmatpush1.msra.mxu0 %v179
    %483 = vmatprep.subr.mxu0 %v172
    %484 = vmatpush1.msra.mxu0 %v171
    %485 = vmatprep.subr.mxu0 %v164
    %486 = vmatpush1.msra.mxu0 %v163
    %487 = vmatprep.subr.mxu0 %v156
    %488 = vmatpush1.msra.mxu0 %v155
    %489 = vmatprep.subr.mxu0 %v148
    %490 = vmatpush1.msra.mxu0 %v147
    %491 = vmatprep.subr.mxu0 %v140
    %492 = vmatpush1.msra.mxu0 %v139
    %493 = vmatprep.subr.mxu0 %v132
    %494 = vmatpush1.msra.mxu0 %v131
    %495 = vmatprep.subr.mxu0 %v124
    %496 = vmatpush1.msra.mxu0 %v123
    %497 = vmatprep.subr.mxu0 %v116
    %498 = vmatpush1.msra.mxu0 %v115
    %499 = vmatprep.subr.mxu0 %v108
    %500 = vmatpush1.msra.mxu0 %v107
    %501 = vmatprep.subr.mxu0 %v100
    %502 = vmatpush1.msra.mxu0 %v99
    %503 = vmatprep.subr.mxu0 %v92
    %504 = vmatpush1.msra.mxu0 %v91
    %505 = vmatprep.subr.mxu0 %v84
    %506 = vmatpush1.msra.mxu0 %v83
    %507 = vmatprep.subr.mxu0 0.0
    %508 = vmatpush2.msra.mxu0 0.0
    %509 = vmatprep.subr.mxu0 0.0
    %510 = vmatpush2.msra.mxu0 0.0
    %511 = vmatprep.subr.mxu0 0.0
    %512 = vmatpush2.msra.mxu0 0.0
    %513 = vmatprep.subr.mxu0 0.0
    %514 = vmatpush2.msra.mxu0 0.0
    %515 = vmatprep.subr.mxu0 0.0
    %516 = vmatpush2.msra.mxu0 0.0
    %517 = vmatprep.subr.mxu0 0.0
    %518 = vmatpush2.msra.mxu0 0.0
    %519 = vmatprep.subr.mxu0 0.0
    %520 = vmatpush2.msra.mxu0 0.0
    %521 = vmatprep.subr.mxu0 0.0
    %522 = vmatpush2.msra.mxu0 0.0
    %523 = vmatprep.subr.mxu0 0.0
    %524 = vmatpush2.msra.mxu0 0.0
    %525 = vmatprep.subr.mxu0 0.0
    %526 = vmatpush2.msra.mxu0 0.0
    %527 = vmatprep.subr.mxu0 0.0
    %528 = vmatpush2.msra.mxu0 0.0
    %529 = vmatprep.subr.mxu0 0.0
    %530 = vmatpush2.msra.mxu0 0.0
    %531 = vmatprep.subr.mxu0 0.0
    %532 = vmatpush2.msra.mxu0 0.0
    %533 = vmatprep.subr.mxu0 0.0
    %534 = vmatpush2.msra.mxu0 0.0
    %535 = vmatprep.subr.mxu0 0.0
    %536 = vmatpush2.msra.mxu0 0.0
    %537 = vmatprep.subr.mxu0 0.0
    %538 = vmatpush2.msra.mxu0 0.0
    %539 = vmatprep.mubr.f32.mxu0 0.0
    %540 = vmatmul.mubr.f32.gmra.mxu0 %v71
    %v541 = vpop.f32.mrf.mxu0
    %v542 = vadd.f32 %v228, %v541
    %v543 = vpop.f32.mrf.mxu0
    %v544 = vadd.f32 %v232, %v543
    %545 = vmatprep.mubr.f32.mxu0 0.0
    %546 = vmatmul.mubr.f32.gmra.mxu0 %v72
    %v547 = vpop.f32.mrf.mxu0
    %v548 = vadd.f32 %v228, %v547
    %v549 = vpop.f32.mrf.mxu0
    %v550 = vadd.f32 %v232, %v549
    %551 = vmatprep.mubr.f32.mxu0 0.0
    %552 = vmatmul.mubr.f32.gmra.mxu0 %v73
    %v553 = vpop.f32.mrf.mxu0
    %v554 = vadd.f32 %v228, %v553
    %v555 = vpop.f32.mrf.mxu0
    %v556 = vadd.f32 %v232, %v555
    %557 = vmatprep.mubr.f32.mxu0 0.0
    %558 = vmatmul.mubr.f32.gmra.mxu0 %v74
    %v559 = vpop.f32.mrf.mxu0
    %v560 = vadd.f32 %v228, %v559
    %v561 = vpop.f32.mrf.mxu0
    %v562 = vadd.f32 %v232, %v561
    %563 = vmatprep.mubr.f32.mxu0 0.0
    %564 = vmatmul.mubr.f32.gmra.mxu0 %v75
    %v565 = vpop.f32.mrf.mxu0
    %v566 = vadd.f32 %v228, %v565
    %v567 = vpop.f32.mrf.mxu0
    %v568 = vadd.f32 %v232, %v567
    %569 = vmatprep.mubr.f32.mxu0 0.0
    %570 = vmatmul.mubr.f32.gmra.mxu0 %v76
    %v571 = vpop.f32.mrf.mxu0
    %v572 = vadd.f32 %v228, %v571
    %v573 = vpop.f32.mrf.mxu0
    %v574 = vadd.f32 %v232, %v573
    %575 = vmatprep.mubr.f32.mxu0 0.0
    %576 = vmatmul.mubr.f32.gmra.mxu0 %v77
    %v577 = vpop.f32.mrf.mxu0
    %v578 = vadd.f32 %v228, %v577
    %v579 = vpop.f32.mrf.mxu0
    %v580 = vadd.f32 %v232, %v579
    %581 = vmatprep.mubr.f32.mxu0 0.0
    %582 = vmatmul.mubr.f32.gmra.mxu0 %v78
    %v583 = vpop.f32.mrf.mxu0
    %v584 = vadd.f32 %v228, %v583
    %v585 = vpop.f32.mrf.mxu0
    %v586 = vadd.f32 %v232, %v585
    %587 = vdwg.mxu0
    %588 = vmatprep.subr.mxu0 %v206
    %589 = vmatpush1.msra.mxu0 %v205
    %590 = vmatprep.subr.mxu0 %v198
    %591 = vmatpush1.msra.mxu0 %v197
    %592 = vmatprep.subr.mxu0 %v190
    %593 = vmatpush1.msra.mxu0 %v189
    %594 = vmatprep.subr.mxu0 %v182
    %595 = vmatpush1.msra.mxu0 %v181
    %596 = vmatprep.subr.mxu0 %v174
    %597 = vmatpush1.msra.mxu0 %v173
    %598 = vmatprep.subr.mxu0 %v166
    %599 = vmatpush1.msra.mxu0 %v165
    %600 = vmatprep.subr.mxu0 %v158
    %601 = vmatpush1.msra.mxu0 %v157
    %602 = vmatprep.subr.mxu0 %v150
    %603 = vmatpush1.msra.mxu0 %v149
    %604 = vmatprep.subr.mxu0 %v142
    %605 = vmatpush1.msra.mxu0 %v141
    %606 = vmatprep.subr.mxu0 %v134
    %607 = vmatpush1.msra.mxu0 %v133
    %608 = vmatprep.subr.mxu0 %v126
    %609 = vmatpush1.msra.mxu0 %v125
    %610 = vmatprep.subr.mxu0 %v118
    %611 = vmatpush1.msra.mxu0 %v117
    %612 = vmatprep.subr.mxu0 %v110
    %613 = vmatpush1.msra.mxu0 %v109
    %614 = vmatprep.subr.mxu0 %v102
    %615 = vmatpush1.msra.mxu0 %v101
    %616 = vmatprep.subr.mxu0 %v94
    %617 = vmatpush1.msra.mxu0 %v93
    %618 = vmatprep.subr.mxu0 %v86
    %619 = vmatpush1.msra.mxu0 %v85
    %620 = vmatprep.subr.mxu0 0.0
    %621 = vmatpush2.msra.mxu0 0.0
    %622 = vmatprep.subr.mxu0 0.0
    %623 = vmatpush2.msra.mxu0 0.0
    %624 = vmatprep.subr.mxu0 0.0
    %625 = vmatpush2.msra.mxu0 0.0
    %626 = vmatprep.subr.mxu0 0.0
    %627 = vmatpush2.msra.mxu0 0.0
    %628 = vmatprep.subr.mxu0 0.0
    %629 = vmatpush2.msra.mxu0 0.0
    %630 = vmatprep.subr.mxu0 0.0
    %631 = vmatpush2.msra.mxu0 0.0
    %632 = vmatprep.subr.mxu0 0.0
    %633 = vmatpush2.msra.mxu0 0.0
    %634 = vmatprep.subr.mxu0 0.0
    %635 = vmatpush2.msra.mxu0 0.0
    %636 = vmatprep.subr.mxu0 0.0
    %637 = vmatpush2.msra.mxu0 0.0
    %638 = vmatprep.subr.mxu0 0.0
    %639 = vmatpush2.msra.mxu0 0.0
    %640 = vmatprep.subr.mxu0 0.0
    %641 = vmatpush2.msra.mxu0 0.0
    %642 = vmatprep.subr.mxu0 0.0
    %643 = vmatpush2.msra.mxu0 0.0
    %644 = vmatprep.subr.mxu0 0.0
    %645 = vmatpush2.msra.mxu0 0.0
    %646 = vmatprep.subr.mxu0 0.0
    %647 = vmatpush2.msra.mxu0 0.0
    %648 = vmatprep.subr.mxu0 0.0
    %649 = vmatpush2.msra.mxu0 0.0
    %650 = vmatprep.subr.mxu0 0.0
    %651 = vmatpush2.msra.mxu0 0.0
    %652 = vmatprep.mubr.f32.mxu0 0.0
    %653 = vmatmul.mubr.f32.gmra.mxu0 %v71
    %v654 = vpop.f32.mrf.mxu0
    %v655 = vadd.f32 %v236, %v654
    %v656 = vpop.f32.mrf.mxu0
    %v657 = vadd.f32 %v240, %v656
    %658 = vmatprep.mubr.f32.mxu0 0.0
    %659 = vmatmul.mubr.f32.gmra.mxu0 %v72
    %v660 = vpop.f32.mrf.mxu0
    %v661 = vadd.f32 %v236, %v660
    %v662 = vpop.f32.mrf.mxu0
    %v663 = vadd.f32 %v240, %v662
    %664 = vmatprep.mubr.f32.mxu0 0.0
    %665 = vmatmul.mubr.f32.gmra.mxu0 %v73
    %v666 = vpop.f32.mrf.mxu0
    %v667 = vadd.f32 %v236, %v666
    %v668 = vpop.f32.mrf.mxu0
    %v669 = vadd.f32 %v240, %v668
    %670 = vmatprep.mubr.f32.mxu0 0.0
    %671 = vmatmul.mubr.f32.gmra.mxu0 %v74
    %v672 = vpop.f32.mrf.mxu0
    %v673 = vadd.f32 %v236, %v672
    %v674 = vpop.f32.mrf.mxu0
    %v675 = vadd.f32 %v240, %v674
    %676 = vmatprep.mubr.f32.mxu0 0.0
    %677 = vmatmul.mubr.f32.gmra.mxu0 %v75
    %v678 = vpop.f32.mrf.mxu0
    %v679 = vadd.f32 %v236, %v678
    %v680 = vpop.f32.mrf.mxu0
    %v681 = vadd.f32 %v240, %v680
    %682 = vmatprep.mubr.f32.mxu0 0.0
    %683 = vmatmul.mubr.f32.gmra.mxu0 %v76
    %v684 = vpop.f32.mrf.mxu0
    %v685 = vadd.f32 %v236, %v684
    %v686 = vpop.f32.mrf.mxu0
    %v687 = vadd.f32 %v240, %v686
    %688 = vmatprep.mubr.f32.mxu0 0.0
    %689 = vmatmul.mubr.f32.gmra.mxu0 %v77
    %v690 = vpop.f32.mrf.mxu0
    %v691 = vadd.f32 %v236, %v690
    %v692 = vpop.f32.mrf.mxu0
    %v693 = vadd.f32 %v240, %v692
    %694 = vmatprep.mubr.f32.mxu0 0.0
    %695 = vmatmul.mubr.f32.gmra.mxu0 %v78
    %v696 = vpop.f32.mrf.mxu0
    %v697 = vadd.f32 %v236, %v696
    %v698 = vpop.f32.mrf.mxu0
    %v699 = vadd.f32 %v240, %v698
    %700 = vdwg.mxu0
    %701 = vst [vmem:[#allocation2] sm:$0xff] %v316
    %702 = vst [vmem:[#allocation2 + $0x8] sm:$0xff] %v318
    %703 = vst [vmem:[#allocation2 + $0x10] sm:$0xff] %v429
    %704 = vst [vmem:[#allocation2 + $0x18] sm:$0xff] %v431
    %705 = vst [vmem:[#allocation2 + $0x20] sm:$0xff] %v542
    %706 = vst [vmem:[#allocation2 + $0x28] sm:$0xff] %v544
    %707 = vst [vmem:[#allocation2 + $0x30] sm:$0xff] %v655
    %708 = vst [vmem:[#allocation2 + $0x38] sm:$0xff] %v657
    %709 = vst [vmem:[#allocation2 + $0x40] sm:$0xff] %v322
    %710 = vst [vmem:[#allocation2 + $0x48] sm:$0xff] %v324
    %711 = vst [vmem:[#allocation2 + $0x50] sm:$0xff] %v435
    %712 = vst [vmem:[#allocation2 + $0x58] sm:$0xff] %v437
    %713 = vst [vmem:[#allocation2 + $0x60] sm:$0xff] %v548
    %714 = vst [vmem:[#allocation2 + $0x68] sm:$0xff] %v550
    %715 = vst [vmem:[#allocation2 + $0x70] sm:$0xff] %v661
    %716 = vst [vmem:[#allocation2 + $0x78] sm:$0xff] %v663
    %717 = vst [vmem:[#allocation2 + $0x80] sm:$0xff] %v328
    %718 = vst [vmem:[#allocation2 + $0x88] sm:$0xff] %v330
    %719 = vst [vmem:[#allocation2 + $0x90] sm:$0xff] %v441
    %720 = vst [vmem:[#allocation2 + $0x98] sm:$0xff] %v443
    %721 = vst [vmem:[#allocation2 + $0xa0] sm:$0xff] %v554
    %722 = vst [vmem:[#allocation2 + $0xa8] sm:$0xff] %v556
    %723 = vst [vmem:[#allocation2 + $0xb0] sm:$0xff] %v667
    %724 = vst [vmem:[#allocation2 + $0xb8] sm:$0xff] %v669
    %725 = vst [vmem:[#allocation2 + $0xc0] sm:$0xff] %v334
    %726 = vst [vmem:[#allocation2 + $0xc8] sm:$0xff] %v336
    %727 = vst [vmem:[#allocation2 + $0xd0] sm:$0xff] %v447
    %728 = vst [vmem:[#allocation2 + $0xd8] sm:$0xff] %v449
    %729 = vst [vmem:[#allocation2 + $0xe0] sm:$0xff] %v560
    %730 = vst [vmem:[#allocation2 + $0xe8] sm:$0xff] %v562
    %731 = vst [vmem:[#allocation2 + $0xf0] sm:$0xff] %v673
    %732 = vst [vmem:[#allocation2 + $0xf8] sm:$0xff] %v675
    %733 = vst [vmem:[#allocation2 + $0x100] sm:$0xff] %v340
    %734 = vst [vmem:[#allocation2 + $0x108] sm:$0xff] %v342
    %735 = vst [vmem:[#allocation2 + $0x110] sm:$0xff] %v453
    %736 = vst [vmem:[#allocation2 + $0x118] sm:$0xff] %v455
    %737 = vst [vmem:[#allocation2 + $0x120] sm:$0xff] %v566
    %738 = vst [vmem:[#allocation2 + $0x128] sm:$0xff] %v568
    %739 = vst [vmem:[#allocation2 + $0x130] sm:$0xff] %v679
    %740 = vst [vmem:[#allocation2 + $0x138] sm:$0xff] %v681
    %741 = vst [vmem:[#allocation2 + $0x140] sm:$0xff] %v346
    %742 = vst [vmem:[#allocation2 + $0x148] sm:$0xff] %v348
    %743 = vst [vmem:[#allocation2 + $0x150] sm:$0xff] %v459
    %744 = vst [vmem:[#allocation2 + $0x158] sm:$0xff] %v461
    %745 = vst [vmem:[#allocation2 + $0x160] sm:$0xff] %v572
    %746 = vst [vmem:[#allocation2 + $0x168] sm:$0xff] %v574
    %747 = vst [vmem:[#allocation2 + $0x170] sm:$0xff] %v685
    %748 = vst [vmem:[#allocation2 + $0x178] sm:$0xff] %v687
    %749 = vst [vmem:[#allocation2 + $0x180] sm:$0xff] %v352
    %750 = vst [vmem:[#allocation2 + $0x188] sm:$0xff] %v354
    %751 = vst [vmem:[#allocation2 + $0x190] sm:$0xff] %v465
    %752 = vst [vmem:[#allocation2 + $0x198] sm:$0xff] %v467
    %753 = vst [vmem:[#allocation2 + $0x1a0] sm:$0xff] %v578
    %754 = vst [vmem:[#allocation2 + $0x1a8] sm:$0xff] %v580
    %755 = vst [vmem:[#allocation2 + $0x1b0] sm:$0xff] %v691
    %756 = vst [vmem:[#allocation2 + $0x1b8] sm:$0xff] %v693
    %757 = vst [vmem:[#allocation2 + $0x1c0] sm:$0xff] %v358
    %758 = vst [vmem:[#allocation2 + $0x1c8] sm:$0xff] %v360
    %759 = vst [vmem:[#allocation2 + $0x1d0] sm:$0xff] %v471
    %760 = vst [vmem:[#allocation2 + $0x1d8] sm:$0xff] %v473
    %761 = vst [vmem:[#allocation2 + $0x1e0] sm:$0xff] %v584
    %762 = vst [vmem:[#allocation2 + $0x1e8] sm:$0xff] %v586
    %763 = vst [vmem:[#allocation2 + $0x1f0] sm:$0xff] %v697
    %764 = vst [vmem:[#allocation2 + $0x1f8] sm:$0xff] %v699
    %v765 = vld [vmem:[#allocation2] sm:$0xff]
    %v766 = vld [vmem:[#allocation2 + $0x8] sm:$0xff]
    %v767 = vld [vmem:[#allocation2 + $0x10] sm:$0xff]
    %v768 = vld [vmem:[#allocation2 + $0x18] sm:$0xff]
    %v769 = vld [vmem:[#allocation2 + $0x20] sm:$0xff]
    %v770 = vld [vmem:[#allocation2 + $0x28] sm:$0xff]
    %v771 = vld [vmem:[#allocation2 + $0x30] sm:$0xff]
    %v772 = vld [vmem:[#allocation2 + $0x38] sm:$0xff]
    %v773 = vld [vmem:[#allocation8] sm:$0xff]
    %v774 = vld [vmem:[#allocation8 + $0x8] sm:$0xff]
    %v775 = vld [vmem:[#allocation8 + $0x10] sm:$0xff]
    %v776 = vld [vmem:[#allocation8 + $0x18] sm:$0xff]
    %v777 = vld [vmem:[#allocation8 + $0x20] sm:$0xff]
    %v778 = vld [vmem:[#allocation8 + $0x28] sm:$0xff]
    %v779 = vld [vmem:[#allocation8 + $0x30] sm:$0xff]
    %v780 = vld [vmem:[#allocation8 + $0x38] sm:$0xff]
    %v781 = vld [vmem:[#allocation8 + $0x40] sm:$0xff]
    %v782 = vld [vmem:[#allocation8 + $0x48] sm:$0xff]
    %v783 = vld [vmem:[#allocation8 + $0x50] sm:$0xff]
    %v784 = vld [vmem:[#allocation8 + $0x58] sm:$0xff]
    %v785 = vld [vmem:[#allocation8 + $0x60] sm:$0xff]
    %v786 = vld [vmem:[#allocation8 + $0x68] sm:$0xff]
    %v787 = vld [vmem:[#allocation8 + $0x70] sm:$0xff]
    %v788 = vld [vmem:[#allocation8 + $0x78] sm:$0xff]
    %v789 = vld [vmem:[#allocation8 + $0x80] sm:$0xff]
    %v790 = vld [vmem:[#allocation8 + $0x88] sm:$0xff]
    %v791 = vld [vmem:[#allocation8 + $0x90] sm:$0xff]
    %v792 = vld [vmem:[#allocation8 + $0x98] sm:$0xff]
    %v793 = vld [vmem:[#allocation8 + $0xa0] sm:$0xff]
    %v794 = vld [vmem:[#allocation8 + $0xa8] sm:$0xff]
    %v795 = vld [vmem:[#allocation8 + $0xb0] sm:$0xff]
    %v796 = vld [vmem:[#allocation8 + $0xb8] sm:$0xff]
    %v797 = vld [vmem:[#allocation8 + $0xc0] sm:$0xff]
    %v798 = vld [vmem:[#allocation8 + $0xc8] sm:$0xff]
    %v799 = vld [vmem:[#allocation8 + $0xd0] sm:$0xff]
    %v800 = vld [vmem:[#allocation8 + $0xd8] sm:$0xff]
    %v801 = vld [vmem:[#allocation8 + $0xe0] sm:$0xff]
    %v802 = vld [vmem:[#allocation8 + $0xe8] sm:$0xff]
    %v803 = vld [vmem:[#allocation8 + $0xf0] sm:$0xff]
    %v804 = vld [vmem:[#allocation8 + $0xf8] sm:$0xff]
    %v805 = vld [vmem:[#allocation8 + $0x100] sm:$0xff]
    %v806 = vld [vmem:[#allocation8 + $0x108] sm:$0xff]
    %v807 = vld [vmem:[#allocation8 + $0x110] sm:$0xff]
    %v808 = vld [vmem:[#allocation8 + $0x118] sm:$0xff]
    %v809 = vld [vmem:[#allocation8 + $0x120] sm:$0xff]
    %v810 = vld [vmem:[#allocation8 + $0x128] sm:$0xff]
    %v811 = vld [vmem:[#allocation8 + $0x130] sm:$0xff]
    %v812 = vld [vmem:[#allocation8 + $0x138] sm:$0xff]
    %v813 = vld [vmem:[#allocation8 + $0x140] sm:$0xff]
    %v814 = vld [vmem:[#allocation8 + $0x148] sm:$0xff]
    %v815 = vld [vmem:[#allocation8 + $0x150] sm:$0xff]
    %v816 = vld [vmem:[#allocation8 + $0x158] sm:$0xff]
    %v817 = vld [vmem:[#allocation8 + $0x160] sm:$0xff]
    %v818 = vld [vmem:[#allocation8 + $0x168] sm:$0xff]
    %v819 = vld [vmem:[#allocation8 + $0x170] sm:$0xff]
    %v820 = vld [vmem:[#allocation8 + $0x178] sm:$0xff]
    %v821 = vld [vmem:[#allocation8 + $0x180] sm:$0xff]
    %v822 = vld [vmem:[#allocation8 + $0x188] sm:$0xff]
    %v823 = vld [vmem:[#allocation8 + $0x190] sm:$0xff]
    %v824 = vld [vmem:[#allocation8 + $0x198] sm:$0xff]
    %v825 = vld [vmem:[#allocation8 + $0x1a0] sm:$0xff]
    %v826 = vld [vmem:[#allocation8 + $0x1a8] sm:$0xff]
    %v827 = vld [vmem:[#allocation8 + $0x1b0] sm:$0xff]
    %v828 = vld [vmem:[#allocation8 + $0x1b8] sm:$0xff]
    %v829 = vld [vmem:[#allocation8 + $0x1c0] sm:$0xff]
    %v830 = vld [vmem:[#allocation8 + $0x1c8] sm:$0xff]
    %v831 = vld [vmem:[#allocation8 + $0x1d0] sm:$0xff]
    %v832 = vld [vmem:[#allocation8 + $0x1d8] sm:$0xff]
    %v833 = vld [vmem:[#allocation8 + $0x1e0] sm:$0xff]
    %v834 = vld [vmem:[#allocation8 + $0x1e8] sm:$0xff]
    %v835 = vld [vmem:[#allocation8 + $0x1f0] sm:$0xff]
    %v836 = vld [vmem:[#allocation8 + $0x1f8] sm:$0xff]
    %v837 = vld [vmem:[#allocation8 + $0x200] sm:$0xff]
    %v838 = vld [vmem:[#allocation8 + $0x208] sm:$0xff]
    %v839 = vld [vmem:[#allocation8 + $0x210] sm:$0xff]
    %v840 = vld [vmem:[#allocation8 + $0x218] sm:$0xff]
    %v841 = vld [vmem:[#allocation8 + $0x220] sm:$0xff]
    %v842 = vld [vmem:[#allocation8 + $0x228] sm:$0xff]
    %v843 = vld [vmem:[#allocation8 + $0x230] sm:$0xff]
    %v844 = vld [vmem:[#allocation8 + $0x238] sm:$0xff]
    %v845 = vld [vmem:[#allocation8 + $0x240] sm:$0xff]
    %v846 = vld [vmem:[#allocation8 + $0x248] sm:$0xff]
    %v847 = vld [vmem:[#allocation8 + $0x250] sm:$0xff]
    %v848 = vld [vmem:[#allocation8 + $0x258] sm:$0xff]
    %v849 = vld [vmem:[#allocation8 + $0x260] sm:$0xff]
    %v850 = vld [vmem:[#allocation8 + $0x268] sm:$0xff]
    %v851 = vld [vmem:[#allocation8 + $0x270] sm:$0xff]
    %v852 = vld [vmem:[#allocation8 + $0x278] sm:$0xff]
    %v853 = vld [vmem:[#allocation8 + $0x280] sm:$0xff]
    %v854 = vld [vmem:[#allocation8 + $0x288] sm:$0xff]
    %v855 = vld [vmem:[#allocation8 + $0x290] sm:$0xff]
    %v856 = vld [vmem:[#allocation8 + $0x298] sm:$0xff]
    %v857 = vld [vmem:[#allocation8 + $0x2a0] sm:$0xff]
    %v858 = vld [vmem:[#allocation8 + $0x2a8] sm:$0xff]
    %v859 = vld [vmem:[#allocation8 + $0x2b0] sm:$0xff]
    %v860 = vld [vmem:[#allocation8 + $0x2b8] sm:$0xff]
    %v861 = vld [vmem:[#allocation8 + $0x2c0] sm:$0xff]
    %v862 = vld [vmem:[#allocation8 + $0x2c8] sm:$0xff]
    %v863 = vld [vmem:[#allocation8 + $0x2d0] sm:$0xff]
    %v864 = vld [vmem:[#allocation8 + $0x2d8] sm:$0xff]
    %v865 = vld [vmem:[#allocation8 + $0x2e0] sm:$0xff]
    %v866 = vld [vmem:[#allocation8 + $0x2e8] sm:$0xff]
    %v867 = vld [vmem:[#allocation8 + $0x2f0] sm:$0xff]
    %v868 = vld [vmem:[#allocation8 + $0x2f8] sm:$0xff]
    %v869 = vld [vmem:[#allocation8 + $0x300] sm:$0xff]
    %v870 = vld [vmem:[#allocation8 + $0x308] sm:$0xff]
    %v871 = vld [vmem:[#allocation8 + $0x310] sm:$0xff]
    %v872 = vld [vmem:[#allocation8 + $0x318] sm:$0xff]
    %v873 = vld [vmem:[#allocation8 + $0x320] sm:$0xff]
    %v874 = vld [vmem:[#allocation8 + $0x328] sm:$0xff]
    %v875 = vld [vmem:[#allocation8 + $0x330] sm:$0xff]
    %v876 = vld [vmem:[#allocation8 + $0x338] sm:$0xff]
    %v877 = vld [vmem:[#allocation8 + $0x340] sm:$0xff]
    %v878 = vld [vmem:[#allocation8 + $0x348] sm:$0xff]
    %v879 = vld [vmem:[#allocation8 + $0x350] sm:$0xff]
    %v880 = vld [vmem:[#allocation8 + $0x358] sm:$0xff]
    %v881 = vld [vmem:[#allocation8 + $0x360] sm:$0xff]
    %v882 = vld [vmem:[#allocation8 + $0x368] sm:$0xff]
    %v883 = vld [vmem:[#allocation8 + $0x370] sm:$0xff]
    %v884 = vld [vmem:[#allocation8 + $0x378] sm:$0xff]
    %v885 = vld [vmem:[#allocation8 + $0x380] sm:$0xff]
    %v886 = vld [vmem:[#allocation8 + $0x388] sm:$0xff]
    %v887 = vld [vmem:[#allocation8 + $0x390] sm:$0xff]
    %v888 = vld [vmem:[#allocation8 + $0x398] sm:$0xff]
    %v889 = vld [vmem:[#allocation8 + $0x3a0] sm:$0xff]
    %v890 = vld [vmem:[#allocation8 + $0x3a8] sm:$0xff]
    %v891 = vld [vmem:[#allocation8 + $0x3b0] sm:$0xff]
    %v892 = vld [vmem:[#allocation8 + $0x3b8] sm:$0xff]
    %v893 = vld [vmem:[#allocation8 + $0x3c0] sm:$0xff]
    %v894 = vld [vmem:[#allocation8 + $0x3c8] sm:$0xff]
    %v895 = vld [vmem:[#allocation8 + $0x3d0] sm:$0xff]
    %v896 = vld [vmem:[#allocation8 + $0x3d8] sm:$0xff]
    %v897 = vld [vmem:[#allocation8 + $0x3e0] sm:$0xff]
    %v898 = vld [vmem:[#allocation8 + $0x3e8] sm:$0xff]
    %v899 = vld [vmem:[#allocation8 + $0x3f0] sm:$0xff]
    %v900 = vld [vmem:[#allocation8 + $0x3f8] sm:$0xff]
    %v901 = vld [vmem:[#allocation8 + $0x400] sm:$0xff]
    %v902 = vld [vmem:[#allocation8 + $0x408] sm:$0xff]
    %v903 = vld [vmem:[#allocation8 + $0x410] sm:$0xff]
    %v904 = vld [vmem:[#allocation8 + $0x418] sm:$0xff]
    %v905 = vld [vmem:[#allocation8 + $0x420] sm:$0xff]
    %v906 = vld [vmem:[#allocation8 + $0x428] sm:$0xff]
    %v907 = vld [vmem:[#allocation8 + $0x430] sm:$0xff]
    %v908 = vld [vmem:[#allocation8 + $0x438] sm:$0xff]
    %v909 = vld [vmem:[#allocation8 + $0x440] sm:$0xff]
    %v910 = vld [vmem:[#allocation8 + $0x448] sm:$0xff]
    %v911 = vld [vmem:[#allocation8 + $0x450] sm:$0xff]
    %v912 = vld [vmem:[#allocation8 + $0x458] sm:$0xff]
    %v913 = vld [vmem:[#allocation8 + $0x460] sm:$0xff]
    %v914 = vld [vmem:[#allocation8 + $0x468] sm:$0xff]
    %v915 = vld [vmem:[#allocation8 + $0x470] sm:$0xff]
    %v916 = vld [vmem:[#allocation8 + $0x478] sm:$0xff]
    %v917 = vld [vmem:[#allocation8 + $0x480] sm:$0xff]
    %v918 = vld [vmem:[#allocation8 + $0x488] sm:$0xff]
    %v919 = vld [vmem:[#allocation8 + $0x490] sm:$0xff]
    %v920 = vld [vmem:[#allocation8 + $0x498] sm:$0xff]
    %v921 = vld [vmem:[#allocation8 + $0x4a0] sm:$0xff]
    %v922 = vld [vmem:[#allocation8 + $0x4a8] sm:$0xff]
    %v923 = vld [vmem:[#allocation8 + $0x4b0] sm:$0xff]
    %v924 = vld [vmem:[#allocation8 + $0x4b8] sm:$0xff]
    %v925 = vld [vmem:[#allocation8 + $0x4c0] sm:$0xff]
    %v926 = vld [vmem:[#allocation8 + $0x4c8] sm:$0xff]
    %v927 = vld [vmem:[#allocation8 + $0x4d0] sm:$0xff]
    %v928 = vld [vmem:[#allocation8 + $0x4d8] sm:$0xff]
    %v929 = vld [vmem:[#allocation8 + $0x4e0] sm:$0xff]
    %v930 = vld [vmem:[#allocation8 + $0x4e8] sm:$0xff]
    %v931 = vld [vmem:[#allocation8 + $0x4f0] sm:$0xff]
    %v932 = vld [vmem:[#allocation8 + $0x4f8] sm:$0xff]
    %v933 = vld [vmem:[#allocation8 + $0x500] sm:$0xff]
    %v934 = vld [vmem:[#allocation8 + $0x508] sm:$0xff]
    %v935 = vld [vmem:[#allocation8 + $0x510] sm:$0xff]
    %v936 = vld [vmem:[#allocation8 + $0x518] sm:$0xff]
    %v937 = vld [vmem:[#allocation8 + $0x520] sm:$0xff]
    %v938 = vld [vmem:[#allocation8 + $0x528] sm:$0xff]
    %v939 = vld [vmem:[#allocation8 + $0x530] sm:$0xff]
    %v940 = vld [vmem:[#allocation8 + $0x538] sm:$0xff]
    %v941 = vld [vmem:[#allocation8 + $0x540] sm:$0xff]
    %v942 = vld [vmem:[#allocation8 + $0x548] sm:$0xff]
    %v943 = vld [vmem:[#allocation8 + $0x550] sm:$0xff]
    %v944 = vld [vmem:[#allocation8 + $0x558] sm:$0xff]
    %v945 = vld [vmem:[#allocation8 + $0x560] sm:$0xff]
    %v946 = vld [vmem:[#allocation8 + $0x568] sm:$0xff]
    %v947 = vld [vmem:[#allocation8 + $0x570] sm:$0xff]
    %v948 = vld [vmem:[#allocation8 + $0x578] sm:$0xff]
    %v949 = vld [vmem:[#allocation8 + $0x580] sm:$0xff]
    %v950 = vld [vmem:[#allocation8 + $0x588] sm:$0xff]
    %v951 = vld [vmem:[#allocation8 + $0x590] sm:$0xff]
    %v952 = vld [vmem:[#allocation8 + $0x598] sm:$0xff]
    %v953 = vld [vmem:[#allocation8 + $0x5a0] sm:$0xff]
    %v954 = vld [vmem:[#allocation8 + $0x5a8] sm:$0xff]
    %v955 = vld [vmem:[#allocation8 + $0x5b0] sm:$0xff]
    %v956 = vld [vmem:[#allocation8 + $0x5b8] sm:$0xff]
    %v957 = vld [vmem:[#allocation8 + $0x5c0] sm:$0xff]
    %v958 = vld [vmem:[#allocation8 + $0x5c8] sm:$0xff]
    %v959 = vld [vmem:[#allocation8 + $0x5d0] sm:$0xff]
    %v960 = vld [vmem:[#allocation8 + $0x5d8] sm:$0xff]
    %v961 = vld [vmem:[#allocation8 + $0x5e0] sm:$0xff]
    %v962 = vld [vmem:[#allocation8 + $0x5e8] sm:$0xff]
    %v963 = vld [vmem:[#allocation8 + $0x5f0] sm:$0xff]
    %v964 = vld [vmem:[#allocation8 + $0x5f8] sm:$0xff]
    %v965 = vld [vmem:[#allocation8 + $0x600] sm:$0xff]
    %v966 = vld [vmem:[#allocation8 + $0x608] sm:$0xff]
    %v967 = vld [vmem:[#allocation8 + $0x610] sm:$0xff]
    %v968 = vld [vmem:[#allocation8 + $0x618] sm:$0xff]
    %v969 = vld [vmem:[#allocation8 + $0x620] sm:$0xff]
    %v970 = vld [vmem:[#allocation8 + $0x628] sm:$0xff]
    %v971 = vld [vmem:[#allocation8 + $0x630] sm:$0xff]
    %v972 = vld [vmem:[#allocation8 + $0x638] sm:$0xff]
    %v973 = vld [vmem:[#allocation8 + $0x640] sm:$0xff]
    %v974 = vld [vmem:[#allocation8 + $0x648] sm:$0xff]
    %v975 = vld [vmem:[#allocation8 + $0x650] sm:$0xff]
    %v976 = vld [vmem:[#allocation8 + $0x658] sm:$0xff]
    %v977 = vld [vmem:[#allocation8 + $0x660] sm:$0xff]
    %v978 = vld [vmem:[#allocation8 + $0x668] sm:$0xff]
    %v979 = vld [vmem:[#allocation8 + $0x670] sm:$0xff]
    %v980 = vld [vmem:[#allocation8 + $0x678] sm:$0xff]
    %v981 = vld [vmem:[#allocation8 + $0x680] sm:$0xff]
    %v982 = vld [vmem:[#allocation8 + $0x688] sm:$0xff]
    %v983 = vld [vmem:[#allocation8 + $0x690] sm:$0xff]
    %v984 = vld [vmem:[#allocation8 + $0x698] sm:$0xff]
    %v985 = vld [vmem:[#allocation8 + $0x6a0] sm:$0xff]
    %v986 = vld [vmem:[#allocation8 + $0x6a8] sm:$0xff]
    %v987 = vld [vmem:[#allocation8 + $0x6b0] sm:$0xff]
    %v988 = vld [vmem:[#allocation8 + $0x6b8] sm:$0xff]
    %v989 = vld [vmem:[#allocation8 + $0x6c0] sm:$0xff]
    %v990 = vld [vmem:[#allocation8 + $0x6c8] sm:$0xff]
    %v991 = vld [vmem:[#allocation8 + $0x6d0] sm:$0xff]
    %v992 = vld [vmem:[#allocation8 + $0x6d8] sm:$0xff]
    %v993 = vld [vmem:[#allocation8 + $0x6e0] sm:$0xff]
    %v994 = vld [vmem:[#allocation8 + $0x6e8] sm:$0xff]
    %v995 = vld [vmem:[#allocation8 + $0x6f0] sm:$0xff]
    %v996 = vld [vmem:[#allocation8 + $0x6f8] sm:$0xff]
    %v997 = vld [vmem:[#allocation8 + $0x700] sm:$0xff]
    %v998 = vld [vmem:[#allocation8 + $0x708] sm:$0xff]
    %v999 = vld [vmem:[#allocation8 + $0x710] sm:$0xff]
    %v1000 = vld [vmem:[#allocation8 + $0x718] sm:$0xff]
    %v1001 = vld [vmem:[#allocation8 + $0x720] sm:$0xff]
    %v1002 = vld [vmem:[#allocation8 + $0x728] sm:$0xff]
    %v1003 = vld [vmem:[#allocation8 + $0x730] sm:$0xff]
    %v1004 = vld [vmem:[#allocation8 + $0x738] sm:$0xff]
    %v1005 = vld [vmem:[#allocation8 + $0x740] sm:$0xff]
    %v1006 = vld [vmem:[#allocation8 + $0x748] sm:$0xff]
    %v1007 = vld [vmem:[#allocation8 + $0x750] sm:$0xff]
    %v1008 = vld [vmem:[#allocation8 + $0x758] sm:$0xff]
    %v1009 = vld [vmem:[#allocation8 + $0x760] sm:$0xff]
    %v1010 = vld [vmem:[#allocation8 + $0x768] sm:$0xff]
    %v1011 = vld [vmem:[#allocation8 + $0x770] sm:$0xff]
    %v1012 = vld [vmem:[#allocation8 + $0x778] sm:$0xff]
    %v1013 = vld [vmem:[#allocation8 + $0x780] sm:$0xff]
    %v1014 = vld [vmem:[#allocation8 + $0x788] sm:$0xff]
    %v1015 = vld [vmem:[#allocation8 + $0x790] sm:$0xff]
    %v1016 = vld [vmem:[#allocation8 + $0x798] sm:$0xff]
    %v1017 = vld [vmem:[#allocation8 + $0x7a0] sm:$0xff]
    %v1018 = vld [vmem:[#allocation8 + $0x7a8] sm:$0xff]
    %v1019 = vld [vmem:[#allocation8 + $0x7b0] sm:$0xff]
    %v1020 = vld [vmem:[#allocation8 + $0x7b8] sm:$0xff]
    %v1021 = vld [vmem:[#allocation8 + $0x7c0] sm:$0xff]
    %v1022 = vld [vmem:[#allocation8 + $0x7c8] sm:$0xff]
    %v1023 = vld [vmem:[#allocation8 + $0x7d0] sm:$0xff]
    %v1024 = vld [vmem:[#allocation8 + $0x7d8] sm:$0xff]
    %v1025 = vld [vmem:[#allocation8 + $0x7e0] sm:$0xff]
    %v1026 = vld [vmem:[#allocation8 + $0x7e8] sm:$0xff]
    %v1027 = vld [vmem:[#allocation8 + $0x7f0] sm:$0xff]
    %v1028 = vld [vmem:[#allocation8 + $0x7f8] sm:$0xff]
    %1029 = vmatprep.subr.mxu0 %v894
    %1030 = vmatpush1.msra.mxu0 %v893
    %1031 = vmatprep.subr.mxu0 %v886
    %1032 = vmatpush1.msra.mxu0 %v885
    %1033 = vmatprep.subr.mxu0 %v878
    %1034 = vmatpush1.msra.mxu0 %v877
    %1035 = vmatprep.subr.mxu0 %v870
    %1036 = vmatpush1.msra.mxu0 %v869
    %1037 = vmatprep.subr.mxu0 %v862
    %1038 = vmatpush1.msra.mxu0 %v861
    %1039 = vmatprep.subr.mxu0 %v854
    %1040 = vmatpush1.msra.mxu0 %v853
    %1041 = vmatprep.subr.mxu0 %v846
    %1042 = vmatpush1.msra.mxu0 %v845
    %1043 = vmatprep.subr.mxu0 %v838
    %1044 = vmatpush1.msra.mxu0 %v837
    %1045 = vmatprep.subr.mxu0 %v830
    %1046 = vmatpush1.msra.mxu0 %v829
    %1047 = vmatprep.subr.mxu0 %v822
    %1048 = vmatpush1.msra.mxu0 %v821
    %1049 = vmatprep.subr.mxu0 %v814
    %1050 = vmatpush1.msra.mxu0 %v813
    %1051 = vmatprep.subr.mxu0 %v806
    %1052 = vmatpush1.msra.mxu0 %v805
    %1053 = vmatprep.subr.mxu0 %v798
    %1054 = vmatpush1.msra.mxu0 %v797
    %1055 = vmatprep.subr.mxu0 %v790
    %1056 = vmatpush1.msra.mxu0 %v789
    %1057 = vmatprep.subr.mxu0 %v782
    %1058 = vmatpush1.msra.mxu0 %v781
    %1059 = vmatprep.subr.mxu0 %v774
    %1060 = vmatpush1.msra.mxu0 %v773
    %1061 = vmatprep.subr.mxu0 %v1022
    %1062 = vmatpush2.msra.mxu0 %v1021
    %1063 = vmatprep.subr.mxu0 %v1014
    %1064 = vmatpush2.msra.mxu0 %v1013
    %1065 = vmatprep.subr.mxu0 %v1006
    %1066 = vmatpush2.msra.mxu0 %v1005
    %1067 = vmatprep.subr.mxu0 %v998
    %1068 = vmatpush2.msra.mxu0 %v997
    %1069 = vmatprep.subr.mxu0 %v990
    %1070 = vmatpush2.msra.mxu0 %v989
    %1071 = vmatprep.subr.mxu0 %v982
    %1072 = vmatpush2.msra.mxu0 %v981
    %1073 = vmatprep.subr.mxu0 %v974
    %1074 = vmatpush2.msra.mxu0 %v973
    %1075 = vmatprep.subr.mxu0 %v966
    %1076 = vmatpush2.msra.mxu0 %v965
    %1077 = vmatprep.subr.mxu0 %v958
    %1078 = vmatpush2.msra.mxu0 %v957
    %1079 = vmatprep.subr.mxu0 %v950
    %1080 = vmatpush2.msra.mxu0 %v949
    %1081 = vmatprep.subr.mxu0 %v942
    %1082 = vmatpush2.msra.mxu0 %v941
    %1083 = vmatprep.subr.mxu0 %v934
    %1084 = vmatpush2.msra.mxu0 %v933
    %1085 = vmatprep.subr.mxu0 %v926
    %1086 = vmatpush2.msra.mxu0 %v925
    %1087 = vmatprep.subr.mxu0 %v918
    %1088 = vmatpush2.msra.mxu0 %v917
    %1089 = vmatprep.subr.mxu0 %v910
    %1090 = vmatpush2.msra.mxu0 %v909
    %1091 = vmatprep.subr.mxu0 %v902
    %1092 = vmatpush2.msra.mxu0 %v901
    %1093 = vmatprep.mubr.f32.mxu0 0.0
    %1094 = vmatmul.mubr.f32.gmra.mxu0 0.0
    %v1095 = vpop.f32.mrf.mxu0
    %v1096 = vadd.f32 0.0, %v1095
    %v1097 = vpop.f32.mrf.mxu0
    %v1098 = vadd.f32 0.0, %v1097
    %1099 = vdwg.mxu0
    %1100 = vmatprep.subr.mxu0 %v896
    %1101 = vmatpush1.msra.mxu0 %v895
    %1102 = vmatprep.subr.mxu0 %v888
    %1103 = vmatpush1.msra.mxu0 %v887
    %1104 = vmatprep.subr.mxu0 %v880
    %1105 = vmatpush1.msra.mxu0 %v879
    %1106 = vmatprep.subr.mxu0 %v872
    %1107 = vmatpush1.msra.mxu0 %v871
    %1108 = vmatprep.subr.mxu0 %v864
    %1109 = vmatpush1.msra.mxu0 %v863
    %1110 = vmatprep.subr.mxu0 %v856
    %1111 = vmatpush1.msra.mxu0 %v855
    %1112 = vmatprep.subr.mxu0 %v848
    %1113 = vmatpush1.msra.mxu0 %v847
    %1114 = vmatprep.subr.mxu0 %v840
    %1115 = vmatpush1.msra.mxu0 %v839
    %1116 = vmatprep.subr.mxu0 %v832
    %1117 = vmatpush1.msra.mxu0 %v831
    %1118 = vmatprep.subr.mxu0 %v824
    %1119 = vmatpush1.msra.mxu0 %v823
    %1120 = vmatprep.subr.mxu0 %v816
    %1121 = vmatpush1.msra.mxu0 %v815
    %1122 = vmatprep.subr.mxu0 %v808
    %1123 = vmatpush1.msra.mxu0 %v807
    %1124 = vmatprep.subr.mxu0 %v800
    %1125 = vmatpush1.msra.mxu0 %v799
    %1126 = vmatprep.subr.mxu0 %v792
    %1127 = vmatpush1.msra.mxu0 %v791
    %1128 = vmatprep.subr.mxu0 %v784
    %1129 = vmatpush1.msra.mxu0 %v783
    %1130 = vmatprep.subr.mxu0 %v776
    %1131 = vmatpush1.msra.mxu0 %v775
    %1132 = vmatprep.subr.mxu0 %v1024
    %1133 = vmatpush2.msra.mxu0 %v1023
    %1134 = vmatprep.subr.mxu0 %v1016
    %1135 = vmatpush2.msra.mxu0 %v1015
    %1136 = vmatprep.subr.mxu0 %v1008
    %1137 = vmatpush2.msra.mxu0 %v1007
    %1138 = vmatprep.subr.mxu0 %v1000
    %1139 = vmatpush2.msra.mxu0 %v999
    %1140 = vmatprep.subr.mxu0 %v992
    %1141 = vmatpush2.msra.mxu0 %v991
    %1142 = vmatprep.subr.mxu0 %v984
    %1143 = vmatpush2.msra.mxu0 %v983
    %1144 = vmatprep.subr.mxu0 %v976
    %1145 = vmatpush2.msra.mxu0 %v975
    %1146 = vmatprep.subr.mxu0 %v968
    %1147 = vmatpush2.msra.mxu0 %v967
    %1148 = vmatprep.subr.mxu0 %v960
    %1149 = vmatpush2.msra.mxu0 %v959
    %1150 = vmatprep.subr.mxu0 %v952
    %1151 = vmatpush2.msra.mxu0 %v951
    %1152 = vmatprep.subr.mxu0 %v944
    %1153 = vmatpush2.msra.mxu0 %v943
    %1154 = vmatprep.subr.mxu0 %v936
    %1155 = vmatpush2.msra.mxu0 %v935
    %1156 = vmatprep.subr.mxu0 %v928
    %1157 = vmatpush2.msra.mxu0 %v927
    %1158 = vmatprep.subr.mxu0 %v920
    %1159 = vmatpush2.msra.mxu0 %v919
    %1160 = vmatprep.subr.mxu0 %v912
    %1161 = vmatpush2.msra.mxu0 %v911
    %1162 = vmatprep.subr.mxu0 %v904
    %1163 = vmatpush2.msra.mxu0 %v903
    %1164 = vmatprep.mubr.f32.mxu0 0.0
    %1165 = vmatmul.mubr.f32.gmra.mxu0 0.0
    %v1166 = vpop.f32.mrf.mxu0
    %v1167 = vadd.f32 0.0, %v1166
    %v1168 = vpop.f32.mrf.mxu0
    %v1169 = vadd.f32 0.0, %v1168
    %1170 = vdwg.mxu0
    %1171 = vmatprep.subr.mxu0 %v898
    %1172 = vmatpush1.msra.mxu0 %v897
    %1173 = vmatprep.subr.mxu0 %v890
    %1174 = vmatpush1.msra.mxu0 %v889
    %1175 = vmatprep.subr.mxu0 %v882
    %1176 = vmatpush1.msra.mxu0 %v881
    %1177 = vmatprep.subr.mxu0 %v874
    %1178 = vmatpush1.msra.mxu0 %v873
    %1179 = vmatprep.subr.mxu0 %v866
    %1180 = vmatpush1.msra.mxu0 %v865
    %1181 = vmatprep.subr.mxu0 %v858
    %1182 = vmatpush1.msra.mxu0 %v857
    %1183 = vmatprep.subr.mxu0 %v850
    %1184 = vmatpush1.msra.mxu0 %v849
    %1185 = vmatprep.subr.mxu0 %v842
    %1186 = vmatpush1.msra.mxu0 %v841
    %1187 = vmatprep.subr.mxu0 %v834
    %1188 = vmatpush1.msra.mxu0 %v833
    %1189 = vmatprep.subr.mxu0 %v826
    %1190 = vmatpush1.msra.mxu0 %v825
    %1191 = vmatprep.subr.mxu0 %v818
    %1192 = vmatpush1.msra.mxu0 %v817
    %1193 = vmatprep.subr.mxu0 %v810
    %1194 = vmatpush1.msra.mxu0 %v809
    %1195 = vmatprep.subr.mxu0 %v802
    %1196 = vmatpush1.msra.mxu0 %v801
    %1197 = vmatprep.subr.mxu0 %v794
    %1198 = vmatpush1.msra.mxu0 %v793
    %1199 = vmatprep.subr.mxu0 %v786
    %1200 = vmatpush1.msra.mxu0 %v785
    %1201 = vmatprep.subr.mxu0 %v778
    %1202 = vmatpush1.msra.mxu0 %v777
    %1203 = vmatprep.subr.mxu0 %v1026
    %1204 = vmatpush2.msra.mxu0 %v1025
    %1205 = vmatprep.subr.mxu0 %v1018
    %1206 = vmatpush2.msra.mxu0 %v1017
    %1207 = vmatprep.subr.mxu0 %v1010
    %1208 = vmatpush2.msra.mxu0 %v1009
    %1209 = vmatprep.subr.mxu0 %v1002
    %1210 = vmatpush2.msra.mxu0 %v1001
    %1211 = vmatprep.subr.mxu0 %v994
    %1212 = vmatpush2.msra.mxu0 %v993
    %1213 = vmatprep.subr.mxu0 %v986
    %1214 = vmatpush2.msra.mxu0 %v985
    %1215 = vmatprep.subr.mxu0 %v978
    %1216 = vmatpush2.msra.mxu0 %v977
    %1217 = vmatprep.subr.mxu0 %v970
    %1218 = vmatpush2.msra.mxu0 %v969
    %1219 = vmatprep.subr.mxu0 %v962
    %1220 = vmatpush2.msra.mxu0 %v961
    %1221 = vmatprep.subr.mxu0 %v954
    %1222 = vmatpush2.msra.mxu0 %v953
    %1223 = vmatprep.subr.mxu0 %v946
    %1224 = vmatpush2.msra.mxu0 %v945
    %1225 = vmatprep.subr.mxu0 %v938
    %1226 = vmatpush2.msra.mxu0 %v937
    %1227 = vmatprep.subr.mxu0 %v930
    %1228 = vmatpush2.msra.mxu0 %v929
    %1229 = vmatprep.subr.mxu0 %v922
    %1230 = vmatpush2.msra.mxu0 %v921
    %1231 = vmatprep.subr.mxu0 %v914
    %1232 = vmatpush2.msra.mxu0 %v913
    %1233 = vmatprep.subr.mxu0 %v906
    %1234 = vmatpush2.msra.mxu0 %v905
    %1235 = vmatprep.mubr.f32.mxu0 0.0
    %1236 = vmatmul.mubr.f32.gmra.mxu0 0.0
    %v1237 = vpop.f32.mrf.mxu0
    %v1238 = vadd.f32 0.0, %v1237
    %v1239 = vpop.f32.mrf.mxu0
    %v1240 = vadd.f32 0.0, %v1239
    %1241 = vdwg.mxu0
    %1242 = vmatprep.subr.mxu0 %v900
    %1243 = vmatpush1.msra.mxu0 %v899
    %1244 = vmatprep.subr.mxu0 %v892
    %1245 = vmatpush1.msra.mxu0 %v891
    %1246 = vmatprep.subr.mxu0 %v884
    %1247 = vmatpush1.msra.mxu0 %v883
    %1248 = vmatprep.subr.mxu0 %v876
    %1249 = vmatpush1.msra.mxu0 %v875
    %1250 = vmatprep.subr.mxu0 %v868
    %1251 = vmatpush1.msra.mxu0 %v867
    %1252 = vmatprep.subr.mxu0 %v860
    %1253 = vmatpush1.msra.mxu0 %v859
    %1254 = vmatprep.subr.mxu0 %v852
    %1255 = vmatpush1.msra.mxu0 %v851
    %1256 = vmatprep.subr.mxu0 %v844
    %1257 = vmatpush1.msra.mxu0 %v843
    %1258 = vmatprep.subr.mxu0 %v836
    %1259 = vmatpush1.msra.mxu0 %v835
    %1260 = vmatprep.subr.mxu0 %v828
    %1261 = vmatpush1.msra.mxu0 %v827
    %1262 = vmatprep.subr.mxu0 %v820
    %1263 = vmatpush1.msra.mxu0 %v819
    %1264 = vmatprep.subr.mxu0 %v812
    %1265 = vmatpush1.msra.mxu0 %v811
    %1266 = vmatprep.subr.mxu0 %v804
    %1267 = vmatpush1.msra.mxu0 %v803
    %1268 = vmatprep.subr.mxu0 %v796
    %1269 = vmatpush1.msra.mxu0 %v795
    %1270 = vmatprep.subr.mxu0 %v788
    %1271 = vmatpush1.msra.mxu0 %v787
    %1272 = vmatprep.subr.mxu0 %v780
    %1273 = vmatpush1.msra.mxu0 %v779
    %1274 = vmatprep.subr.mxu0 %v1028
    %1275 = vmatpush2.msra.mxu0 %v1027
    %1276 = vmatprep.subr.mxu0 %v1020
    %1277 = vmatpush2.msra.mxu0 %v1019
    %1278 = vmatprep.subr.mxu0 %v1012
    %1279 = vmatpush2.msra.mxu0 %v1011
    %1280 = vmatprep.subr.mxu0 %v1004
    %1281 = vmatpush2.msra.mxu0 %v1003
    %1282 = vmatprep.subr.mxu0 %v996
    %1283 = vmatpush2.msra.mxu0 %v995
    %1284 = vmatprep.subr.mxu0 %v988
    %1285 = vmatpush2.msra.mxu0 %v987
    %1286 = vmatprep.subr.mxu0 %v980
    %1287 = vmatpush2.msra.mxu0 %v979
    %1288 = vmatprep.subr.mxu0 %v972
    %1289 = vmatpush2.msra.mxu0 %v971
    %1290 = vmatprep.subr.mxu0 %v964
    %1291 = vmatpush2.msra.mxu0 %v963
    %1292 = vmatprep.subr.mxu0 %v956
    %1293 = vmatpush2.msra.mxu0 %v955
    %1294 = vmatprep.subr.mxu0 %v948
    %1295 = vmatpush2.msra.mxu0 %v947
    %1296 = vmatprep.subr.mxu0 %v940
    %1297 = vmatpush2.msra.mxu0 %v939
    %1298 = vmatprep.subr.mxu0 %v932
    %1299 = vmatpush2.msra.mxu0 %v931
    %1300 = vmatprep.subr.mxu0 %v924
    %1301 = vmatpush2.msra.mxu0 %v923
    %1302 = vmatprep.subr.mxu0 %v916
    %1303 = vmatpush2.msra.mxu0 %v915
    %1304 = vmatprep.subr.mxu0 %v908
    %1305 = vmatpush2.msra.mxu0 %v907
    %1306 = vmatprep.mubr.f32.mxu0 0.0
    %1307 = vmatmul.mubr.f32.gmra.mxu0 0.0
    %v1308 = vpop.f32.mrf.mxu0
    %v1309 = vadd.f32 0.0, %v1308
    %v1310 = vpop.f32.mrf.mxu0
    %v1311 = vadd.f32 0.0, %v1310
    %1312 = vdwg.mxu0
    %v1313 = vadd.f32 %v765, %v1096
    %v1314 = vadd.f32 %v766, %v1098
    %v1315 = vadd.f32 %v767, %v1167
    %v1316 = vadd.f32 %v768, %v1169
    %v1317 = vadd.f32 %v769, %v1238
    %v1318 = vadd.f32 %v770, %v1240
    %v1319 = vadd.f32 %v771, %v1309
    %v1320 = vadd.f32 %v772, %v1311
    %v1321 = vxor.u32 %v1313, 2147483648
    %v1322 = vxor.u32 %v1314, 2147483648
    %v1323 = vmul.f32 %v1321, 1.442695
    %v1324 = vpow.pop %v1323
    %v1325 = vmul.f32 %v1322, 1.442695
    %v1326 = vpow.pop %v1325
    %v1327 = vadd.f32 %v1324, 1.0
    %v1328 = vadd.f32 %v1326, 1.0
    %v1329 = vrcp.pop %v1327
    %v1330 = vmul.f32 1.0, %v1329
    %v1331 = vrcp.pop %v1328
    %v1332 = vmul.f32 1.0, %v1331
    %v1333 = vxor.u32 %v1315, 2147483648
    %v1334 = vxor.u32 %v1316, 2147483648
    %v1335 = vmul.f32 %v1333, 1.442695
    %v1336 = vpow.pop %v1335
    %v1337 = vmul.f32 %v1334, 1.442695
    %v1338 = vpow.pop %v1337
    %v1339 = vadd.f32 %v1336, 1.0
    %v1340 = vadd.f32 %v1338, 1.0
    %v1341 = vrcp.pop %v1339
    %v1342 = vmul.f32 1.0, %v1341
    %v1343 = vrcp.pop %v1340
    %v1344 = vmul.f32 1.0, %v1343
    %v1345 = vtanh.pop %v1317
    %v1346 = vtanh.pop %v1318
    %v1347 = vxor.u32 %v1319, 2147483648
    %v1348 = vxor.u32 %v1320, 2147483648
    %v1349 = vmul.f32 %v1347, 1.442695
    %v1350 = vpow.pop %v1349
    %v1351 = vmul.f32 %v1348, 1.442695
    %v1352 = vpow.pop %v1351
    %v1353 = vadd.f32 %v1350, 1.0
    %v1354 = vadd.f32 %v1352, 1.0
    %v1355 = vrcp.pop %v1353
    %v1356 = vmul.f32 1.0, %v1355
    %v1357 = vrcp.pop %v1354
    %v1358 = vmul.f32 1.0, %v1357
    %v1359 = vmul.f32 %v1342, 0.0
    %v1360 = vmul.f32 %v1344, 0.0
    %v1361 = vmul.f32 %v1330, %v1345
    %v1362 = vmul.f32 %v1332, %v1346
    %v1363 = vadd.f32 %v1359, %v1361
    %v1364 = vadd.f32 %v1360, %v1362
    %v1365 = vtanh.pop %v1363
    %v1366 = vtanh.pop %v1364
    %v1367 = vmul.f32 %v1356, %v1365
    %v1368 = vmul.f32 %v1358, %v1366
    %v1369 = vld [vmem:[#allocation2 + $0x40] sm:$0xff]
    %v1370 = vld [vmem:[#allocation2 + $0x48] sm:$0xff]
    %v1371 = vld [vmem:[#allocation2 + $0x50] sm:$0xff]
    %v1372 = vld [vmem:[#allocation2 + $0x58] sm:$0xff]
    %v1373 = vld [vmem:[#allocation2 + $0x60] sm:$0xff]
    %v1374 = vld [vmem:[#allocation2 + $0x68] sm:$0xff]
    %v1375 = vld [vmem:[#allocation2 + $0x70] sm:$0xff]
    %v1376 = vld [vmem:[#allocation2 + $0x78] sm:$0xff]
    %1377 = vmatprep.subr.mxu0 %v894
    %1378 = vmatpush1.msra.mxu0 %v893
    %1379 = vmatprep.subr.mxu0 %v886
    %1380 = vmatpush1.msra.mxu0 %v885
    %1381 = vmatprep.subr.mxu0 %v878
    %1382 = vmatpush1.msra.mxu0 %v877
    %1383 = vmatprep.subr.mxu0 %v870
    %1384 = vmatpush1.msra.mxu0 %v869
    %1385 = vmatprep.subr.mxu0 %v862
    %1386 = vmatpush1.msra.mxu0 %v861
    %1387 = vmatprep.subr.mxu0 %v854
    %1388 = vmatpush1.msra.mxu0 %v853
    %1389 = vmatprep.subr.mxu0 %v846
    %1390 = vmatpush1.msra.mxu0 %v845
    %1391 = vmatprep.subr.mxu0 %v838
    %1392 = vmatpush1.msra.mxu0 %v837
    %1393 = vmatprep.subr.mxu0 %v830
    %1394 = vmatpush1.msra.mxu0 %v829
    %1395 = vmatprep.subr.mxu0 %v822
    %1396 = vmatpush1.msra.mxu0 %v821
    %1397 = vmatprep.subr.mxu0 %v814
    %1398 = vmatpush1.msra.mxu0 %v813
    %1399 = vmatprep.subr.mxu0 %v806
    %1400 = vmatpush1.msra.mxu0 %v805
    %1401 = vmatprep.subr.mxu0 %v798
    %1402 = vmatpush1.msra.mxu0 %v797
    %1403 = vmatprep.subr.mxu0 %v790
    %1404 = vmatpush1.msra.mxu0 %v789
    %1405 = vmatprep.subr.mxu0 %v782
    %1406 = vmatpush1.msra.mxu0 %v781
    %1407 = vmatprep.subr.mxu0 %v774
    %1408 = vmatpush1.msra.mxu0 %v773
    %1409 = vmatprep.subr.mxu0 %v1022
    %1410 = vmatpush2.msra.mxu0 %v1021
    %1411 = vmatprep.subr.mxu0 %v1014
    %1412 = vmatpush2.msra.mxu0 %v1013
    %1413 = vmatprep.subr.mxu0 %v1006
    %1414 = vmatpush2.msra.mxu0 %v1005
    %1415 = vmatprep.subr.mxu0 %v998
    %1416 = vmatpush2.msra.mxu0 %v997
    %1417 = vmatprep.subr.mxu0 %v990
    %1418 = vmatpush2.msra.mxu0 %v989
    %1419 = vmatprep.subr.mxu0 %v982
    %1420 = vmatpush2.msra.mxu0 %v981
    %1421 = vmatprep.subr.mxu0 %v974
    %1422 = vmatpush2.msra.mxu0 %v973
    %1423 = vmatprep.subr.mxu0 %v966
    %1424 = vmatpush2.msra.mxu0 %v965
    %1425 = vmatprep.subr.mxu0 %v958
    %1426 = vmatpush2.msra.mxu0 %v957
    %1427 = vmatprep.subr.mxu0 %v950
    %1428 = vmatpush2.msra.mxu0 %v949
    %1429 = vmatprep.subr.mxu0 %v942
    %1430 = vmatpush2.msra.mxu0 %v941
    %1431 = vmatprep.subr.mxu0 %v934
    %1432 = vmatpush2.msra.mxu0 %v933
    %1433 = vmatprep.subr.mxu0 %v926
    %1434 = vmatpush2.msra.mxu0 %v925
    %1435 = vmatprep.subr.mxu0 %v918
    %1436 = vmatpush2.msra.mxu0 %v917
    %1437 = vmatprep.subr.mxu0 %v910
    %1438 = vmatpush2.msra.mxu0 %v909
    %1439 = vmatprep.subr.mxu0 %v902
    %1440 = vmatpush2.msra.mxu0 %v901
    %1441 = vmatprep.mubr.f32.mxu0 %v1368
    %1442 = vmatmul.mubr.f32.gmra.mxu0 %v1367
    %v1443 = vpop.f32.mrf.mxu0
    %v1444 = vadd.f32 0.0, %v1443
    %v1445 = vpop.f32.mrf.mxu0
    %v1446 = vadd.f32 0.0, %v1445
    %1447 = vdwg.mxu0
    %1448 = vmatprep.subr.mxu0 %v896
    %1449 = vmatpush1.msra.mxu0 %v895
    %1450 = vmatprep.subr.mxu0 %v888
    %1451 = vmatpush1.msra.mxu0 %v887
    %1452 = vmatprep.subr.mxu0 %v880
    %1453 = vmatpush1.msra.mxu0 %v879
    %1454 = vmatprep.subr.mxu0 %v872
    %1455 = vmatpush1.msra.mxu0 %v871
    %1456 = vmatprep.subr.mxu0 %v864
    %1457 = vmatpush1.msra.mxu0 %v863
    %1458 = vmatprep.subr.mxu0 %v856
    %1459 = vmatpush1.msra.mxu0 %v855
    %1460 = vmatprep.subr.mxu0 %v848
    %1461 = vmatpush1.msra.mxu0 %v847
    %1462 = vmatprep.subr.mxu0 %v840
    %1463 = vmatpush1.msra.mxu0 %v839
    %1464 = vmatprep.subr.mxu0 %v832
    %1465 = vmatpush1.msra.mxu0 %v831
    %1466 = vmatprep.subr.mxu0 %v824
    %1467 = vmatpush1.msra.mxu0 %v823
    %1468 = vmatprep.subr.mxu0 %v816
    %1469 = vmatpush1.msra.mxu0 %v815
    %1470 = vmatprep.subr.mxu0 %v808
    %1471 = vmatpush1.msra.mxu0 %v807
    %1472 = vmatprep.subr.mxu0 %v800
    %1473 = vmatpush1.msra.mxu0 %v799
    %1474 = vmatprep.subr.mxu0 %v792
    %1475 = vmatpush1.msra.mxu0 %v791
    %1476 = vmatprep.subr.mxu0 %v784
    %1477 = vmatpush1.msra.mxu0 %v783
    %1478 = vmatprep.subr.mxu0 %v776
    %1479 = vmatpush1.msra.mxu0 %v775
    %1480 = vmatprep.subr.mxu0 %v1024
    %1481 = vmatpush2.msra.mxu0 %v1023
    %1482 = vmatprep.subr.mxu0 %v1016
    %1483 = vmatpush2.msra.mxu0 %v1015
    %1484 = vmatprep.subr.mxu0 %v1008
    %1485 = vmatpush2.msra.mxu0 %v1007
    %1486 = vmatprep.subr.mxu0 %v1000
    %1487 = vmatpush2.msra.mxu0 %v999
    %1488 = vmatprep.subr.mxu0 %v992
    %1489 = vmatpush2.msra.mxu0 %v991
    %1490 = vmatprep.subr.mxu0 %v984
    %1491 = vmatpush2.msra.mxu0 %v983
    %1492 = vmatprep.subr.mxu0 %v976
    %1493 = vmatpush2.msra.mxu0 %v975
    %1494 = vmatprep.subr.mxu0 %v968
    %1495 = vmatpush2.msra.mxu0 %v967
    %1496 = vmatprep.subr.mxu0 %v960
    %1497 = vmatpush2.msra.mxu0 %v959
    %1498 = vmatprep.subr.mxu0 %v952
    %1499 = vmatpush2.msra.mxu0 %v951
    %1500 = vmatprep.subr.mxu0 %v944
    %1501 = vmatpush2.msra.mxu0 %v943
    %1502 = vmatprep.subr.mxu0 %v936
    %1503 = vmatpush2.msra.mxu0 %v935
    %1504 = vmatprep.subr.mxu0 %v928
    %1505 = vmatpush2.msra.mxu0 %v927
    %1506 = vmatprep.subr.mxu0 %v920
    %1507 = vmatpush2.msra.mxu0 %v919
    %1508 = vmatprep.subr.mxu0 %v912
    %1509 = vmatpush2.msra.mxu0 %v911
    %1510 = vmatprep.subr.mxu0 %v904
    %1511 = vmatpush2.msra.mxu0 %v903
    %1512 = vmatprep.mubr.f32.mxu0 %v1368
    %1513 = vmatmul.mubr.f32.gmra.mxu0 %v1367
    %v1514 = vpop.f32.mrf.mxu0
    %v1515 = vadd.f32 0.0, %v1514
    %v1516 = vpop.f32.mrf.mxu0
    %v1517 = vadd.f32 0.0, %v1516
    %1518 = vdwg.mxu0
    %1519 = vmatprep.subr.mxu0 %v898
    %1520 = vmatpush1.msra.mxu0 %v897
    %1521 = vmatprep.subr.mxu0 %v890
    %1522 = vmatpush1.msra.mxu0 %v889
    %1523 = vmatprep.subr.mxu0 %v882
    %1524 = vmatpush1.msra.mxu0 %v881
    %1525 = vmatprep.subr.mxu0 %v874
    %1526 = vmatpush1.msra.mxu0 %v873
    %1527 = vmatprep.subr.mxu0 %v866
    %1528 = vmatpush1.msra.mxu0 %v865
    %1529 = vmatprep.subr.mxu0 %v858
    %1530 = vmatpush1.msra.mxu0 %v857
    %1531 = vmatprep.subr.mxu0 %v850
    %1532 = vmatpush1.msra.mxu0 %v849
    %1533 = vmatprep.subr.mxu0 %v842
    %1534 = vmatpush1.msra.mxu0 %v841
    %1535 = vmatprep.subr.mxu0 %v834
    %1536 = vmatpush1.msra.mxu0 %v833
    %1537 = vmatprep.subr.mxu0 %v826
    %1538 = vmatpush1.msra.mxu0 %v825
    %1539 = vmatprep.subr.mxu0 %v818
    %1540 = vmatpush1.msra.mxu0 %v817
    %1541 = vmatprep.subr.mxu0 %v810
    %1542 = vmatpush1.msra.mxu0 %v809
    %1543 = vmatprep.subr.mxu0 %v802
    %1544 = vmatpush1.msra.mxu0 %v801
    %1545 = vmatprep.subr.mxu0 %v794
    %1546 = vmatpush1.msra.mxu0 %v793
    %1547 = vmatprep.subr.mxu0 %v786
    %1548 = vmatpush1.msra.mxu0 %v785
    %1549 = vmatprep.subr.mxu0 %v778
    %1550 = vmatpush1.msra.mxu0 %v777
    %1551 = vmatprep.subr.mxu0 %v1026
    %1552 = vmatpush2.msra.mxu0 %v1025
    %1553 = vmatprep.subr.mxu0 %v1018
    %1554 = vmatpush2.msra.mxu0 %v1017
    %1555 = vmatprep.subr.mxu0 %v1010
    %1556 = vmatpush2.msra.mxu0 %v1009
    %1557 = vmatprep.subr.mxu0 %v1002
    %1558 = vmatpush2.msra.mxu0 %v1001
    %1559 = vmatprep.subr.mxu0 %v994
    %1560 = vmatpush2.msra.mxu0 %v993
    %1561 = vmatprep.subr.mxu0 %v986
    %1562 = vmatpush2.msra.mxu0 %v985
    %1563 = vmatprep.subr.mxu0 %v978
    %1564 = vmatpush2.msra.mxu0 %v977
    %1565 = vmatprep.subr.mxu0 %v970
    %1566 = vmatpush2.msra.mxu0 %v969
    %1567 = vmatprep.subr.mxu0 %v962
    %1568 = vmatpush2.msra.mxu0 %v961
    %1569 = vmatprep.subr.mxu0 %v954
    %1570 = vmatpush2.msra.mxu0 %v953
    %1571 = vmatprep.subr.mxu0 %v946
    %1572 = vmatpush2.msra.mxu0 %v945
    %1573 = vmatprep.subr.mxu0 %v938
    %1574 = vmatpush2.msra.mxu0 %v937
    %1575 = vmatprep.subr.mxu0 %v930
    %1576 = vmatpush2.msra.mxu0 %v929
    %1577 = vmatprep.subr.mxu0 %v922
    %1578 = vmatpush2.msra.mxu0 %v921
    %1579 = vmatprep.subr.mxu0 %v914
    %1580 = vmatpush2.msra.mxu0 %v913
    %1581 = vmatprep.subr.mxu0 %v906
    %1582 = vmatpush2.msra.mxu0 %v905
    %1583 = vmatprep.mubr.f32.mxu0 %v1368
    %1584 = vmatmul.mubr.f32.gmra.mxu0 %v1367
    %v1585 = vpop.f32.mrf.mxu0
    %v1586 = vadd.f32 0.0, %v1585
    %v1587 = vpop.f32.mrf.mxu0
    %v1588 = vadd.f32 0.0, %v1587
    %1589 = vdwg.mxu0
    %1590 = vmatprep.subr.mxu0 %v900
    %1591 = vmatpush1.msra.mxu0 %v899
    %1592 = vmatprep.subr.mxu0 %v892
    %1593 = vmatpush1.msra.mxu0 %v891
    %1594 = vmatprep.subr.mxu0 %v884
    %1595 = vmatpush1.msra.mxu0 %v883
    %1596 = vmatprep.subr.mxu0 %v876
    %1597 = vmatpush1.msra.mxu0 %v875
    %1598 = vmatprep.subr.mxu0 %v868
    %1599 = vmatpush1.msra.mxu0 %v867
    %1600 = vmatprep.subr.mxu0 %v860
    %1601 = vmatpush1.msra.mxu0 %v859
    %1602 = vmatprep.subr.mxu0 %v852
    %1603 = vmatpush1.msra.mxu0 %v851
    %1604 = vmatprep.subr.mxu0 %v844
    %1605 = vmatpush1.msra.mxu0 %v843
    %1606 = vmatprep.subr.mxu0 %v836
    %1607 = vmatpush1.msra.mxu0 %v835
    %1608 = vmatprep.subr.mxu0 %v828
    %1609 = vmatpush1.msra.mxu0 %v827
    %1610 = vmatprep.subr.mxu0 %v820
    %1611 = vmatpush1.msra.mxu0 %v819
    %1612 = vmatprep.subr.mxu0 %v812
    %1613 = vmatpush1.msra.mxu0 %v811
    %1614 = vmatprep.subr.mxu0 %v804
    %1615 = vmatpush1.msra.mxu0 %v803
    %1616 = vmatprep.subr.mxu0 %v796
    %1617 = vmatpush1.msra.mxu0 %v795
    %1618 = vmatprep.subr.mxu0 %v788
    %1619 = vmatpush1.msra.mxu0 %v787
    %1620 = vmatprep.subr.mxu0 %v780
    %1621 = vmatpush1.msra.mxu0 %v779
    %1622 = vmatprep.subr.mxu0 %v1028
    %1623 = vmatpush2.msra.mxu0 %v1027
    %1624 = vmatprep.subr.mxu0 %v1020
    %1625 = vmatpush2.msra.mxu0 %v1019
    %1626 = vmatprep.subr.mxu0 %v1012
    %1627 = vmatpush2.msra.mxu0 %v1011
    %1628 = vmatprep.subr.mxu0 %v1004
    %1629 = vmatpush2.msra.mxu0 %v1003
    %1630 = vmatprep.subr.mxu0 %v996
    %1631 = vmatpush2.msra.mxu0 %v995
    %1632 = vmatprep.subr.mxu0 %v988
    %1633 = vmatpush2.msra.mxu0 %v987
    %1634 = vmatprep.subr.mxu0 %v980
    %1635 = vmatpush2.msra.mxu0 %v979
    %1636 = vmatprep.subr.mxu0 %v972
    %1637 = vmatpush2.msra.mxu0 %v971
    %1638 = vmatprep.subr.mxu0 %v964
    %1639 = vmatpush2.msra.mxu0 %v963
    %1640 = vmatprep.subr.mxu0 %v956
    %1641 = vmatpush2.msra.mxu0 %v955
    %1642 = vmatprep.subr.mxu0 %v948
    %1643 = vmatpush2.msra.mxu0 %v947
    %1644 = vmatprep.subr.mxu0 %v940
    %1645 = vmatpush2.msra.mxu0 %v939
    %1646 = vmatprep.subr.mxu0 %v932
    %1647 = vmatpush2.msra.mxu0 %v931
    %1648 = vmatprep.subr.mxu0 %v924
    %1649 = vmatpush2.msra.mxu0 %v923
    %1650 = vmatprep.subr.mxu0 %v916
    %1651 = vmatpush2.msra.mxu0 %v915
    %1652 = vmatprep.subr.mxu0 %v908
    %1653 = vmatpush2.msra.mxu0 %v907
    %1654 = vmatprep.mubr.f32.mxu0 %v1368
    %1655 = vmatmul.mubr.f32.gmra.mxu0 %v1367
    %v1656 = vpop.f32.mrf.mxu0
    %v1657 = vadd.f32 0.0, %v1656
    %v1658 = vpop.f32.mrf.mxu0
    %v1659 = vadd.f32 0.0, %v1658
    %1660 = vdwg.mxu0
    %v1661 = vadd.f32 %v1369, %v1444
    %v1662 = vadd.f32 %v1370, %v1446
    %v1663 = vadd.f32 %v1371, %v1515
    %v1664 = vadd.f32 %v1372, %v1517
    %v1665 = vadd.f32 %v1373, %v1586
    %v1666 = vadd.f32 %v1374, %v1588
    %v1667 = vadd.f32 %v1375, %v1657
    %v1668 = vadd.f32 %v1376, %v1659
    %v1669 = vxor.u32 %v1661, 2147483648
    %v1670 = vxor.u32 %v1662, 2147483648
    %v1671 = vmul.f32 %v1669, 1.442695
    %v1672 = vpow.pop %v1671
    %v1673 = vmul.f32 %v1670, 1.442695
    %v1674 = vpow.pop %v1673
    %v1675 = vadd.f32 %v1672, 1.0
    %v1676 = vadd.f32 %v1674, 1.0
    %v1677 = vrcp.pop %v1675
    %v1678 = vmul.f32 1.0, %v1677
    %v1679 = vrcp.pop %v1676
    %v1680 = vmul.f32 1.0, %v1679
    %v1681 = vxor.u32 %v1663, 2147483648
    %v1682 = vxor.u32 %v1664, 2147483648
    %v1683 = vmul.f32 %v1681, 1.442695
    %v1684 = vpow.pop %v1683
    %v1685 = vmul.f32 %v1682, 1.442695
    %v1686 = vpow.pop %v1685
    %v1687 = vadd.f32 %v1684, 1.0
    %v1688 = vadd.f32 %v1686, 1.0
    %v1689 = vrcp.pop %v1687
    %v1690 = vmul.f32 1.0, %v1689
    %v1691 = vrcp.pop %v1688
    %v1692 = vmul.f32 1.0, %v1691
    %v1693 = vtanh.pop %v1665
    %v1694 = vtanh.pop %v1666
    %v1695 = vxor.u32 %v1667, 2147483648
    %v1696 = vxor.u32 %v1668, 2147483648
    %v1697 = vmul.f32 %v1695, 1.442695
    %v1698 = vpow.pop %v1697
    %v1699 = vmul.f32 %v1696, 1.442695
    %v1700 = vpow.pop %v1699
    %v1701 = vadd.f32 %v1698, 1.0
    %v1702 = vadd.f32 %v1700, 1.0
    %v1703 = vrcp.pop %v1701
    %v1704 = vmul.f32 1.0, %v1703
    %v1705 = vrcp.pop %v1702
    %v1706 = vmul.f32 1.0, %v1705
    %v1707 = vmul.f32 %v1690, %v1363
    %v1708 = vmul.f32 %v1692, %v1364
    %v1709 = vmul.f32 %v1678, %v1693
    %v1710 = vmul.f32 %v1680, %v1694
    %v1711 = vadd.f32 %v1707, %v1709
    %v1712 = vadd.f32 %v1708, %v1710
    %v1713 = vtanh.pop %v1711
    %v1714 = vtanh.pop %v1712
    %v1715 = vmul.f32 %v1704, %v1713
    %v1716 = vmul.f32 %v1706, %v1714
    %v1717 = vld [vmem:[#allocation2 + $0x80] sm:$0xff]
    %v1718 = vld [vmem:[#allocation2 + $0x88] sm:$0xff]
    %v1719 = vld [vmem:[#allocation2 + $0x90] sm:$0xff]
    %v1720 = vld [vmem:[#allocation2 + $0x98] sm:$0xff]
    %v1721 = vld [vmem:[#allocation2 + $0xa0] sm:$0xff]
    %v1722 = vld [vmem:[#allocation2 + $0xa8] sm:$0xff]
    %v1723 = vld [vmem:[#allocation2 + $0xb0] sm:$0xff]
    %v1724 = vld [vmem:[#allocation2 + $0xb8] sm:$0xff]
    %1725 = vmatprep.subr.mxu0 %v894
    %1726 = vmatpush1.msra.mxu0 %v893
    %1727 = vmatprep.subr.mxu0 %v886
    %1728 = vmatpush1.msra.mxu0 %v885
    %1729 = vmatprep.subr.mxu0 %v878
    %1730 = vmatpush1.msra.mxu0 %v877
    %1731 = vmatprep.subr.mxu0 %v870
    %1732 = vmatpush1.msra.mxu0 %v869
    %1733 = vmatprep.subr.mxu0 %v862
    %1734 = vmatpush1.msra.mxu0 %v861
    %1735 = vmatprep.subr.mxu0 %v854
    %1736 = vmatpush1.msra.mxu0 %v853
    %1737 = vmatprep.subr.mxu0 %v846
    %1738 = vmatpush1.msra.mxu0 %v845
    %1739 = vmatprep.subr.mxu0 %v838
    %1740 = vmatpush1.msra.mxu0 %v837
    %1741 = vmatprep.subr.mxu0 %v830
    %1742 = vmatpush1.msra.mxu0 %v829
    %1743 = vmatprep.subr.mxu0 %v822
    %1744 = vmatpush1.msra.mxu0 %v821
    %1745 = vmatprep.subr.mxu0 %v814
    %1746 = vmatpush1.msra.mxu0 %v813
    %1747 = vmatprep.subr.mxu0 %v806
    %1748 = vmatpush1.msra.mxu0 %v805
    %1749 = vmatprep.subr.mxu0 %v798
    %1750 = vmatpush1.msra.mxu0 %v797
    %1751 = vmatprep.subr.mxu0 %v790
    %1752 = vmatpush1.msra.mxu0 %v789
    %1753 = vmatprep.subr.mxu0 %v782
    %1754 = vmatpush1.msra.mxu0 %v781
    %1755 = vmatprep.subr.mxu0 %v774
    %1756 = vmatpush1.msra.mxu0 %v773
    %1757 = vmatprep.subr.mxu0 %v1022
    %1758 = vmatpush2.msra.mxu0 %v1021
    %1759 = vmatprep.subr.mxu0 %v1014
    %1760 = vmatpush2.msra.mxu0 %v1013
    %1761 = vmatprep.subr.mxu0 %v1006
    %1762 = vmatpush2.msra.mxu0 %v1005
    %1763 = vmatprep.subr.mxu0 %v998
    %1764 = vmatpush2.msra.mxu0 %v997
    %1765 = vmatprep.subr.mxu0 %v990
    %1766 = vmatpush2.msra.mxu0 %v989
    %1767 = vmatprep.subr.mxu0 %v982
    %1768 = vmatpush2.msra.mxu0 %v981
    %1769 = vmatprep.subr.mxu0 %v974
    %1770 = vmatpush2.msra.mxu0 %v973
    %1771 = vmatprep.subr.mxu0 %v966
    %1772 = vmatpush2.msra.mxu0 %v965
    %1773 = vmatprep.subr.mxu0 %v958
    %1774 = vmatpush2.msra.mxu0 %v957
    %1775 = vmatprep.subr.mxu0 %v950
    %1776 = vmatpush2.msra.mxu0 %v949
    %1777 = vmatprep.subr.mxu0 %v942
    %1778 = vmatpush2.msra.mxu0 %v941
    %1779 = vmatprep.subr.mxu0 %v934
    %1780 = vmatpush2.msra.mxu0 %v933
    %1781 = vmatprep.subr.mxu0 %v926
    %1782 = vmatpush2.msra.mxu0 %v925
    %1783 = vmatprep.subr.mxu0 %v918
    %1784 = vmatpush2.msra.mxu0 %v917
    %1785 = vmatprep.subr.mxu0 %v910
    %1786 = vmatpush2.msra.mxu0 %v909
    %1787 = vmatprep.subr.mxu0 %v902
    %1788 = vmatpush2.msra.mxu0 %v901
    %1789 = vmatprep.mubr.f32.mxu0 %v1716
    %1790 = vmatmul.mubr.f32.gmra.mxu0 %v1715
    %v1791 = vpop.f32.mrf.mxu0
    %v1792 = vadd.f32 0.0, %v1791
    %v1793 = vpop.f32.mrf.mxu0
    %v1794 = vadd.f32 0.0, %v1793
    %1795 = vdwg.mxu0
    %1796 = vmatprep.subr.mxu0 %v896
    %1797 = vmatpush1.msra.mxu0 %v895
    %1798 = vmatprep.subr.mxu0 %v888
    %1799 = vmatpush1.msra.mxu0 %v887
    %1800 = vmatprep.subr.mxu0 %v880
    %1801 = vmatpush1.msra.mxu0 %v879
    %1802 = vmatprep.subr.mxu0 %v872
    %1803 = vmatpush1.msra.mxu0 %v871
    %1804 = vmatprep.subr.mxu0 %v864
    %1805 = vmatpush1.msra.mxu0 %v863
    %1806 = vmatprep.subr.mxu0 %v856
    %1807 = vmatpush1.msra.mxu0 %v855
    %1808 = vmatprep.subr.mxu0 %v848
    %1809 = vmatpush1.msra.mxu0 %v847
    %1810 = vmatprep.subr.mxu0 %v840
    %1811 = vmatpush1.msra.mxu0 %v839
    %1812 = vmatprep.subr.mxu0 %v832
    %1813 = vmatpush1.msra.mxu0 %v831
    %1814 = vmatprep.subr.mxu0 %v824
    %1815 = vmatpush1.msra.mxu0 %v823
    %1816 = vmatprep.subr.mxu0 %v816
    %1817 = vmatpush1.msra.mxu0 %v815
    %1818 = vmatprep.subr.mxu0 %v808
    %1819 = vmatpush1.msra.mxu0 %v807
    %1820 = vmatprep.subr.mxu0 %v800
    %1821 = vmatpush1.msra.mxu0 %v799
    %1822 = vmatprep.subr.mxu0 %v792
    %1823 = vmatpush1.msra.mxu0 %v791
    %1824 = vmatprep.subr.mxu0 %v784
    %1825 = vmatpush1.msra.mxu0 %v783
    %1826 = vmatprep.subr.mxu0 %v776
    %1827 = vmatpush1.msra.mxu0 %v775
    %1828 = vmatprep.subr.mxu0 %v1024
    %1829 = vmatpush2.msra.mxu0 %v1023
    %1830 = vmatprep.subr.mxu0 %v1016
    %1831 = vmatpush2.msra.mxu0 %v1015
    %1832 = vmatprep.subr.mxu0 %v1008
    %1833 = vmatpush2.msra.mxu0 %v1007
    %1834 = vmatprep.subr.mxu0 %v1000
    %1835 = vmatpush2.msra.mxu0 %v999
    %1836 = vmatprep.subr.mxu0 %v992
    %1837 = vmatpush2.msra.mxu0 %v991
    %1838 = vmatprep.subr.mxu0 %v984
    %1839 = vmatpush2.msra.mxu0 %v983
    %1840 = vmatprep.subr.mxu0 %v976
    %1841 = vmatpush2.msra.mxu0 %v975
    %1842 = vmatprep.subr.mxu0 %v968
    %1843 = vmatpush2.msra.mxu0 %v967
    %1844 = vmatprep.subr.mxu0 %v960
    %1845 = vmatpush2.msra.mxu0 %v959
    %1846 = vmatprep.subr.mxu0 %v952
    %1847 = vmatpush2.msra.mxu0 %v951
    %1848 = vmatprep.subr.mxu0 %v944
    %1849 = vmatpush2.msra.mxu0 %v943
    %1850 = vmatprep.subr.mxu0 %v936
    %1851 = vmatpush2.msra.mxu0 %v935
    %1852 = vmatprep.subr.mxu0 %v928
    %1853 = vmatpush2.msra.mxu0 %v927
    %1854 = vmatprep.subr.mxu0 %v920
    %1855 = vmatpush2.msra.mxu0 %v919
    %1856 = vmatprep.subr.mxu0 %v912
    %1857 = vmatpush2.msra.mxu0 %v911
    %1858 = vmatprep.subr.mxu0 %v904
    %1859 = vmatpush2.msra.mxu0 %v903
    %1860 = vmatprep.mubr.f32.mxu0 %v1716
    %1861 = vmatmul.mubr.f32.gmra.mxu0 %v1715
    %v1862 = vpop.f32.mrf.mxu0
    %v1863 = vadd.f32 0.0, %v1862
    %v1864 = vpop.f32.mrf.mxu0
    %v1865 = vadd.f32 0.0, %v1864
    %1866 = vdwg.mxu0
    %1867 = vmatprep.subr.mxu0 %v898
    %1868 = vmatpush1.msra.mxu0 %v897
    %1869 = vmatprep.subr.mxu0 %v890
    %1870 = vmatpush1.msra.mxu0 %v889
    %1871 = vmatprep.subr.mxu0 %v882
    %1872 = vmatpush1.msra.mxu0 %v881
    %1873 = vmatprep.subr.mxu0 %v874
    %1874 = vmatpush1.msra.mxu0 %v873
    %1875 = vmatprep.subr.mxu0 %v866
    %1876 = vmatpush1.msra.mxu0 %v865
    %1877 = vmatprep.subr.mxu0 %v858
    %1878 = vmatpush1.msra.mxu0 %v857
    %1879 = vmatprep.subr.mxu0 %v850
    %1880 = vmatpush1.msra.mxu0 %v849
    %1881 = vmatprep.subr.mxu0 %v842
    %1882 = vmatpush1.msra.mxu0 %v841
    %1883 = vmatprep.subr.mxu0 %v834
    %1884 = vmatpush1.msra.mxu0 %v833
    %1885 = vmatprep.subr.mxu0 %v826
    %1886 = vmatpush1.msra.mxu0 %v825
    %1887 = vmatprep.subr.mxu0 %v818
    %1888 = vmatpush1.msra.mxu0 %v817
    %1889 = vmatprep.subr.mxu0 %v810
    %1890 = vmatpush1.msra.mxu0 %v809
    %1891 = vmatprep.subr.mxu0 %v802
    %1892 = vmatpush1.msra.mxu0 %v801
    %1893 = vmatprep.subr.mxu0 %v794
    %1894 = vmatpush1.msra.mxu0 %v793
    %1895 = vmatprep.subr.mxu0 %v786
    %1896 = vmatpush1.msra.mxu0 %v785
    %1897 = vmatprep.subr.mxu0 %v778
    %1898 = vmatpush1.msra.mxu0 %v777
    %1899 = vmatprep.subr.mxu0 %v1026
    %1900 = vmatpush2.msra.mxu0 %v1025
    %1901 = vmatprep.subr.mxu0 %v1018
    %1902 = vmatpush2.msra.mxu0 %v1017
    %1903 = vmatprep.subr.mxu0 %v1010
    %1904 = vmatpush2.msra.mxu0 %v1009
    %1905 = vmatprep.subr.mxu0 %v1002
    %1906 = vmatpush2.msra.mxu0 %v1001
    %1907 = vmatprep.subr.mxu0 %v994
    %1908 = vmatpush2.msra.mxu0 %v993
    %1909 = vmatprep.subr.mxu0 %v986
    %1910 = vmatpush2.msra.mxu0 %v985
    %1911 = vmatprep.subr.mxu0 %v978
    %1912 = vmatpush2.msra.mxu0 %v977
    %1913 = vmatprep.subr.mxu0 %v970
    %1914 = vmatpush2.msra.mxu0 %v969
    %1915 = vmatprep.subr.mxu0 %v962
    %1916 = vmatpush2.msra.mxu0 %v961
    %1917 = vmatprep.subr.mxu0 %v954
    %1918 = vmatpush2.msra.mxu0 %v953
    %1919 = vmatprep.subr.mxu0 %v946
    %1920 = vmatpush2.msra.mxu0 %v945
    %1921 = vmatprep.subr.mxu0 %v938
    %1922 = vmatpush2.msra.mxu0 %v937
    %1923 = vmatprep.subr.mxu0 %v930
    %1924 = vmatpush2.msra.mxu0 %v929
    %1925 = vmatprep.subr.mxu0 %v922
    %1926 = vmatpush2.msra.mxu0 %v921
    %1927 = vmatprep.subr.mxu0 %v914
    %1928 = vmatpush2.msra.mxu0 %v913
    %1929 = vmatprep.subr.mxu0 %v906
    %1930 = vmatpush2.msra.mxu0 %v905
    %1931 = vmatprep.mubr.f32.mxu0 %v1716
    %1932 = vmatmul.mubr.f32.gmra.mxu0 %v1715
    %v1933 = vpop.f32.mrf.mxu0
    %v1934 = vadd.f32 0.0, %v1933
    %v1935 = vpop.f32.mrf.mxu0
    %v1936 = vadd.f32 0.0, %v1935
    %1937 = vdwg.mxu0
    %1938 = vmatprep.subr.mxu0 %v900
    %1939 = vmatpush1.msra.mxu0 %v899
    %1940 = vmatprep.subr.mxu0 %v892
    %1941 = vmatpush1.msra.mxu0 %v891
    %1942 = vmatprep.subr.mxu0 %v884
    %1943 = vmatpush1.msra.mxu0 %v883
    %1944 = vmatprep.subr.mxu0 %v876
    %1945 = vmatpush1.msra.mxu0 %v875
    %1946 = vmatprep.subr.mxu0 %v868
    %1947 = vmatpush1.msra.mxu0 %v867
    %1948 = vmatprep.subr.mxu0 %v860
    %1949 = vmatpush1.msra.mxu0 %v859
    %1950 = vmatprep.subr.mxu0 %v852
    %1951 = vmatpush1.msra.mxu0 %v851
    %1952 = vmatprep.subr.mxu0 %v844
    %1953 = vmatpush1.msra.mxu0 %v843
    %1954 = vmatprep.subr.mxu0 %v836
    %1955 = vmatpush1.msra.mxu0 %v835
    %1956 = vmatprep.subr.mxu0 %v828
    %1957 = vmatpush1.msra.mxu0 %v827
    %1958 = vmatprep.subr.mxu0 %v820
    %1959 = vmatpush1.msra.mxu0 %v819
    %1960 = vmatprep.subr.mxu0 %v812
    %1961 = vmatpush1.msra.mxu0 %v811
    %1962 = vmatprep.subr.mxu0 %v804
    %1963 = vmatpush1.msra.mxu0 %v803
    %1964 = vmatprep.subr.mxu0 %v796
    %1965 = vmatpush1.msra.mxu0 %v795
    %1966 = vmatprep.subr.mxu0 %v788
    %1967 = vmatpush1.msra.mxu0 %v787
    %1968 = vmatprep.subr.mxu0 %v780
    %1969 = vmatpush1.msra.mxu0 %v779
    %1970 = vmatprep.subr.mxu0 %v1028
    %1971 = vmatpush2.msra.mxu0 %v1027
    %1972 = vmatprep.subr.mxu0 %v1020
    %1973 = vmatpush2.msra.mxu0 %v1019
    %1974 = vmatprep.subr.mxu0 %v1012
    %1975 = vmatpush2.msra.mxu0 %v1011
    %1976 = vmatprep.subr.mxu0 %v1004
    %1977 = vmatpush2.msra.mxu0 %v1003
    %1978 = vmatprep.subr.mxu0 %v996
    %1979 = vmatpush2.msra.mxu0 %v995
    %1980 = vmatprep.subr.mxu0 %v988
    %1981 = vmatpush2.msra.mxu0 %v987
    %1982 = vmatprep.subr.mxu0 %v980
    %1983 = vmatpush2.msra.mxu0 %v979
    %1984 = vmatprep.subr.mxu0 %v972
    %1985 = vmatpush2.msra.mxu0 %v971
    %1986 = vmatprep.subr.mxu0 %v964
    %1987 = vmatpush2.msra.mxu0 %v963
    %1988 = vmatprep.subr.mxu0 %v956
    %1989 = vmatpush2.msra.mxu0 %v955
    %1990 = vmatprep.subr.mxu0 %v948
    %1991 = vmatpush2.msra.mxu0 %v947
    %1992 = vmatprep.subr.mxu0 %v940
    %1993 = vmatpush2.msra.mxu0 %v939
    %1994 = vmatprep.subr.mxu0 %v932
    %1995 = vmatpush2.msra.mxu0 %v931
    %1996 = vmatprep.subr.mxu0 %v924
    %1997 = vmatpush2.msra.mxu0 %v923
    %1998 = vmatprep.subr.mxu0 %v916
    %1999 = vmatpush2.msra.mxu0 %v915
    %2000 = vmatprep.subr.mxu0 %v908
    %2001 = vmatpush2.msra.mxu0 %v907
    %2002 = vmatprep.mubr.f32.mxu0 %v1716
    %2003 = vmatmul.mubr.f32.gmra.mxu0 %v1715
    %v2004 = vpop.f32.mrf.mxu0
    %v2005 = vadd.f32 0.0, %v2004
    %v2006 = vpop.f32.mrf.mxu0
    %v2007 = vadd.f32 0.0, %v2006
    %2008 = vdwg.mxu0
    %v2009 = vadd.f32 %v1717, %v1792
    %v2010 = vadd.f32 %v1718, %v1794
    %v2011 = vadd.f32 %v1719, %v1863
    %v2012 = vadd.f32 %v1720, %v1865
    %v2013 = vadd.f32 %v1721, %v1934
    %v2014 = vadd.f32 %v1722, %v1936
    %v2015 = vadd.f32 %v1723, %v2005
    %v2016 = vadd.f32 %v1724, %v2007
    %v2017 = vxor.u32 %v2009, 2147483648
    %v2018 = vxor.u32 %v2010, 2147483648
    %v2019 = vmul.f32 %v2017, 1.442695
    %v2020 = vpow.pop %v2019
    %v2021 = vmul.f32 %v2018, 1.442695
    %v2022 = vpow.pop %v2021
    %v2023 = vadd.f32 %v2020, 1.0
    %v2024 = vadd.f32 %v2022, 1.0
    %v2025 = vrcp.pop %v2023
    %v2026 = vmul.f32 1.0, %v2025
    %v2027 = vrcp.pop %v2024
    %v2028 = vmul.f32 1.0, %v2027
    %v2029 = vxor.u32 %v2011, 2147483648
    %v2030 = vxor.u32 %v2012, 2147483648
    %v2031 = vmul.f32 %v2029, 1.442695
    %v2032 = vpow.pop %v2031
    %v2033 = vmul.f32 %v2030, 1.442695
    %v2034 = vpow.pop %v2033
    %v2035 = vadd.f32 %v2032, 1.0
    %v2036 = vadd.f32 %v2034, 1.0
    %v2037 = vrcp.pop %v2035
    %v2038 = vmul.f32 1.0, %v2037
    %v2039 = vrcp.pop %v2036
    %v2040 = vmul.f32 1.0, %v2039
    %v2041 = vtanh.pop %v2013
    %v2042 = vtanh.pop %v2014
    %v2043 = vxor.u32 %v2015, 2147483648
    %v2044 = vxor.u32 %v2016, 2147483648
    %v2045 = vmul.f32 %v2043, 1.442695
    %v2046 = vpow.pop %v2045
    %v2047 = vmul.f32 %v2044, 1.442695
    %v2048 = vpow.pop %v2047
    %v2049 = vadd.f32 %v2046, 1.0
    %v2050 = vadd.f32 %v2048, 1.0
    %v2051 = vrcp.pop %v2049
    %v2052 = vmul.f32 1.0, %v2051
    %v2053 = vrcp.pop %v2050
    %v2054 = vmul.f32 1.0, %v2053
    %v2055 = vmul.f32 %v2038, %v1711
    %v2056 = vmul.f32 %v2040, %v1712
    %v2057 = vmul.f32 %v2026, %v2041
    %v2058 = vmul.f32 %v2028, %v2042
    %v2059 = vadd.f32 %v2055, %v2057
    %v2060 = vadd.f32 %v2056, %v2058
    %v2061 = vtanh.pop %v2059
    %v2062 = vtanh.pop %v2060
    %v2063 = vmul.f32 %v2052, %v2061
    %v2064 = vmul.f32 %v2054, %v2062
    %v2065 = vld [vmem:[#allocation2 + $0xc0] sm:$0xff]
    %v2066 = vld [vmem:[#allocation2 + $0xc8] sm:$0xff]
    %v2067 = vld [vmem:[#allocation2 + $0xd0] sm:$0xff]
    %v2068 = vld [vmem:[#allocation2 + $0xd8] sm:$0xff]
    %v2069 = vld [vmem:[#allocation2 + $0xe0] sm:$0xff]
    %v2070 = vld [vmem:[#allocation2 + $0xe8] sm:$0xff]
    %v2071 = vld [vmem:[#allocation2 + $0xf0] sm:$0xff]
    %v2072 = vld [vmem:[#allocation2 + $0xf8] sm:$0xff]
    %2073 = vmatprep.subr.mxu0 %v894
    %2074 = vmatpush1.msra.mxu0 %v893
    %2075 = vmatprep.subr.mxu0 %v886
    %2076 = vmatpush1.msra.mxu0 %v885
    %2077 = vmatprep.subr.mxu0 %v878
    %2078 = vmatpush1.msra.mxu0 %v877
    %2079 = vmatprep.subr.mxu0 %v870
    %2080 = vmatpush1.msra.mxu0 %v869
    %2081 = vmatprep.subr.mxu0 %v862
    %2082 = vmatpush1.msra.mxu0 %v861
    %2083 = vmatprep.subr.mxu0 %v854
    %2084 = vmatpush1.msra.mxu0 %v853
    %2085 = vmatprep.subr.mxu0 %v846
    %2086 = vmatpush1.msra.mxu0 %v845
    %2087 = vmatprep.subr.mxu0 %v838
    %2088 = vmatpush1.msra.mxu0 %v837
    %2089 = vmatprep.subr.mxu0 %v830
    %2090 = vmatpush1.msra.mxu0 %v829
    %2091 = vmatprep.subr.mxu0 %v822
    %2092 = vmatpush1.msra.mxu0 %v821
    %2093 = vmatprep.subr.mxu0 %v814
    %2094 = vmatpush1.msra.mxu0 %v813
    %2095 = vmatprep.subr.mxu0 %v806
    %2096 = vmatpush1.msra.mxu0 %v805
    %2097 = vmatprep.subr.mxu0 %v798
    %2098 = vmatpush1.msra.mxu0 %v797
    %2099 = vmatprep.subr.mxu0 %v790
    %2100 = vmatpush1.msra.mxu0 %v789
    %2101 = vmatprep.subr.mxu0 %v782
    %2102 = vmatpush1.msra.mxu0 %v781
    %2103 = vmatprep.subr.mxu0 %v774
    %2104 = vmatpush1.msra.mxu0 %v773
    %2105 = vmatprep.subr.mxu0 %v1022
    %2106 = vmatpush2.msra.mxu0 %v1021
    %2107 = vmatprep.subr.mxu0 %v1014
    %2108 = vmatpush2.msra.mxu0 %v1013
    %2109 = vmatprep.subr.mxu0 %v1006
    %2110 = vmatpush2.msra.mxu0 %v1005
    %2111 = vmatprep.subr.mxu0 %v998
    %2112 = vmatpush2.msra.mxu0 %v997
    %2113 = vmatprep.subr.mxu0 %v990
    %2114 = vmatpush2.msra.mxu0 %v989
    %2115 = vmatprep.subr.mxu0 %v982
    %2116 = vmatpush2.msra.mxu0 %v981
    %2117 = vmatprep.subr.mxu0 %v974
    %2118 = vmatpush2.msra.mxu0 %v973
    %2119 = vmatprep.subr.mxu0 %v966
    %2120 = vmatpush2.msra.mxu0 %v965
    %2121 = vmatprep.subr.mxu0 %v958
    %2122 = vmatpush2.msra.mxu0 %v957
    %2123 = vmatprep.subr.mxu0 %v950
    %2124 = vmatpush2.msra.mxu0 %v949
    %2125 = vmatprep.subr.mxu0 %v942
    %2126 = vmatpush2.msra.mxu0 %v941
    %2127 = vmatprep.subr.mxu0 %v934
    %2128 = vmatpush2.msra.mxu0 %v933
    %2129 = vmatprep.subr.mxu0 %v926
    %2130 = vmatpush2.msra.mxu0 %v925
    %2131 = vmatprep.subr.mxu0 %v918
    %2132 = vmatpush2.msra.mxu0 %v917
    %2133 = vmatprep.subr.mxu0 %v910
    %2134 = vmatpush2.msra.mxu0 %v909
    %2135 = vmatprep.subr.mxu0 %v902
    %2136 = vmatpush2.msra.mxu0 %v901
    %2137 = vmatprep.mubr.f32.mxu0 %v2064
    %2138 = vmatmul.mubr.f32.gmra.mxu0 %v2063
    %v2139 = vpop.f32.mrf.mxu0
    %v2140 = vadd.f32 0.0, %v2139
    %v2141 = vpop.f32.mrf.mxu0
    %v2142 = vadd.f32 0.0, %v2141
    %2143 = vdwg.mxu0
    %2144 = vmatprep.subr.mxu0 %v896
    %2145 = vmatpush1.msra.mxu0 %v895
    %2146 = vmatprep.subr.mxu0 %v888
    %2147 = vmatpush1.msra.mxu0 %v887
    %2148 = vmatprep.subr.mxu0 %v880
    %2149 = vmatpush1.msra.mxu0 %v879
    %2150 = vmatprep.subr.mxu0 %v872
    %2151 = vmatpush1.msra.mxu0 %v871
    %2152 = vmatprep.subr.mxu0 %v864
    %2153 = vmatpush1.msra.mxu0 %v863
    %2154 = vmatprep.subr.mxu0 %v856
    %2155 = vmatpush1.msra.mxu0 %v855
    %2156 = vmatprep.subr.mxu0 %v848
    %2157 = vmatpush1.msra.mxu0 %v847
    %2158 = vmatprep.subr.mxu0 %v840
    %2159 = vmatpush1.msra.mxu0 %v839
    %2160 = vmatprep.subr.mxu0 %v832
    %2161 = vmatpush1.msra.mxu0 %v831
    %2162 = vmatprep.subr.mxu0 %v824
    %2163 = vmatpush1.msra.mxu0 %v823
    %2164 = vmatprep.subr.mxu0 %v816
    %2165 = vmatpush1.msra.mxu0 %v815
    %2166 = vmatprep.subr.mxu0 %v808
    %2167 = vmatpush1.msra.mxu0 %v807
    %2168 = vmatprep.subr.mxu0 %v800
    %2169 = vmatpush1.msra.mxu0 %v799
    %2170 = vmatprep.subr.mxu0 %v792
    %2171 = vmatpush1.msra.mxu0 %v791
    %2172 = vmatprep.subr.mxu0 %v784
    %2173 = vmatpush1.msra.mxu0 %v783
    %2174 = vmatprep.subr.mxu0 %v776
    %2175 = vmatpush1.msra.mxu0 %v775
    %2176 = vmatprep.subr.mxu0 %v1024
    %2177 = vmatpush2.msra.mxu0 %v1023
    %2178 = vmatprep.subr.mxu0 %v1016
    %2179 = vmatpush2.msra.mxu0 %v1015
    %2180 = vmatprep.subr.mxu0 %v1008
    %2181 = vmatpush2.msra.mxu0 %v1007
    %2182 = vmatprep.subr.mxu0 %v1000
    %2183 = vmatpush2.msra.mxu0 %v999
    %2184 = vmatprep.subr.mxu0 %v992
    %2185 = vmatpush2.msra.mxu0 %v991
    %2186 = vmatprep.subr.mxu0 %v984
    %2187 = vmatpush2.msra.mxu0 %v983
    %2188 = vmatprep.subr.mxu0 %v976
    %2189 = vmatpush2.msra.mxu0 %v975
    %2190 = vmatprep.subr.mxu0 %v968
    %2191 = vmatpush2.msra.mxu0 %v967
    %2192 = vmatprep.subr.mxu0 %v960
    %2193 = vmatpush2.msra.mxu0 %v959
    %2194 = vmatprep.subr.mxu0 %v952
    %2195 = vmatpush2.msra.mxu0 %v951
    %2196 = vmatprep.subr.mxu0 %v944
    %2197 = vmatpush2.msra.mxu0 %v943
    %2198 = vmatprep.subr.mxu0 %v936
    %2199 = vmatpush2.msra.mxu0 %v935
    %2200 = vmatprep.subr.mxu0 %v928
    %2201 = vmatpush2.msra.mxu0 %v927
    %2202 = vmatprep.subr.mxu0 %v920
    %2203 = vmatpush2.msra.mxu0 %v919
    %2204 = vmatprep.subr.mxu0 %v912
    %2205 = vmatpush2.msra.mxu0 %v911
    %2206 = vmatprep.subr.mxu0 %v904
    %2207 = vmatpush2.msra.mxu0 %v903
    %2208 = vmatprep.mubr.f32.mxu0 %v2064
    %2209 = vmatmul.mubr.f32.gmra.mxu0 %v2063
    %v2210 = vpop.f32.mrf.mxu0
    %v2211 = vadd.f32 0.0, %v2210
    %v2212 = vpop.f32.mrf.mxu0
    %v2213 = vadd.f32 0.0, %v2212
    %2214 = vdwg.mxu0
    %2215 = vmatprep.subr.mxu0 %v898
    %2216 = vmatpush1.msra.mxu0 %v897
    %2217 = vmatprep.subr.mxu0 %v890
    %2218 = vmatpush1.msra.mxu0 %v889
    %2219 = vmatprep.subr.mxu0 %v882
    %2220 = vmatpush1.msra.mxu0 %v881
    %2221 = vmatprep.subr.mxu0 %v874
    %2222 = vmatpush1.msra.mxu0 %v873
    %2223 = vmatprep.subr.mxu0 %v866
    %2224 = vmatpush1.msra.mxu0 %v865
    %2225 = vmatprep.subr.mxu0 %v858
    %2226 = vmatpush1.msra.mxu0 %v857
    %2227 = vmatprep.subr.mxu0 %v850
    %2228 = vmatpush1.msra.mxu0 %v849
    %2229 = vmatprep.subr.mxu0 %v842
    %2230 = vmatpush1.msra.mxu0 %v841
    %2231 = vmatprep.subr.mxu0 %v834
    %2232 = vmatpush1.msra.mxu0 %v833
    %2233 = vmatprep.subr.mxu0 %v826
    %2234 = vmatpush1.msra.mxu0 %v825
    %2235 = vmatprep.subr.mxu0 %v818
    %2236 = vmatpush1.msra.mxu0 %v817
    %2237 = vmatprep.subr.mxu0 %v810
    %2238 = vmatpush1.msra.mxu0 %v809
    %2239 = vmatprep.subr.mxu0 %v802
    %2240 = vmatpush1.msra.mxu0 %v801
    %2241 = vmatprep.subr.mxu0 %v794
    %2242 = vmatpush1.msra.mxu0 %v793
    %2243 = vmatprep.subr.mxu0 %v786
    %2244 = vmatpush1.msra.mxu0 %v785
    %2245 = vmatprep.subr.mxu0 %v778
    %2246 = vmatpush1.msra.mxu0 %v777
    %2247 = vmatprep.subr.mxu0 %v1026
    %2248 = vmatpush2.msra.mxu0 %v1025
    %2249 = vmatprep.subr.mxu0 %v1018
    %2250 = vmatpush2.msra.mxu0 %v1017
    %2251 = vmatprep.subr.mxu0 %v1010
    %2252 = vmatpush2.msra.mxu0 %v1009
    %2253 = vmatprep.subr.mxu0 %v1002
    %2254 = vmatpush2.msra.mxu0 %v1001
    %2255 = vmatprep.subr.mxu0 %v994
    %2256 = vmatpush2.msra.mxu0 %v993
    %2257 = vmatprep.subr.mxu0 %v986
    %2258 = vmatpush2.msra.mxu0 %v985
    %2259 = vmatprep.subr.mxu0 %v978
    %2260 = vmatpush2.msra.mxu0 %v977
    %2261 = vmatprep.subr.mxu0 %v970
    %2262 = vmatpush2.msra.mxu0 %v969
    %2263 = vmatprep.subr.mxu0 %v962
    %2264 = vmatpush2.msra.mxu0 %v961
    %2265 = vmatprep.subr.mxu0 %v954
    %2266 = vmatpush2.msra.mxu0 %v953
    %2267 = vmatprep.subr.mxu0 %v946
    %2268 = vmatpush2.msra.mxu0 %v945
    %2269 = vmatprep.subr.mxu0 %v938
    %2270 = vmatpush2.msra.mxu0 %v937
    %2271 = vmatprep.subr.mxu0 %v930
    %2272 = vmatpush2.msra.mxu0 %v929
    %2273 = vmatprep.subr.mxu0 %v922
    %2274 = vmatpush2.msra.mxu0 %v921
    %2275 = vmatprep.subr.mxu0 %v914
    %2276 = vmatpush2.msra.mxu0 %v913
    %2277 = vmatprep.subr.mxu0 %v906
    %2278 = vmatpush2.msra.mxu0 %v905
    %2279 = vmatprep.mubr.f32.mxu0 %v2064
    %2280 = vmatmul.mubr.f32.gmra.mxu0 %v2063
    %v2281 = vpop.f32.mrf.mxu0
    %v2282 = vadd.f32 0.0, %v2281
    %v2283 = vpop.f32.mrf.mxu0
    %v2284 = vadd.f32 0.0, %v2283
    %2285 = vdwg.mxu0
    %2286 = vmatprep.subr.mxu0 %v900
    %2287 = vmatpush1.msra.mxu0 %v899
    %2288 = vmatprep.subr.mxu0 %v892
    %2289 = vmatpush1.msra.mxu0 %v891
    %2290 = vmatprep.subr.mxu0 %v884
    %2291 = vmatpush1.msra.mxu0 %v883
    %2292 = vmatprep.subr.mxu0 %v876
    %2293 = vmatpush1.msra.mxu0 %v875
    %2294 = vmatprep.subr.mxu0 %v868
    %2295 = vmatpush1.msra.mxu0 %v867
    %2296 = vmatprep.subr.mxu0 %v860
    %2297 = vmatpush1.msra.mxu0 %v859
    %2298 = vmatprep.subr.mxu0 %v852
    %2299 = vmatpush1.msra.mxu0 %v851
    %2300 = vmatprep.subr.mxu0 %v844
    %2301 = vmatpush1.msra.mxu0 %v843
    %2302 = vmatprep.subr.mxu0 %v836
    %2303 = vmatpush1.msra.mxu0 %v835
    %2304 = vmatprep.subr.mxu0 %v828
    %2305 = vmatpush1.msra.mxu0 %v827
    %2306 = vmatprep.subr.mxu0 %v820
    %2307 = vmatpush1.msra.mxu0 %v819
    %2308 = vmatprep.subr.mxu0 %v812
    %2309 = vmatpush1.msra.mxu0 %v811
    %2310 = vmatprep.subr.mxu0 %v804
    %2311 = vmatpush1.msra.mxu0 %v803
    %2312 = vmatprep.subr.mxu0 %v796
    %2313 = vmatpush1.msra.mxu0 %v795
    %2314 = vmatprep.subr.mxu0 %v788
    %2315 = vmatpush1.msra.mxu0 %v787
    %2316 = vmatprep.subr.mxu0 %v780
    %2317 = vmatpush1.msra.mxu0 %v779
    %2318 = vmatprep.subr.mxu0 %v1028
    %2319 = vmatpush2.msra.mxu0 %v1027
    %2320 = vmatprep.subr.mxu0 %v1020
    %2321 = vmatpush2.msra.mxu0 %v1019
    %2322 = vmatprep.subr.mxu0 %v1012
    %2323 = vmatpush2.msra.mxu0 %v1011
    %2324 = vmatprep.subr.mxu0 %v1004
    %2325 = vmatpush2.msra.mxu0 %v1003
    %2326 = vmatprep.subr.mxu0 %v996
    %2327 = vmatpush2.msra.mxu0 %v995
    %2328 = vmatprep.subr.mxu0 %v988
    %2329 = vmatpush2.msra.mxu0 %v987
    %2330 = vmatprep.subr.mxu0 %v980
    %2331 = vmatpush2.msra.mxu0 %v979
    %2332 = vmatprep.subr.mxu0 %v972
    %2333 = vmatpush2.msra.mxu0 %v971
    %2334 = vmatprep.subr.mxu0 %v964
    %2335 = vmatpush2.msra.mxu0 %v963
    %2336 = vmatprep.subr.mxu0 %v956
    %2337 = vmatpush2.msra.mxu0 %v955
    %2338 = vmatprep.subr.mxu0 %v948
    %2339 = vmatpush2.msra.mxu0 %v947
    %2340 = vmatprep.subr.mxu0 %v940
    %2341 = vmatpush2.msra.mxu0 %v939
    %2342 = vmatprep.subr.mxu0 %v932
    %2343 = vmatpush2.msra.mxu0 %v931
    %2344 = vmatprep.subr.mxu0 %v924
    %2345 = vmatpush2.msra.mxu0 %v923
    %2346 = vmatprep.subr.mxu0 %v916
    %2347 = vmatpush2.msra.mxu0 %v915
    %2348 = vmatprep.subr.mxu0 %v908
    %2349 = vmatpush2.msra.mxu0 %v907
    %2350 = vmatprep.mubr.f32.mxu0 %v2064
    %2351 = vmatmul.mubr.f32.gmra.mxu0 %v2063
    %v2352 = vpop.f32.mrf.mxu0
    %v2353 = vadd.f32 0.0, %v2352
    %v2354 = vpop.f32.mrf.mxu0
    %v2355 = vadd.f32 0.0, %v2354
    %2356 = vdwg.mxu0
    %v2357 = vadd.f32 %v2065, %v2140
    %v2358 = vadd.f32 %v2066, %v2142
    %v2359 = vadd.f32 %v2067, %v2211
    %v2360 = vadd.f32 %v2068, %v2213
    %v2361 = vadd.f32 %v2069, %v2282
    %v2362 = vadd.f32 %v2070, %v2284
    %v2363 = vadd.f32 %v2071, %v2353
    %v2364 = vadd.f32 %v2072, %v2355
    %v2365 = vxor.u32 %v2357, 2147483648
    %v2366 = vxor.u32 %v2358, 2147483648
    %v2367 = vmul.f32 %v2365, 1.442695
    %v2368 = vpow.pop %v2367
    %v2369 = vmul.f32 %v2366, 1.442695
    %v2370 = vpow.pop %v2369
    %v2371 = vadd.f32 %v2368, 1.0
    %v2372 = vadd.f32 %v2370, 1.0
    %v2373 = vrcp.pop %v2371
    %v2374 = vmul.f32 1.0, %v2373
    %v2375 = vrcp.pop %v2372
    %v2376 = vmul.f32 1.0, %v2375
    %v2377 = vxor.u32 %v2359, 2147483648
    %v2378 = vxor.u32 %v2360, 2147483648
    %v2379 = vmul.f32 %v2377, 1.442695
    %v2380 = vpow.pop %v2379
    %v2381 = vmul.f32 %v2378, 1.442695
    %v2382 = vpow.pop %v2381
    %v2383 = vadd.f32 %v2380, 1.0
    %v2384 = vadd.f32 %v2382, 1.0
    %v2385 = vrcp.pop %v2383
    %v2386 = vmul.f32 1.0, %v2385
    %v2387 = vrcp.pop %v2384
    %v2388 = vmul.f32 1.0, %v2387
    %v2389 = vtanh.pop %v2361
    %v2390 = vtanh.pop %v2362
    %v2391 = vxor.u32 %v2363, 2147483648
    %v2392 = vxor.u32 %v2364, 2147483648
    %v2393 = vmul.f32 %v2391, 1.442695
    %v2394 = vpow.pop %v2393
    %v2395 = vmul.f32 %v2392, 1.442695
    %v2396 = vpow.pop %v2395
    %v2397 = vadd.f32 %v2394, 1.0
    %v2398 = vadd.f32 %v2396, 1.0
    %v2399 = vrcp.pop %v2397
    %v2400 = vmul.f32 1.0, %v2399
    %v2401 = vrcp.pop %v2398
    %v2402 = vmul.f32 1.0, %v2401
    %v2403 = vmul.f32 %v2386, %v2059
    %v2404 = vmul.f32 %v2388, %v2060
    %v2405 = vmul.f32 %v2374, %v2389
    %v2406 = vmul.f32 %v2376, %v2390
    %v2407 = vadd.f32 %v2403, %v2405
    %v2408 = vadd.f32 %v2404, %v2406
    %v2409 = vtanh.pop %v2407
    %v2410 = vtanh.pop %v2408
    %v2411 = vmul.f32 %v2400, %v2409
    %v2412 = vmul.f32 %v2402, %v2410
    %v2413 = vld [vmem:[#allocation2 + $0x100] sm:$0xff]
    %v2414 = vld [vmem:[#allocation2 + $0x108] sm:$0xff]
    %v2415 = vld [vmem:[#allocation2 + $0x110] sm:$0xff]
    %v2416 = vld [vmem:[#allocation2 + $0x118] sm:$0xff]
    %v2417 = vld [vmem:[#allocation2 + $0x120] sm:$0xff]
    %v2418 = vld [vmem:[#allocation2 + $0x128] sm:$0xff]
    %v2419 = vld [vmem:[#allocation2 + $0x130] sm:$0xff]
    %v2420 = vld [vmem:[#allocation2 + $0x138] sm:$0xff]
    %2421 = vmatprep.subr.mxu0 %v894
    %2422 = vmatpush1.msra.mxu0 %v893
    %2423 = vmatprep.subr.mxu0 %v886
    %2424 = vmatpush1.msra.mxu0 %v885
    %2425 = vmatprep.subr.mxu0 %v878
    %2426 = vmatpush1.msra.mxu0 %v877
    %2427 = vmatprep.subr.mxu0 %v870
    %2428 = vmatpush1.msra.mxu0 %v869
    %2429 = vmatprep.subr.mxu0 %v862
    %2430 = vmatpush1.msra.mxu0 %v861
    %2431 = vmatprep.subr.mxu0 %v854
    %2432 = vmatpush1.msra.mxu0 %v853
    %2433 = vmatprep.subr.mxu0 %v846
    %2434 = vmatpush1.msra.mxu0 %v845
    %2435 = vmatprep.subr.mxu0 %v838
    %2436 = vmatpush1.msra.mxu0 %v837
    %2437 = vmatprep.subr.mxu0 %v830
    %2438 = vmatpush1.msra.mxu0 %v829
    %2439 = vmatprep.subr.mxu0 %v822
    %2440 = vmatpush1.msra.mxu0 %v821
    %2441 = vmatprep.subr.mxu0 %v814
    %2442 = vmatpush1.msra.mxu0 %v813
    %2443 = vmatprep.subr.mxu0 %v806
    %2444 = vmatpush1.msra.mxu0 %v805
    %2445 = vmatprep.subr.mxu0 %v798
    %2446 = vmatpush1.msra.mxu0 %v797
    %2447 = vmatprep.subr.mxu0 %v790
    %2448 = vmatpush1.msra.mxu0 %v789
    %2449 = vmatprep.subr.mxu0 %v782
    %2450 = vmatpush1.msra.mxu0 %v781
    %2451 = vmatprep.subr.mxu0 %v774
    %2452 = vmatpush1.msra.mxu0 %v773
    %2453 = vmatprep.subr.mxu0 %v1022
    %2454 = vmatpush2.msra.mxu0 %v1021
    %2455 = vmatprep.subr.mxu0 %v1014
    %2456 = vmatpush2.msra.mxu0 %v1013
    %2457 = vmatprep.subr.mxu0 %v1006
    %2458 = vmatpush2.msra.mxu0 %v1005
    %2459 = vmatprep.subr.mxu0 %v998
    %2460 = vmatpush2.msra.mxu0 %v997
    %2461 = vmatprep.subr.mxu0 %v990
    %2462 = vmatpush2.msra.mxu0 %v989
    %2463 = vmatprep.subr.mxu0 %v982
    %2464 = vmatpush2.msra.mxu0 %v981
    %2465 = vmatprep.subr.mxu0 %v974
    %2466 = vmatpush2.msra.mxu0 %v973
    %2467 = vmatprep.subr.mxu0 %v966
    %2468 = vmatpush2.msra.mxu0 %v965
    %2469 = vmatprep.subr.mxu0 %v958
    %2470 = vmatpush2.msra.mxu0 %v957
    %2471 = vmatprep.subr.mxu0 %v950
    %2472 = vmatpush2.msra.mxu0 %v949
    %2473 = vmatprep.subr.mxu0 %v942
    %2474 = vmatpush2.msra.mxu0 %v941
    %2475 = vmatprep.subr.mxu0 %v934
    %2476 = vmatpush2.msra.mxu0 %v933
    %2477 = vmatprep.subr.mxu0 %v926
    %2478 = vmatpush2.msra.mxu0 %v925
    %2479 = vmatprep.subr.mxu0 %v918
    %2480 = vmatpush2.msra.mxu0 %v917
    %2481 = vmatprep.subr.mxu0 %v910
    %2482 = vmatpush2.msra.mxu0 %v909
    %2483 = vmatprep.subr.mxu0 %v902
    %2484 = vmatpush2.msra.mxu0 %v901
    %2485 = vmatprep.mubr.f32.mxu0 %v2412
    %2486 = vmatmul.mubr.f32.gmra.mxu0 %v2411
    %v2487 = vpop.f32.mrf.mxu0
    %v2488 = vadd.f32 0.0, %v2487
    %v2489 = vpop.f32.mrf.mxu0
    %v2490 = vadd.f32 0.0, %v2489
    %2491 = vdwg.mxu0
    %2492 = vmatprep.subr.mxu0 %v896
    %2493 = vmatpush1.msra.mxu0 %v895
    %2494 = vmatprep.subr.mxu0 %v888
    %2495 = vmatpush1.msra.mxu0 %v887
    %2496 = vmatprep.subr.mxu0 %v880
    %2497 = vmatpush1.msra.mxu0 %v879
    %2498 = vmatprep.subr.mxu0 %v872
    %2499 = vmatpush1.msra.mxu0 %v871
    %2500 = vmatprep.subr.mxu0 %v864
    %2501 = vmatpush1.msra.mxu0 %v863
    %2502 = vmatprep.subr.mxu0 %v856
    %2503 = vmatpush1.msra.mxu0 %v855
    %2504 = vmatprep.subr.mxu0 %v848
    %2505 = vmatpush1.msra.mxu0 %v847
    %2506 = vmatprep.subr.mxu0 %v840
    %2507 = vmatpush1.msra.mxu0 %v839
    %2508 = vmatprep.subr.mxu0 %v832
    %2509 = vmatpush1.msra.mxu0 %v831
    %2510 = vmatprep.subr.mxu0 %v824
    %2511 = vmatpush1.msra.mxu0 %v823
    %2512 = vmatprep.subr.mxu0 %v816
    %2513 = vmatpush1.msra.mxu0 %v815
    %2514 = vmatprep.subr.mxu0 %v808
    %2515 = vmatpush1.msra.mxu0 %v807
    %2516 = vmatprep.subr.mxu0 %v800
    %2517 = vmatpush1.msra.mxu0 %v799
    %2518 = vmatprep.subr.mxu0 %v792
    %2519 = vmatpush1.msra.mxu0 %v791
    %2520 = vmatprep.subr.mxu0 %v784
    %2521 = vmatpush1.msra.mxu0 %v783
    %2522 = vmatprep.subr.mxu0 %v776
    %2523 = vmatpush1.msra.mxu0 %v775
    %2524 = vmatprep.subr.mxu0 %v1024
    %2525 = vmatpush2.msra.mxu0 %v1023
    %2526 = vmatprep.subr.mxu0 %v1016
    %2527 = vmatpush2.msra.mxu0 %v1015
    %2528 = vmatprep.subr.mxu0 %v1008
    %2529 = vmatpush2.msra.mxu0 %v1007
    %2530 = vmatprep.subr.mxu0 %v1000
    %2531 = vmatpush2.msra.mxu0 %v999
    %2532 = vmatprep.subr.mxu0 %v992
    %2533 = vmatpush2.msra.mxu0 %v991
    %2534 = vmatprep.subr.mxu0 %v984
    %2535 = vmatpush2.msra.mxu0 %v983
    %2536 = vmatprep.subr.mxu0 %v976
    %2537 = vmatpush2.msra.mxu0 %v975
    %2538 = vmatprep.subr.mxu0 %v968
    %2539 = vmatpush2.msra.mxu0 %v967
    %2540 = vmatprep.subr.mxu0 %v960
    %2541 = vmatpush2.msra.mxu0 %v959
    %2542 = vmatprep.subr.mxu0 %v952
    %2543 = vmatpush2.msra.mxu0 %v951
    %2544 = vmatprep.subr.mxu0 %v944
    %2545 = vmatpush2.msra.mxu0 %v943
    %2546 = vmatprep.subr.mxu0 %v936
    %2547 = vmatpush2.msra.mxu0 %v935
    %2548 = vmatprep.subr.mxu0 %v928
    %2549 = vmatpush2.msra.mxu0 %v927
    %2550 = vmatprep.subr.mxu0 %v920
    %2551 = vmatpush2.msra.mxu0 %v919
    %2552 = vmatprep.subr.mxu0 %v912
    %2553 = vmatpush2.msra.mxu0 %v911
    %2554 = vmatprep.subr.mxu0 %v904
    %2555 = vmatpush2.msra.mxu0 %v903
    %2556 = vmatprep.mubr.f32.mxu0 %v2412
    %2557 = vmatmul.mubr.f32.gmra.mxu0 %v2411
    %v2558 = vpop.f32.mrf.mxu0
    %v2559 = vadd.f32 0.0, %v2558
    %v2560 = vpop.f32.mrf.mxu0
    %v2561 = vadd.f32 0.0, %v2560
    %2562 = vdwg.mxu0
    %2563 = vmatprep.subr.mxu0 %v898
    %2564 = vmatpush1.msra.mxu0 %v897
    %2565 = vmatprep.subr.mxu0 %v890
    %2566 = vmatpush1.msra.mxu0 %v889
    %2567 = vmatprep.subr.mxu0 %v882
    %2568 = vmatpush1.msra.mxu0 %v881
    %2569 = vmatprep.subr.mxu0 %v874
    %2570 = vmatpush1.msra.mxu0 %v873
    %2571 = vmatprep.subr.mxu0 %v866
    %2572 = vmatpush1.msra.mxu0 %v865
    %2573 = vmatprep.subr.mxu0 %v858
    %2574 = vmatpush1.msra.mxu0 %v857
    %2575 = vmatprep.subr.mxu0 %v850
    %2576 = vmatpush1.msra.mxu0 %v849
    %2577 = vmatprep.subr.mxu0 %v842
    %2578 = vmatpush1.msra.mxu0 %v841
    %2579 = vmatprep.subr.mxu0 %v834
    %2580 = vmatpush1.msra.mxu0 %v833
    %2581 = vmatprep.subr.mxu0 %v826
    %2582 = vmatpush1.msra.mxu0 %v825
    %2583 = vmatprep.subr.mxu0 %v818
    %2584 = vmatpush1.msra.mxu0 %v817
    %2585 = vmatprep.subr.mxu0 %v810
    %2586 = vmatpush1.msra.mxu0 %v809
    %2587 = vmatprep.subr.mxu0 %v802
    %2588 = vmatpush1.msra.mxu0 %v801
    %2589 = vmatprep.subr.mxu0 %v794
    %2590 = vmatpush1.msra.mxu0 %v793
    %2591 = vmatprep.subr.mxu0 %v786
    %2592 = vmatpush1.msra.mxu0 %v785
    %2593 = vmatprep.subr.mxu0 %v778
    %2594 = vmatpush1.msra.mxu0 %v777
    %2595 = vmatprep.subr.mxu0 %v1026
    %2596 = vmatpush2.msra.mxu0 %v1025
    %2597 = vmatprep.subr.mxu0 %v1018
    %2598 = vmatpush2.msra.mxu0 %v1017
    %2599 = vmatprep.subr.mxu0 %v1010
    %2600 = vmatpush2.msra.mxu0 %v1009
    %2601 = vmatprep.subr.mxu0 %v1002
    %2602 = vmatpush2.msra.mxu0 %v1001
    %2603 = vmatprep.subr.mxu0 %v994
    %2604 = vmatpush2.msra.mxu0 %v993
    %2605 = vmatprep.subr.mxu0 %v986
    %2606 = vmatpush2.msra.mxu0 %v985
    %2607 = vmatprep.subr.mxu0 %v978
    %2608 = vmatpush2.msra.mxu0 %v977
    %2609 = vmatprep.subr.mxu0 %v970
    %2610 = vmatpush2.msra.mxu0 %v969
    %2611 = vmatprep.subr.mxu0 %v962
    %2612 = vmatpush2.msra.mxu0 %v961
    %2613 = vmatprep.subr.mxu0 %v954
    %2614 = vmatpush2.msra.mxu0 %v953
    %2615 = vmatprep.subr.mxu0 %v946
    %2616 = vmatpush2.msra.mxu0 %v945
    %2617 = vmatprep.subr.mxu0 %v938
    %2618 = vmatpush2.msra.mxu0 %v937
    %2619 = vmatprep.subr.mxu0 %v930
    %2620 = vmatpush2.msra.mxu0 %v929
    %2621 = vmatprep.subr.mxu0 %v922
    %2622 = vmatpush2.msra.mxu0 %v921
    %2623 = vmatprep.subr.mxu0 %v914
    %2624 = vmatpush2.msra.mxu0 %v913
    %2625 = vmatprep.subr.mxu0 %v906
    %2626 = vmatpush2.msra.mxu0 %v905
    %2627 = vmatprep.mubr.f32.mxu0 %v2412
    %2628 = vmatmul.mubr.f32.gmra.mxu0 %v2411
    %v2629 = vpop.f32.mrf.mxu0
    %v2630 = vadd.f32 0.0, %v2629
    %v2631 = vpop.f32.mrf.mxu0
    %v2632 = vadd.f32 0.0, %v2631
    %2633 = vdwg.mxu0
    %2634 = vmatprep.subr.mxu0 %v900
    %2635 = vmatpush1.msra.mxu0 %v899
    %2636 = vmatprep.subr.mxu0 %v892
    %2637 = vmatpush1.msra.mxu0 %v891
    %2638 = vmatprep.subr.mxu0 %v884
    %2639 = vmatpush1.msra.mxu0 %v883
    %2640 = vmatprep.subr.mxu0 %v876
    %2641 = vmatpush1.msra.mxu0 %v875
    %2642 = vmatprep.subr.mxu0 %v868
    %2643 = vmatpush1.msra.mxu0 %v867
    %2644 = vmatprep.subr.mxu0 %v860
    %2645 = vmatpush1.msra.mxu0 %v859
    %2646 = vmatprep.subr.mxu0 %v852
    %2647 = vmatpush1.msra.mxu0 %v851
    %2648 = vmatprep.subr.mxu0 %v844
    %2649 = vmatpush1.msra.mxu0 %v843
    %2650 = vmatprep.subr.mxu0 %v836
    %2651 = vmatpush1.msra.mxu0 %v835
    %2652 = vmatprep.subr.mxu0 %v828
    %2653 = vmatpush1.msra.mxu0 %v827
    %2654 = vmatprep.subr.mxu0 %v820
    %2655 = vmatpush1.msra.mxu0 %v819
    %2656 = vmatprep.subr.mxu0 %v812
    %2657 = vmatpush1.msra.mxu0 %v811
    %2658 = vmatprep.subr.mxu0 %v804
    %2659 = vmatpush1.msra.mxu0 %v803
    %2660 = vmatprep.subr.mxu0 %v796
    %2661 = vmatpush1.msra.mxu0 %v795
    %2662 = vmatprep.subr.mxu0 %v788
    %2663 = vmatpush1.msra.mxu0 %v787
    %2664 = vmatprep.subr.mxu0 %v780
    %2665 = vmatpush1.msra.mxu0 %v779
    %2666 = vmatprep.subr.mxu0 %v1028
    %2667 = vmatpush2.msra.mxu0 %v1027
    %2668 = vmatprep.subr.mxu0 %v1020
    %2669 = vmatpush2.msra.mxu0 %v1019
    %2670 = vmatprep.subr.mxu0 %v1012
    %2671 = vmatpush2.msra.mxu0 %v1011
    %2672 = vmatprep.subr.mxu0 %v1004
    %2673 = vmatpush2.msra.mxu0 %v1003
    %2674 = vmatprep.subr.mxu0 %v996
    %2675 = vmatpush2.msra.mxu0 %v995
    %2676 = vmatprep.subr.mxu0 %v988
    %2677 = vmatpush2.msra.mxu0 %v987
    %2678 = vmatprep.subr.mxu0 %v980
    %2679 = vmatpush2.msra.mxu0 %v979
    %2680 = vmatprep.subr.mxu0 %v972
    %2681 = vmatpush2.msra.mxu0 %v971
    %2682 = vmatprep.subr.mxu0 %v964
    %2683 = vmatpush2.msra.mxu0 %v963
    %2684 = vmatprep.subr.mxu0 %v956
    %2685 = vmatpush2.msra.mxu0 %v955
    %2686 = vmatprep.subr.mxu0 %v948
    %2687 = vmatpush2.msra.mxu0 %v947
    %2688 = vmatprep.subr.mxu0 %v940
    %2689 = vmatpush2.msra.mxu0 %v939
    %2690 = vmatprep.subr.mxu0 %v932
    %2691 = vmatpush2.msra.mxu0 %v931
    %2692 = vmatprep.subr.mxu0 %v924
    %2693 = vmatpush2.msra.mxu0 %v923
    %2694 = vmatprep.subr.mxu0 %v916
    %2695 = vmatpush2.msra.mxu0 %v915
    %2696 = vmatprep.subr.mxu0 %v908
    %2697 = vmatpush2.msra.mxu0 %v907
    %2698 = vmatprep.mubr.f32.mxu0 %v2412
    %2699 = vmatmul.mubr.f32.gmra.mxu0 %v2411
    %v2700 = vpop.f32.mrf.mxu0
    %v2701 = vadd.f32 0.0, %v2700
    %v2702 = vpop.f32.mrf.mxu0
    %v2703 = vadd.f32 0.0, %v2702
    %2704 = vdwg.mxu0
    %v2705 = vadd.f32 %v2413, %v2488
    %v2706 = vadd.f32 %v2414, %v2490
    %v2707 = vadd.f32 %v2415, %v2559
    %v2708 = vadd.f32 %v2416, %v2561
    %v2709 = vadd.f32 %v2417, %v2630
    %v2710 = vadd.f32 %v2418, %v2632
    %v2711 = vadd.f32 %v2419, %v2701
    %v2712 = vadd.f32 %v2420, %v2703
    %v2713 = vxor.u32 %v2705, 2147483648
    %v2714 = vxor.u32 %v2706, 2147483648
    %v2715 = vmul.f32 %v2713, 1.442695
    %v2716 = vpow.pop %v2715
    %v2717 = vmul.f32 %v2714, 1.442695
    %v2718 = vpow.pop %v2717
    %v2719 = vadd.f32 %v2716, 1.0
    %v2720 = vadd.f32 %v2718, 1.0
    %v2721 = vrcp.pop %v2719
    %v2722 = vmul.f32 1.0, %v2721
    %v2723 = vrcp.pop %v2720
    %v2724 = vmul.f32 1.0, %v2723
    %v2725 = vxor.u32 %v2707, 2147483648
    %v2726 = vxor.u32 %v2708, 2147483648
    %v2727 = vmul.f32 %v2725, 1.442695
    %v2728 = vpow.pop %v2727
    %v2729 = vmul.f32 %v2726, 1.442695
    %v2730 = vpow.pop %v2729
    %v2731 = vadd.f32 %v2728, 1.0
    %v2732 = vadd.f32 %v2730, 1.0
    %v2733 = vrcp.pop %v2731
    %v2734 = vmul.f32 1.0, %v2733
    %v2735 = vrcp.pop %v2732
    %v2736 = vmul.f32 1.0, %v2735
    %v2737 = vtanh.pop %v2709
    %v2738 = vtanh.pop %v2710
    %v2739 = vxor.u32 %v2711, 2147483648
    %v2740 = vxor.u32 %v2712, 2147483648
    %v2741 = vmul.f32 %v2739, 1.442695
    %v2742 = vpow.pop %v2741
    %v2743 = vmul.f32 %v2740, 1.442695
    %v2744 = vpow.pop %v2743
    %v2745 = vadd.f32 %v2742, 1.0
    %v2746 = vadd.f32 %v2744, 1.0
    %v2747 = vrcp.pop %v2745
    %v2748 = vmul.f32 1.0, %v2747
    %v2749 = vrcp.pop %v2746
    %v2750 = vmul.f32 1.0, %v2749
    %v2751 = vmul.f32 %v2734, %v2407
    %v2752 = vmul.f32 %v2736, %v2408
    %v2753 = vmul.f32 %v2722, %v2737
    %v2754 = vmul.f32 %v2724, %v2738
    %v2755 = vadd.f32 %v2751, %v2753
    %v2756 = vadd.f32 %v2752, %v2754
    %v2757 = vtanh.pop %v2755
    %v2758 = vtanh.pop %v2756
    %v2759 = vmul.f32 %v2748, %v2757
    %v2760 = vmul.f32 %v2750, %v2758
    %v2761 = vld [vmem:[#allocation2 + $0x140] sm:$0xff]
    %v2762 = vld [vmem:[#allocation2 + $0x148] sm:$0xff]
    %v2763 = vld [vmem:[#allocation2 + $0x150] sm:$0xff]
    %v2764 = vld [vmem:[#allocation2 + $0x158] sm:$0xff]
    %v2765 = vld [vmem:[#allocation2 + $0x160] sm:$0xff]
    %v2766 = vld [vmem:[#allocation2 + $0x168] sm:$0xff]
    %v2767 = vld [vmem:[#allocation2 + $0x170] sm:$0xff]
    %v2768 = vld [vmem:[#allocation2 + $0x178] sm:$0xff]
    %2769 = vmatprep.subr.mxu0 %v894
    %2770 = vmatpush1.msra.mxu0 %v893
    %2771 = vmatprep.subr.mxu0 %v886
    %2772 = vmatpush1.msra.mxu0 %v885
    %2773 = vmatprep.subr.mxu0 %v878
    %2774 = vmatpush1.msra.mxu0 %v877
    %2775 = vmatprep.subr.mxu0 %v870
    %2776 = vmatpush1.msra.mxu0 %v869
    %2777 = vmatprep.subr.mxu0 %v862
    %2778 = vmatpush1.msra.mxu0 %v861
    %2779 = vmatprep.subr.mxu0 %v854
    %2780 = vmatpush1.msra.mxu0 %v853
    %2781 = vmatprep.subr.mxu0 %v846
    %2782 = vmatpush1.msra.mxu0 %v845
    %2783 = vmatprep.subr.mxu0 %v838
    %2784 = vmatpush1.msra.mxu0 %v837
    %2785 = vmatprep.subr.mxu0 %v830
    %2786 = vmatpush1.msra.mxu0 %v829
    %2787 = vmatprep.subr.mxu0 %v822
    %2788 = vmatpush1.msra.mxu0 %v821
    %2789 = vmatprep.subr.mxu0 %v814
    %2790 = vmatpush1.msra.mxu0 %v813
    %2791 = vmatprep.subr.mxu0 %v806
    %2792 = vmatpush1.msra.mxu0 %v805
    %2793 = vmatprep.subr.mxu0 %v798
    %2794 = vmatpush1.msra.mxu0 %v797
    %2795 = vmatprep.subr.mxu0 %v790
    %2796 = vmatpush1.msra.mxu0 %v789
    %2797 = vmatprep.subr.mxu0 %v782
    %2798 = vmatpush1.msra.mxu0 %v781
    %2799 = vmatprep.subr.mxu0 %v774
    %2800 = vmatpush1.msra.mxu0 %v773
    %2801 = vmatprep.subr.mxu0 %v1022
    %2802 = vmatpush2.msra.mxu0 %v1021
    %2803 = vmatprep.subr.mxu0 %v1014
    %2804 = vmatpush2.msra.mxu0 %v1013
    %2805 = vmatprep.subr.mxu0 %v1006
    %2806 = vmatpush2.msra.mxu0 %v1005
    %2807 = vmatprep.subr.mxu0 %v998
    %2808 = vmatpush2.msra.mxu0 %v997
    %2809 = vmatprep.subr.mxu0 %v990
    %2810 = vmatpush2.msra.mxu0 %v989
    %2811 = vmatprep.subr.mxu0 %v982
    %2812 = vmatpush2.msra.mxu0 %v981
    %2813 = vmatprep.subr.mxu0 %v974
    %2814 = vmatpush2.msra.mxu0 %v973
    %2815 = vmatprep.subr.mxu0 %v966
    %2816 = vmatpush2.msra.mxu0 %v965
    %2817 = vmatprep.subr.mxu0 %v958
    %2818 = vmatpush2.msra.mxu0 %v957
    %2819 = vmatprep.subr.mxu0 %v950
    %2820 = vmatpush2.msra.mxu0 %v949
    %2821 = vmatprep.subr.mxu0 %v942
    %2822 = vmatpush2.msra.mxu0 %v941
    %2823 = vmatprep.subr.mxu0 %v934
    %2824 = vmatpush2.msra.mxu0 %v933
    %2825 = vmatprep.subr.mxu0 %v926
    %2826 = vmatpush2.msra.mxu0 %v925
    %2827 = vmatprep.subr.mxu0 %v918
    %2828 = vmatpush2.msra.mxu0 %v917
    %2829 = vmatprep.subr.mxu0 %v910
    %2830 = vmatpush2.msra.mxu0 %v909
    %2831 = vmatprep.subr.mxu0 %v902
    %2832 = vmatpush2.msra.mxu0 %v901
    %2833 = vmatprep.mubr.f32.mxu0 %v2760
    %2834 = vmatmul.mubr.f32.gmra.mxu0 %v2759
    %v2835 = vpop.f32.mrf.mxu0
    %v2836 = vadd.f32 0.0, %v2835
    %v2837 = vpop.f32.mrf.mxu0
    %v2838 = vadd.f32 0.0, %v2837
    %2839 = vdwg.mxu0
    %2840 = vmatprep.subr.mxu0 %v896
    %2841 = vmatpush1.msra.mxu0 %v895
    %2842 = vmatprep.subr.mxu0 %v888
    %2843 = vmatpush1.msra.mxu0 %v887
    %2844 = vmatprep.subr.mxu0 %v880
    %2845 = vmatpush1.msra.mxu0 %v879
    %2846 = vmatprep.subr.mxu0 %v872
    %2847 = vmatpush1.msra.mxu0 %v871
    %2848 = vmatprep.subr.mxu0 %v864
    %2849 = vmatpush1.msra.mxu0 %v863
    %2850 = vmatprep.subr.mxu0 %v856
    %2851 = vmatpush1.msra.mxu0 %v855
    %2852 = vmatprep.subr.mxu0 %v848
    %2853 = vmatpush1.msra.mxu0 %v847
    %2854 = vmatprep.subr.mxu0 %v840
    %2855 = vmatpush1.msra.mxu0 %v839
    %2856 = vmatprep.subr.mxu0 %v832
    %2857 = vmatpush1.msra.mxu0 %v831
    %2858 = vmatprep.subr.mxu0 %v824
    %2859 = vmatpush1.msra.mxu0 %v823
    %2860 = vmatprep.subr.mxu0 %v816
    %2861 = vmatpush1.msra.mxu0 %v815
    %2862 = vmatprep.subr.mxu0 %v808
    %2863 = vmatpush1.msra.mxu0 %v807
    %2864 = vmatprep.subr.mxu0 %v800
    %2865 = vmatpush1.msra.mxu0 %v799
    %2866 = vmatprep.subr.mxu0 %v792
    %2867 = vmatpush1.msra.mxu0 %v791
    %2868 = vmatprep.subr.mxu0 %v784
    %2869 = vmatpush1.msra.mxu0 %v783
    %2870 = vmatprep.subr.mxu0 %v776
    %2871 = vmatpush1.msra.mxu0 %v775
    %2872 = vmatprep.subr.mxu0 %v1024
    %2873 = vmatpush2.msra.mxu0 %v1023
    %2874 = vmatprep.subr.mxu0 %v1016
    %2875 = vmatpush2.msra.mxu0 %v1015
    %2876 = vmatprep.subr.mxu0 %v1008
    %2877 = vmatpush2.msra.mxu0 %v1007
    %2878 = vmatprep.subr.mxu0 %v1000
    %2879 = vmatpush2.msra.mxu0 %v999
    %2880 = vmatprep.subr.mxu0 %v992
    %2881 = vmatpush2.msra.mxu0 %v991
    %2882 = vmatprep.subr.mxu0 %v984
    %2883 = vmatpush2.msra.mxu0 %v983
    %2884 = vmatprep.subr.mxu0 %v976
    %2885 = vmatpush2.msra.mxu0 %v975
    %2886 = vmatprep.subr.mxu0 %v968
    %2887 = vmatpush2.msra.mxu0 %v967
    %2888 = vmatprep.subr.mxu0 %v960
    %2889 = vmatpush2.msra.mxu0 %v959
    %2890 = vmatprep.subr.mxu0 %v952
    %2891 = vmatpush2.msra.mxu0 %v951
    %2892 = vmatprep.subr.mxu0 %v944
    %2893 = vmatpush2.msra.mxu0 %v943
    %2894 = vmatprep.subr.mxu0 %v936
    %2895 = vmatpush2.msra.mxu0 %v935
    %2896 = vmatprep.subr.mxu0 %v928
    %2897 = vmatpush2.msra.mxu0 %v927
    %2898 = vmatprep.subr.mxu0 %v920
    %2899 = vmatpush2.msra.mxu0 %v919
    %2900 = vmatprep.subr.mxu0 %v912
    %2901 = vmatpush2.msra.mxu0 %v911
    %2902 = vmatprep.subr.mxu0 %v904
    %2903 = vmatpush2.msra.mxu0 %v903
    %2904 = vmatprep.mubr.f32.mxu0 %v2760
    %2905 = vmatmul.mubr.f32.gmra.mxu0 %v2759
    %v2906 = vpop.f32.mrf.mxu0
    %v2907 = vadd.f32 0.0, %v2906
    %v2908 = vpop.f32.mrf.mxu0
    %v2909 = vadd.f32 0.0, %v2908
    %2910 = vdwg.mxu0
    %2911 = vmatprep.subr.mxu0 %v898
    %2912 = vmatpush1.msra.mxu0 %v897
    %2913 = vmatprep.subr.mxu0 %v890
    %2914 = vmatpush1.msra.mxu0 %v889
    %2915 = vmatprep.subr.mxu0 %v882
    %2916 = vmatpush1.msra.mxu0 %v881
    %2917 = vmatprep.subr.mxu0 %v874
    %2918 = vmatpush1.msra.mxu0 %v873
    %2919 = vmatprep.subr.mxu0 %v866
    %2920 = vmatpush1.msra.mxu0 %v865
    %2921 = vmatprep.subr.mxu0 %v858
    %2922 = vmatpush1.msra.mxu0 %v857
    %2923 = vmatprep.subr.mxu0 %v850
    %2924 = vmatpush1.msra.mxu0 %v849
    %2925 = vmatprep.subr.mxu0 %v842
    %2926 = vmatpush1.msra.mxu0 %v841
    %2927 = vmatprep.subr.mxu0 %v834
    %2928 = vmatpush1.msra.mxu0 %v833
    %2929 = vmatprep.subr.mxu0 %v826
    %2930 = vmatpush1.msra.mxu0 %v825
    %2931 = vmatprep.subr.mxu0 %v818
    %2932 = vmatpush1.msra.mxu0 %v817
    %2933 = vmatprep.subr.mxu0 %v810
    %2934 = vmatpush1.msra.mxu0 %v809
    %2935 = vmatprep.subr.mxu0 %v802
    %2936 = vmatpush1.msra.mxu0 %v801
    %2937 = vmatprep.subr.mxu0 %v794
    %2938 = vmatpush1.msra.mxu0 %v793
    %2939 = vmatprep.subr.mxu0 %v786
    %2940 = vmatpush1.msra.mxu0 %v785
    %2941 = vmatprep.subr.mxu0 %v778
    %2942 = vmatpush1.msra.mxu0 %v777
    %2943 = vmatprep.subr.mxu0 %v1026
    %2944 = vmatpush2.msra.mxu0 %v1025
    %2945 = vmatprep.subr.mxu0 %v1018
    %2946 = vmatpush2.msra.mxu0 %v1017
    %2947 = vmatprep.subr.mxu0 %v1010
    %2948 = vmatpush2.msra.mxu0 %v1009
    %2949 = vmatprep.subr.mxu0 %v1002
    %2950 = vmatpush2.msra.mxu0 %v1001
    %2951 = vmatprep.subr.mxu0 %v994
    %2952 = vmatpush2.msra.mxu0 %v993
    %2953 = vmatprep.subr.mxu0 %v986
    %2954 = vmatpush2.msra.mxu0 %v985
    %2955 = vmatprep.subr.mxu0 %v978
    %2956 = vmatpush2.msra.mxu0 %v977
    %2957 = vmatprep.subr.mxu0 %v970
    %2958 = vmatpush2.msra.mxu0 %v969
    %2959 = vmatprep.subr.mxu0 %v962
    %2960 = vmatpush2.msra.mxu0 %v961
    %2961 = vmatprep.subr.mxu0 %v954
    %2962 = vmatpush2.msra.mxu0 %v953
    %2963 = vmatprep.subr.mxu0 %v946
    %2964 = vmatpush2.msra.mxu0 %v945
    %2965 = vmatprep.subr.mxu0 %v938
    %2966 = vmatpush2.msra.mxu0 %v937
    %2967 = vmatprep.subr.mxu0 %v930
    %2968 = vmatpush2.msra.mxu0 %v929
    %2969 = vmatprep.subr.mxu0 %v922
    %2970 = vmatpush2.msra.mxu0 %v921
    %2971 = vmatprep.subr.mxu0 %v914
    %2972 = vmatpush2.msra.mxu0 %v913
    %2973 = vmatprep.subr.mxu0 %v906
    %2974 = vmatpush2.msra.mxu0 %v905
    %2975 = vmatprep.mubr.f32.mxu0 %v2760
    %2976 = vmatmul.mubr.f32.gmra.mxu0 %v2759
    %v2977 = vpop.f32.mrf.mxu0
    %v2978 = vadd.f32 0.0, %v2977
    %v2979 = vpop.f32.mrf.mxu0
    %v2980 = vadd.f32 0.0, %v2979
    %2981 = vdwg.mxu0
    %2982 = vmatprep.subr.mxu0 %v900
    %2983 = vmatpush1.msra.mxu0 %v899
    %2984 = vmatprep.subr.mxu0 %v892
    %2985 = vmatpush1.msra.mxu0 %v891
    %2986 = vmatprep.subr.mxu0 %v884
    %2987 = vmatpush1.msra.mxu0 %v883
    %2988 = vmatprep.subr.mxu0 %v876
    %2989 = vmatpush1.msra.mxu0 %v875
    %2990 = vmatprep.subr.mxu0 %v868
    %2991 = vmatpush1.msra.mxu0 %v867
    %2992 = vmatprep.subr.mxu0 %v860
    %2993 = vmatpush1.msra.mxu0 %v859
    %2994 = vmatprep.subr.mxu0 %v852
    %2995 = vmatpush1.msra.mxu0 %v851
    %2996 = vmatprep.subr.mxu0 %v844
    %2997 = vmatpush1.msra.mxu0 %v843
    %2998 = vmatprep.subr.mxu0 %v836
    %2999 = vmatpush1.msra.mxu0 %v835
    %3000 = vmatprep.subr.mxu0 %v828
    %3001 = vmatpush1.msra.mxu0 %v827
    %3002 = vmatprep.subr.mxu0 %v820
    %3003 = vmatpush1.msra.mxu0 %v819
    %3004 = vmatprep.subr.mxu0 %v812
    %3005 = vmatpush1.msra.mxu0 %v811
    %3006 = vmatprep.subr.mxu0 %v804
    %3007 = vmatpush1.msra.mxu0 %v803
    %3008 = vmatprep.subr.mxu0 %v796
    %3009 = vmatpush1.msra.mxu0 %v795
    %3010 = vmatprep.subr.mxu0 %v788
    %3011 = vmatpush1.msra.mxu0 %v787
    %3012 = vmatprep.subr.mxu0 %v780
    %3013 = vmatpush1.msra.mxu0 %v779
    %3014 = vmatprep.subr.mxu0 %v1028
    %3015 = vmatpush2.msra.mxu0 %v1027
    %3016 = vmatprep.subr.mxu0 %v1020
    %3017 = vmatpush2.msra.mxu0 %v1019
    %3018 = vmatprep.subr.mxu0 %v1012
    %3019 = vmatpush2.msra.mxu0 %v1011
    %3020 = vmatprep.subr.mxu0 %v1004
    %3021 = vmatpush2.msra.mxu0 %v1003
    %3022 = vmatprep.subr.mxu0 %v996
    %3023 = vmatpush2.msra.mxu0 %v995
    %3024 = vmatprep.subr.mxu0 %v988
    %3025 = vmatpush2.msra.mxu0 %v987
    %3026 = vmatprep.subr.mxu0 %v980
    %3027 = vmatpush2.msra.mxu0 %v979
    %3028 = vmatprep.subr.mxu0 %v972
    %3029 = vmatpush2.msra.mxu0 %v971
    %3030 = vmatprep.subr.mxu0 %v964
    %3031 = vmatpush2.msra.mxu0 %v963
    %3032 = vmatprep.subr.mxu0 %v956
    %3033 = vmatpush2.msra.mxu0 %v955
    %3034 = vmatprep.subr.mxu0 %v948
    %3035 = vmatpush2.msra.mxu0 %v947
    %3036 = vmatprep.subr.mxu0 %v940
    %3037 = vmatpush2.msra.mxu0 %v939
    %3038 = vmatprep.subr.mxu0 %v932
    %3039 = vmatpush2.msra.mxu0 %v931
    %3040 = vmatprep.subr.mxu0 %v924
    %3041 = vmatpush2.msra.mxu0 %v923
    %3042 = vmatprep.subr.mxu0 %v916
    %3043 = vmatpush2.msra.mxu0 %v915
    %3044 = vmatprep.subr.mxu0 %v908
    %3045 = vmatpush2.msra.mxu0 %v907
    %3046 = vmatprep.mubr.f32.mxu0 %v2760
    %3047 = vmatmul.mubr.f32.gmra.mxu0 %v2759
    %v3048 = vpop.f32.mrf.mxu0
    %v3049 = vadd.f32 0.0, %v3048
    %v3050 = vpop.f32.mrf.mxu0
    %v3051 = vadd.f32 0.0, %v3050
    %3052 = vdwg.mxu0
    %v3053 = vadd.f32 %v2761, %v2836
    %v3054 = vadd.f32 %v2762, %v2838
    %v3055 = vadd.f32 %v2763, %v2907
    %v3056 = vadd.f32 %v2764, %v2909
    %v3057 = vadd.f32 %v2765, %v2978
    %v3058 = vadd.f32 %v2766, %v2980
    %v3059 = vadd.f32 %v2767, %v3049
    %v3060 = vadd.f32 %v2768, %v3051
    %v3061 = vxor.u32 %v3053, 2147483648
    %v3062 = vxor.u32 %v3054, 2147483648
    %v3063 = vmul.f32 %v3061, 1.442695
    %v3064 = vpow.pop %v3063
    %v3065 = vmul.f32 %v3062, 1.442695
    %v3066 = vpow.pop %v3065
    %v3067 = vadd.f32 %v3064, 1.0
    %v3068 = vadd.f32 %v3066, 1.0
    %v3069 = vrcp.pop %v3067
    %v3070 = vmul.f32 1.0, %v3069
    %v3071 = vrcp.pop %v3068
    %v3072 = vmul.f32 1.0, %v3071
    %v3073 = vxor.u32 %v3055, 2147483648
    %v3074 = vxor.u32 %v3056, 2147483648
    %v3075 = vmul.f32 %v3073, 1.442695
    %v3076 = vpow.pop %v3075
    %v3077 = vmul.f32 %v3074, 1.442695
    %v3078 = vpow.pop %v3077
    %v3079 = vadd.f32 %v3076, 1.0
    %v3080 = vadd.f32 %v3078, 1.0
    %v3081 = vrcp.pop %v3079
    %v3082 = vmul.f32 1.0, %v3081
    %v3083 = vrcp.pop %v3080
    %v3084 = vmul.f32 1.0, %v3083
    %v3085 = vtanh.pop %v3057
    %v3086 = vtanh.pop %v3058
    %v3087 = vxor.u32 %v3059, 2147483648
    %v3088 = vxor.u32 %v3060, 2147483648
    %v3089 = vmul.f32 %v3087, 1.442695
    %v3090 = vpow.pop %v3089
    %v3091 = vmul.f32 %v3088, 1.442695
    %v3092 = vpow.pop %v3091
    %v3093 = vadd.f32 %v3090, 1.0
    %v3094 = vadd.f32 %v3092, 1.0
    %v3095 = vrcp.pop %v3093
    %v3096 = vmul.f32 1.0, %v3095
    %v3097 = vrcp.pop %v3094
    %v3098 = vmul.f32 1.0, %v3097
    %v3099 = vmul.f32 %v3082, %v2755
    %v3100 = vmul.f32 %v3084, %v2756
    %v3101 = vmul.f32 %v3070, %v3085
    %v3102 = vmul.f32 %v3072, %v3086
    %v3103 = vadd.f32 %v3099, %v3101
    %v3104 = vadd.f32 %v3100, %v3102
    %v3105 = vtanh.pop %v3103
    %v3106 = vtanh.pop %v3104
    %v3107 = vmul.f32 %v3096, %v3105
    %v3108 = vmul.f32 %v3098, %v3106
    %v3109 = vld [vmem:[#allocation2 + $0x180] sm:$0xff]
    %v3110 = vld [vmem:[#allocation2 + $0x188] sm:$0xff]
    %v3111 = vld [vmem:[#allocation2 + $0x190] sm:$0xff]
    %v3112 = vld [vmem:[#allocation2 + $0x198] sm:$0xff]
    %v3113 = vld [vmem:[#allocation2 + $0x1a0] sm:$0xff]
    %v3114 = vld [vmem:[#allocation2 + $0x1a8] sm:$0xff]
    %v3115 = vld [vmem:[#allocation2 + $0x1b0] sm:$0xff]
    %v3116 = vld [vmem:[#allocation2 + $0x1b8] sm:$0xff]
    %3117 = vmatprep.subr.mxu0 %v894
    %3118 = vmatpush1.msra.mxu0 %v893
    %3119 = vmatprep.subr.mxu0 %v886
    %3120 = vmatpush1.msra.mxu0 %v885
    %3121 = vmatprep.subr.mxu0 %v878
    %3122 = vmatpush1.msra.mxu0 %v877
    %3123 = vmatprep.subr.mxu0 %v870
    %3124 = vmatpush1.msra.mxu0 %v869
    %3125 = vmatprep.subr.mxu0 %v862
    %3126 = vmatpush1.msra.mxu0 %v861
    %3127 = vmatprep.subr.mxu0 %v854
    %3128 = vmatpush1.msra.mxu0 %v853
    %3129 = vmatprep.subr.mxu0 %v846
    %3130 = vmatpush1.msra.mxu0 %v845
    %3131 = vmatprep.subr.mxu0 %v838
    %3132 = vmatpush1.msra.mxu0 %v837
    %3133 = vmatprep.subr.mxu0 %v830
    %3134 = vmatpush1.msra.mxu0 %v829
    %3135 = vmatprep.subr.mxu0 %v822
    %3136 = vmatpush1.msra.mxu0 %v821
    %3137 = vmatprep.subr.mxu0 %v814
    %3138 = vmatpush1.msra.mxu0 %v813
    %3139 = vmatprep.subr.mxu0 %v806
    %3140 = vmatpush1.msra.mxu0 %v805
    %3141 = vmatprep.subr.mxu0 %v798
    %3142 = vmatpush1.msra.mxu0 %v797
    %3143 = vmatprep.subr.mxu0 %v790
    %3144 = vmatpush1.msra.mxu0 %v789
    %3145 = vmatprep.subr.mxu0 %v782
    %3146 = vmatpush1.msra.mxu0 %v781
    %3147 = vmatprep.subr.mxu0 %v774
    %3148 = vmatpush1.msra.mxu0 %v773
    %3149 = vmatprep.subr.mxu0 %v1022
    %3150 = vmatpush2.msra.mxu0 %v1021
    %3151 = vmatprep.subr.mxu0 %v1014
    %3152 = vmatpush2.msra.mxu0 %v1013
    %3153 = vmatprep.subr.mxu0 %v1006
    %3154 = vmatpush2.msra.mxu0 %v1005
    %3155 = vmatprep.subr.mxu0 %v998
    %3156 = vmatpush2.msra.mxu0 %v997
    %3157 = vmatprep.subr.mxu0 %v990
    %3158 = vmatpush2.msra.mxu0 %v989
    %3159 = vmatprep.subr.mxu0 %v982
    %3160 = vmatpush2.msra.mxu0 %v981
    %3161 = vmatprep.subr.mxu0 %v974
    %3162 = vmatpush2.msra.mxu0 %v973
    %3163 = vmatprep.subr.mxu0 %v966
    %3164 = vmatpush2.msra.mxu0 %v965
    %3165 = vmatprep.subr.mxu0 %v958
    %3166 = vmatpush2.msra.mxu0 %v957
    %3167 = vmatprep.subr.mxu0 %v950
    %3168 = vmatpush2.msra.mxu0 %v949
    %3169 = vmatprep.subr.mxu0 %v942
    %3170 = vmatpush2.msra.mxu0 %v941
    %3171 = vmatprep.subr.mxu0 %v934
    %3172 = vmatpush2.msra.mxu0 %v933
    %3173 = vmatprep.subr.mxu0 %v926
    %3174 = vmatpush2.msra.mxu0 %v925
    %3175 = vmatprep.subr.mxu0 %v918
    %3176 = vmatpush2.msra.mxu0 %v917
    %3177 = vmatprep.subr.mxu0 %v910
    %3178 = vmatpush2.msra.mxu0 %v909
    %3179 = vmatprep.subr.mxu0 %v902
    %3180 = vmatpush2.msra.mxu0 %v901
    %3181 = vmatprep.mubr.f32.mxu0 %v3108
    %3182 = vmatmul.mubr.f32.gmra.mxu0 %v3107
    %v3183 = vpop.f32.mrf.mxu0
    %v3184 = vadd.f32 0.0, %v3183
    %v3185 = vpop.f32.mrf.mxu0
    %v3186 = vadd.f32 0.0, %v3185
    %3187 = vdwg.mxu0
    %3188 = vmatprep.subr.mxu0 %v896
    %3189 = vmatpush1.msra.mxu0 %v895
    %3190 = vmatprep.subr.mxu0 %v888
    %3191 = vmatpush1.msra.mxu0 %v887
    %3192 = vmatprep.subr.mxu0 %v880
    %3193 = vmatpush1.msra.mxu0 %v879
    %3194 = vmatprep.subr.mxu0 %v872
    %3195 = vmatpush1.msra.mxu0 %v871
    %3196 = vmatprep.subr.mxu0 %v864
    %3197 = vmatpush1.msra.mxu0 %v863
    %3198 = vmatprep.subr.mxu0 %v856
    %3199 = vmatpush1.msra.mxu0 %v855
    %3200 = vmatprep.subr.mxu0 %v848
    %3201 = vmatpush1.msra.mxu0 %v847
    %3202 = vmatprep.subr.mxu0 %v840
    %3203 = vmatpush1.msra.mxu0 %v839
    %3204 = vmatprep.subr.mxu0 %v832
    %3205 = vmatpush1.msra.mxu0 %v831
    %3206 = vmatprep.subr.mxu0 %v824
    %3207 = vmatpush1.msra.mxu0 %v823
    %3208 = vmatprep.subr.mxu0 %v816
    %3209 = vmatpush1.msra.mxu0 %v815
    %3210 = vmatprep.subr.mxu0 %v808
    %3211 = vmatpush1.msra.mxu0 %v807
    %3212 = vmatprep.subr.mxu0 %v800
    %3213 = vmatpush1.msra.mxu0 %v799
    %3214 = vmatprep.subr.mxu0 %v792
    %3215 = vmatpush1.msra.mxu0 %v791
    %3216 = vmatprep.subr.mxu0 %v784
    %3217 = vmatpush1.msra.mxu0 %v783
    %3218 = vmatprep.subr.mxu0 %v776
    %3219 = vmatpush1.msra.mxu0 %v775
    %3220 = vmatprep.subr.mxu0 %v1024
    %3221 = vmatpush2.msra.mxu0 %v1023
    %3222 = vmatprep.subr.mxu0 %v1016
    %3223 = vmatpush2.msra.mxu0 %v1015
    %3224 = vmatprep.subr.mxu0 %v1008
    %3225 = vmatpush2.msra.mxu0 %v1007
    %3226 = vmatprep.subr.mxu0 %v1000
    %3227 = vmatpush2.msra.mxu0 %v999
    %3228 = vmatprep.subr.mxu0 %v992
    %3229 = vmatpush2.msra.mxu0 %v991
    %3230 = vmatprep.subr.mxu0 %v984
    %3231 = vmatpush2.msra.mxu0 %v983
    %3232 = vmatprep.subr.mxu0 %v976
    %3233 = vmatpush2.msra.mxu0 %v975
    %3234 = vmatprep.subr.mxu0 %v968
    %3235 = vmatpush2.msra.mxu0 %v967
    %3236 = vmatprep.subr.mxu0 %v960
    %3237 = vmatpush2.msra.mxu0 %v959
    %3238 = vmatprep.subr.mxu0 %v952
    %3239 = vmatpush2.msra.mxu0 %v951
    %3240 = vmatprep.subr.mxu0 %v944
    %3241 = vmatpush2.msra.mxu0 %v943
    %3242 = vmatprep.subr.mxu0 %v936
    %3243 = vmatpush2.msra.mxu0 %v935
    %3244 = vmatprep.subr.mxu0 %v928
    %3245 = vmatpush2.msra.mxu0 %v927
    %3246 = vmatprep.subr.mxu0 %v920
    %3247 = vmatpush2.msra.mxu0 %v919
    %3248 = vmatprep.subr.mxu0 %v912
    %3249 = vmatpush2.msra.mxu0 %v911
    %3250 = vmatprep.subr.mxu0 %v904
    %3251 = vmatpush2.msra.mxu0 %v903
    %3252 = vmatprep.mubr.f32.mxu0 %v3108
    %3253 = vmatmul.mubr.f32.gmra.mxu0 %v3107
    %v3254 = vpop.f32.mrf.mxu0
    %v3255 = vadd.f32 0.0, %v3254
    %v3256 = vpop.f32.mrf.mxu0
    %v3257 = vadd.f32 0.0, %v3256
    %3258 = vdwg.mxu0
    %3259 = vmatprep.subr.mxu0 %v898
    %3260 = vmatpush1.msra.mxu0 %v897
    %3261 = vmatprep.subr.mxu0 %v890
    %3262 = vmatpush1.msra.mxu0 %v889
    %3263 = vmatprep.subr.mxu0 %v882
    %3264 = vmatpush1.msra.mxu0 %v881
    %3265 = vmatprep.subr.mxu0 %v874
    %3266 = vmatpush1.msra.mxu0 %v873
    %3267 = vmatprep.subr.mxu0 %v866
    %3268 = vmatpush1.msra.mxu0 %v865
    %3269 = vmatprep.subr.mxu0 %v858
    %3270 = vmatpush1.msra.mxu0 %v857
    %3271 = vmatprep.subr.mxu0 %v850
    %3272 = vmatpush1.msra.mxu0 %v849
    %3273 = vmatprep.subr.mxu0 %v842
    %3274 = vmatpush1.msra.mxu0 %v841
    %3275 = vmatprep.subr.mxu0 %v834
    %3276 = vmatpush1.msra.mxu0 %v833
    %3277 = vmatprep.subr.mxu0 %v826
    %3278 = vmatpush1.msra.mxu0 %v825
    %3279 = vmatprep.subr.mxu0 %v818
    %3280 = vmatpush1.msra.mxu0 %v817
    %3281 = vmatprep.subr.mxu0 %v810
    %3282 = vmatpush1.msra.mxu0 %v809
    %3283 = vmatprep.subr.mxu0 %v802
    %3284 = vmatpush1.msra.mxu0 %v801
    %3285 = vmatprep.subr.mxu0 %v794
    %3286 = vmatpush1.msra.mxu0 %v793
    %3287 = vmatprep.subr.mxu0 %v786
    %3288 = vmatpush1.msra.mxu0 %v785
    %3289 = vmatprep.subr.mxu0 %v778
    %3290 = vmatpush1.msra.mxu0 %v777
    %3291 = vmatprep.subr.mxu0 %v1026
    %3292 = vmatpush2.msra.mxu0 %v1025
    %3293 = vmatprep.subr.mxu0 %v1018
    %3294 = vmatpush2.msra.mxu0 %v1017
    %3295 = vmatprep.subr.mxu0 %v1010
    %3296 = vmatpush2.msra.mxu0 %v1009
    %3297 = vmatprep.subr.mxu0 %v1002
    %3298 = vmatpush2.msra.mxu0 %v1001
    %3299 = vmatprep.subr.mxu0 %v994
    %3300 = vmatpush2.msra.mxu0 %v993
    %3301 = vmatprep.subr.mxu0 %v986
    %3302 = vmatpush2.msra.mxu0 %v985
    %3303 = vmatprep.subr.mxu0 %v978
    %3304 = vmatpush2.msra.mxu0 %v977
    %3305 = vmatprep.subr.mxu0 %v970
    %3306 = vmatpush2.msra.mxu0 %v969
    %3307 = vmatprep.subr.mxu0 %v962
    %3308 = vmatpush2.msra.mxu0 %v961
    %3309 = vmatprep.subr.mxu0 %v954
    %3310 = vmatpush2.msra.mxu0 %v953
    %3311 = vmatprep.subr.mxu0 %v946
    %3312 = vmatpush2.msra.mxu0 %v945
    %3313 = vmatprep.subr.mxu0 %v938
    %3314 = vmatpush2.msra.mxu0 %v937
    %3315 = vmatprep.subr.mxu0 %v930
    %3316 = vmatpush2.msra.mxu0 %v929
    %3317 = vmatprep.subr.mxu0 %v922
    %3318 = vmatpush2.msra.mxu0 %v921
    %3319 = vmatprep.subr.mxu0 %v914
    %3320 = vmatpush2.msra.mxu0 %v913
    %3321 = vmatprep.subr.mxu0 %v906
    %3322 = vmatpush2.msra.mxu0 %v905
    %3323 = vmatprep.mubr.f32.mxu0 %v3108
    %3324 = vmatmul.mubr.f32.gmra.mxu0 %v3107
    %v3325 = vpop.f32.mrf.mxu0
    %v3326 = vadd.f32 0.0, %v3325
    %v3327 = vpop.f32.mrf.mxu0
    %v3328 = vadd.f32 0.0, %v3327
    %3329 = vdwg.mxu0
    %3330 = vmatprep.subr.mxu0 %v900
    %3331 = vmatpush1.msra.mxu0 %v899
    %3332 = vmatprep.subr.mxu0 %v892
    %3333 = vmatpush1.msra.mxu0 %v891
    %3334 = vmatprep.subr.mxu0 %v884
    %3335 = vmatpush1.msra.mxu0 %v883
    %3336 = vmatprep.subr.mxu0 %v876
    %3337 = vmatpush1.msra.mxu0 %v875
    %3338 = vmatprep.subr.mxu0 %v868
    %3339 = vmatpush1.msra.mxu0 %v867
    %3340 = vmatprep.subr.mxu0 %v860
    %3341 = vmatpush1.msra.mxu0 %v859
    %3342 = vmatprep.subr.mxu0 %v852
    %3343 = vmatpush1.msra.mxu0 %v851
    %3344 = vmatprep.subr.mxu0 %v844
    %3345 = vmatpush1.msra.mxu0 %v843
    %3346 = vmatprep.subr.mxu0 %v836
    %3347 = vmatpush1.msra.mxu0 %v835
    %3348 = vmatprep.subr.mxu0 %v828
    %3349 = vmatpush1.msra.mxu0 %v827
    %3350 = vmatprep.subr.mxu0 %v820
    %3351 = vmatpush1.msra.mxu0 %v819
    %3352 = vmatprep.subr.mxu0 %v812
    %3353 = vmatpush1.msra.mxu0 %v811
    %3354 = vmatprep.subr.mxu0 %v804
    %3355 = vmatpush1.msra.mxu0 %v803
    %3356 = vmatprep.subr.mxu0 %v796
    %3357 = vmatpush1.msra.mxu0 %v795
    %3358 = vmatprep.subr.mxu0 %v788
    %3359 = vmatpush1.msra.mxu0 %v787
    %3360 = vmatprep.subr.mxu0 %v780
    %3361 = vmatpush1.msra.mxu0 %v779
    %3362 = vmatprep.subr.mxu0 %v1028
    %3363 = vmatpush2.msra.mxu0 %v1027
    %3364 = vmatprep.subr.mxu0 %v1020
    %3365 = vmatpush2.msra.mxu0 %v1019
    %3366 = vmatprep.subr.mxu0 %v1012
    %3367 = vmatpush2.msra.mxu0 %v1011
    %3368 = vmatprep.subr.mxu0 %v1004
    %3369 = vmatpush2.msra.mxu0 %v1003
    %3370 = vmatprep.subr.mxu0 %v996
    %3371 = vmatpush2.msra.mxu0 %v995
    %3372 = vmatprep.subr.mxu0 %v988
    %3373 = vmatpush2.msra.mxu0 %v987
    %3374 = vmatprep.subr.mxu0 %v980
    %3375 = vmatpush2.msra.mxu0 %v979
    %3376 = vmatprep.subr.mxu0 %v972
    %3377 = vmatpush2.msra.mxu0 %v971
    %3378 = vmatprep.subr.mxu0 %v964
    %3379 = vmatpush2.msra.mxu0 %v963
    %3380 = vmatprep.subr.mxu0 %v956
    %3381 = vmatpush2.msra.mxu0 %v955
    %3382 = vmatprep.subr.mxu0 %v948
    %3383 = vmatpush2.msra.mxu0 %v947
    %3384 = vmatprep.subr.mxu0 %v940
    %3385 = vmatpush2.msra.mxu0 %v939
    %3386 = vmatprep.subr.mxu0 %v932
    %3387 = vmatpush2.msra.mxu0 %v931
    %3388 = vmatprep.subr.mxu0 %v924
    %3389 = vmatpush2.msra.mxu0 %v923
    %3390 = vmatprep.subr.mxu0 %v916
    %3391 = vmatpush2.msra.mxu0 %v915
    %3392 = vmatprep.subr.mxu0 %v908
    %3393 = vmatpush2.msra.mxu0 %v907
    %3394 = vmatprep.mubr.f32.mxu0 %v3108
    %3395 = vmatmul.mubr.f32.gmra.mxu0 %v3107
    %v3396 = vpop.f32.mrf.mxu0
    %v3397 = vadd.f32 0.0, %v3396
    %v3398 = vpop.f32.mrf.mxu0
    %v3399 = vadd.f32 0.0, %v3398
    %3400 = vdwg.mxu0
    %v3401 = vadd.f32 %v3109, %v3184
    %v3402 = vadd.f32 %v3110, %v3186
    %v3403 = vadd.f32 %v3111, %v3255
    %v3404 = vadd.f32 %v3112, %v3257
    %v3405 = vadd.f32 %v3113, %v3326
    %v3406 = vadd.f32 %v3114, %v3328
    %v3407 = vadd.f32 %v3115, %v3397
    %v3408 = vadd.f32 %v3116, %v3399
    %v3409 = vxor.u32 %v3401, 2147483648
    %v3410 = vxor.u32 %v3402, 2147483648
    %v3411 = vmul.f32 %v3409, 1.442695
    %v3412 = vpow.pop %v3411
    %v3413 = vmul.f32 %v3410, 1.442695
    %v3414 = vpow.pop %v3413
    %v3415 = vadd.f32 %v3412, 1.0
    %v3416 = vadd.f32 %v3414, 1.0
    %v3417 = vrcp.pop %v3415
    %v3418 = vmul.f32 1.0, %v3417
    %v3419 = vrcp.pop %v3416
    %v3420 = vmul.f32 1.0, %v3419
    %v3421 = vxor.u32 %v3403, 2147483648
    %v3422 = vxor.u32 %v3404, 2147483648
    %v3423 = vmul.f32 %v3421, 1.442695
    %v3424 = vpow.pop %v3423
    %v3425 = vmul.f32 %v3422, 1.442695
    %v3426 = vpow.pop %v3425
    %v3427 = vadd.f32 %v3424, 1.0
    %v3428 = vadd.f32 %v3426, 1.0
    %v3429 = vrcp.pop %v3427
    %v3430 = vmul.f32 1.0, %v3429
    %v3431 = vrcp.pop %v3428
    %v3432 = vmul.f32 1.0, %v3431
    %v3433 = vtanh.pop %v3405
    %v3434 = vtanh.pop %v3406
    %v3435 = vxor.u32 %v3407, 2147483648
    %v3436 = vxor.u32 %v3408, 2147483648
    %v3437 = vmul.f32 %v3435, 1.442695
    %v3438 = vpow.pop %v3437
    %v3439 = vmul.f32 %v3436, 1.442695
    %v3440 = vpow.pop %v3439
    %v3441 = vadd.f32 %v3438, 1.0
    %v3442 = vadd.f32 %v3440, 1.0
    %v3443 = vrcp.pop %v3441
    %v3444 = vmul.f32 1.0, %v3443
    %v3445 = vrcp.pop %v3442
    %v3446 = vmul.f32 1.0, %v3445
    %v3447 = vmul.f32 %v3430, %v3103
    %v3448 = vmul.f32 %v3432, %v3104
    %v3449 = vmul.f32 %v3418, %v3433
    %v3450 = vmul.f32 %v3420, %v3434
    %v3451 = vadd.f32 %v3447, %v3449
    %v3452 = vadd.f32 %v3448, %v3450
    %v3453 = vtanh.pop %v3451
    %v3454 = vtanh.pop %v3452
    %v3455 = vmul.f32 %v3444, %v3453
    %v3456 = vmul.f32 %v3446, %v3454
    %v3457 = vld [vmem:[#allocation2 + $0x1c0] sm:$0xff]
    %v3458 = vld [vmem:[#allocation2 + $0x1c8] sm:$0xff]
    %v3459 = vld [vmem:[#allocation2 + $0x1d0] sm:$0xff]
    %v3460 = vld [vmem:[#allocation2 + $0x1d8] sm:$0xff]
    %v3461 = vld [vmem:[#allocation2 + $0x1e0] sm:$0xff]
    %v3462 = vld [vmem:[#allocation2 + $0x1e8] sm:$0xff]
    %v3463 = vld [vmem:[#allocation2 + $0x1f0] sm:$0xff]
    %v3464 = vld [vmem:[#allocation2 + $0x1f8] sm:$0xff]
    %3465 = vmatprep.subr.mxu0 %v894
    %3466 = vmatpush1.msra.mxu0 %v893
    %3467 = vmatprep.subr.mxu0 %v886
    %3468 = vmatpush1.msra.mxu0 %v885
    %3469 = vmatprep.subr.mxu0 %v878
    %3470 = vmatpush1.msra.mxu0 %v877
    %3471 = vmatprep.subr.mxu0 %v870
    %3472 = vmatpush1.msra.mxu0 %v869
    %3473 = vmatprep.subr.mxu0 %v862
    %3474 = vmatpush1.msra.mxu0 %v861
    %3475 = vmatprep.subr.mxu0 %v854
    %3476 = vmatpush1.msra.mxu0 %v853
    %3477 = vmatprep.subr.mxu0 %v846
    %3478 = vmatpush1.msra.mxu0 %v845
    %3479 = vmatprep.subr.mxu0 %v838
    %3480 = vmatpush1.msra.mxu0 %v837
    %3481 = vmatprep.subr.mxu0 %v830
    %3482 = vmatpush1.msra.mxu0 %v829
    %3483 = vmatprep.subr.mxu0 %v822
    %3484 = vmatpush1.msra.mxu0 %v821
    %3485 = vmatprep.subr.mxu0 %v814
    %3486 = vmatpush1.msra.mxu0 %v813
    %3487 = vmatprep.subr.mxu0 %v806
    %3488 = vmatpush1.msra.mxu0 %v805
    %3489 = vmatprep.subr.mxu0 %v798
    %3490 = vmatpush1.msra.mxu0 %v797
    %3491 = vmatprep.subr.mxu0 %v790
    %3492 = vmatpush1.msra.mxu0 %v789
    %3493 = vmatprep.subr.mxu0 %v782
    %3494 = vmatpush1.msra.mxu0 %v781
    %3495 = vmatprep.subr.mxu0 %v774
    %3496 = vmatpush1.msra.mxu0 %v773
    %3497 = vmatprep.subr.mxu0 %v1022
    %3498 = vmatpush2.msra.mxu0 %v1021
    %3499 = vmatprep.subr.mxu0 %v1014
    %3500 = vmatpush2.msra.mxu0 %v1013
    %3501 = vmatprep.subr.mxu0 %v1006
    %3502 = vmatpush2.msra.mxu0 %v1005
    %3503 = vmatprep.subr.mxu0 %v998
    %3504 = vmatpush2.msra.mxu0 %v997
    %3505 = vmatprep.subr.mxu0 %v990
    %3506 = vmatpush2.msra.mxu0 %v989
    %3507 = vmatprep.subr.mxu0 %v982
    %3508 = vmatpush2.msra.mxu0 %v981
    %3509 = vmatprep.subr.mxu0 %v974
    %3510 = vmatpush2.msra.mxu0 %v973
    %3511 = vmatprep.subr.mxu0 %v966
    %3512 = vmatpush2.msra.mxu0 %v965
    %3513 = vmatprep.subr.mxu0 %v958
    %3514 = vmatpush2.msra.mxu0 %v957
    %3515 = vmatprep.subr.mxu0 %v950
    %3516 = vmatpush2.msra.mxu0 %v949
    %3517 = vmatprep.subr.mxu0 %v942
    %3518 = vmatpush2.msra.mxu0 %v941
    %3519 = vmatprep.subr.mxu0 %v934
    %3520 = vmatpush2.msra.mxu0 %v933
    %3521 = vmatprep.subr.mxu0 %v926
    %3522 = vmatpush2.msra.mxu0 %v925
    %3523 = vmatprep.subr.mxu0 %v918
    %3524 = vmatpush2.msra.mxu0 %v917
    %3525 = vmatprep.subr.mxu0 %v910
    %3526 = vmatpush2.msra.mxu0 %v909
    %3527 = vmatprep.subr.mxu0 %v902
    %3528 = vmatpush2.msra.mxu0 %v901
    %3529 = vmatprep.mubr.f32.mxu0 %v3456
    %3530 = vmatmul.mubr.f32.gmra.mxu0 %v3455
    %v3531 = vpop.f32.mrf.mxu0
    %v3532 = vadd.f32 0.0, %v3531
    %v3533 = vpop.f32.mrf.mxu0
    %v3534 = vadd.f32 0.0, %v3533
    %3535 = vdwg.mxu0
    %3536 = vmatprep.subr.mxu0 %v896
    %3537 = vmatpush1.msra.mxu0 %v895
    %3538 = vmatprep.subr.mxu0 %v888
    %3539 = vmatpush1.msra.mxu0 %v887
    %3540 = vmatprep.subr.mxu0 %v880
    %3541 = vmatpush1.msra.mxu0 %v879
    %3542 = vmatprep.subr.mxu0 %v872
    %3543 = vmatpush1.msra.mxu0 %v871
    %3544 = vmatprep.subr.mxu0 %v864
    %3545 = vmatpush1.msra.mxu0 %v863
    %3546 = vmatprep.subr.mxu0 %v856
    %3547 = vmatpush1.msra.mxu0 %v855
    %3548 = vmatprep.subr.mxu0 %v848
    %3549 = vmatpush1.msra.mxu0 %v847
    %3550 = vmatprep.subr.mxu0 %v840
    %3551 = vmatpush1.msra.mxu0 %v839
    %3552 = vmatprep.subr.mxu0 %v832
    %3553 = vmatpush1.msra.mxu0 %v831
    %3554 = vmatprep.subr.mxu0 %v824
    %3555 = vmatpush1.msra.mxu0 %v823
    %3556 = vmatprep.subr.mxu0 %v816
    %3557 = vmatpush1.msra.mxu0 %v815
    %3558 = vmatprep.subr.mxu0 %v808
    %3559 = vmatpush1.msra.mxu0 %v807
    %3560 = vmatprep.subr.mxu0 %v800
    %3561 = vmatpush1.msra.mxu0 %v799
    %3562 = vmatprep.subr.mxu0 %v792
    %3563 = vmatpush1.msra.mxu0 %v791
    %3564 = vmatprep.subr.mxu0 %v784
    %3565 = vmatpush1.msra.mxu0 %v783
    %3566 = vmatprep.subr.mxu0 %v776
    %3567 = vmatpush1.msra.mxu0 %v775
    %3568 = vmatprep.subr.mxu0 %v1024
    %3569 = vmatpush2.msra.mxu0 %v1023
    %3570 = vmatprep.subr.mxu0 %v1016
    %3571 = vmatpush2.msra.mxu0 %v1015
    %3572 = vmatprep.subr.mxu0 %v1008
    %3573 = vmatpush2.msra.mxu0 %v1007
    %3574 = vmatprep.subr.mxu0 %v1000
    %3575 = vmatpush2.msra.mxu0 %v999
    %3576 = vmatprep.subr.mxu0 %v992
    %3577 = vmatpush2.msra.mxu0 %v991
    %3578 = vmatprep.subr.mxu0 %v984
    %3579 = vmatpush2.msra.mxu0 %v983
    %3580 = vmatprep.subr.mxu0 %v976
    %3581 = vmatpush2.msra.mxu0 %v975
    %3582 = vmatprep.subr.mxu0 %v968
    %3583 = vmatpush2.msra.mxu0 %v967
    %3584 = vmatprep.subr.mxu0 %v960
    %3585 = vmatpush2.msra.mxu0 %v959
    %3586 = vmatprep.subr.mxu0 %v952
    %3587 = vmatpush2.msra.mxu0 %v951
    %3588 = vmatprep.subr.mxu0 %v944
    %3589 = vmatpush2.msra.mxu0 %v943
    %3590 = vmatprep.subr.mxu0 %v936
    %3591 = vmatpush2.msra.mxu0 %v935
    %3592 = vmatprep.subr.mxu0 %v928
    %3593 = vmatpush2.msra.mxu0 %v927
    %3594 = vmatprep.subr.mxu0 %v920
    %3595 = vmatpush2.msra.mxu0 %v919
    %3596 = vmatprep.subr.mxu0 %v912
    %3597 = vmatpush2.msra.mxu0 %v911
    %3598 = vmatprep.subr.mxu0 %v904
    %3599 = vmatpush2.msra.mxu0 %v903
    %3600 = vmatprep.mubr.f32.mxu0 %v3456
    %3601 = vmatmul.mubr.f32.gmra.mxu0 %v3455
    %v3602 = vpop.f32.mrf.mxu0
    %v3603 = vadd.f32 0.0, %v3602
    %v3604 = vpop.f32.mrf.mxu0
    %v3605 = vadd.f32 0.0, %v3604
    %3606 = vdwg.mxu0
    %3607 = vmatprep.subr.mxu0 %v898
    %3608 = vmatpush1.msra.mxu0 %v897
    %3609 = vmatprep.subr.mxu0 %v890
    %3610 = vmatpush1.msra.mxu0 %v889
    %3611 = vmatprep.subr.mxu0 %v882
    %3612 = vmatpush1.msra.mxu0 %v881
    %3613 = vmatprep.subr.mxu0 %v874
    %3614 = vmatpush1.msra.mxu0 %v873
    %3615 = vmatprep.subr.mxu0 %v866
    %3616 = vmatpush1.msra.mxu0 %v865
    %3617 = vmatprep.subr.mxu0 %v858
    %3618 = vmatpush1.msra.mxu0 %v857
    %3619 = vmatprep.subr.mxu0 %v850
    %3620 = vmatpush1.msra.mxu0 %v849
    %3621 = vmatprep.subr.mxu0 %v842
    %3622 = vmatpush1.msra.mxu0 %v841
    %3623 = vmatprep.subr.mxu0 %v834
    %3624 = vmatpush1.msra.mxu0 %v833
    %3625 = vmatprep.subr.mxu0 %v826
    %3626 = vmatpush1.msra.mxu0 %v825
    %3627 = vmatprep.subr.mxu0 %v818
    %3628 = vmatpush1.msra.mxu0 %v817
    %3629 = vmatprep.subr.mxu0 %v810
    %3630 = vmatpush1.msra.mxu0 %v809
    %3631 = vmatprep.subr.mxu0 %v802
    %3632 = vmatpush1.msra.mxu0 %v801
    %3633 = vmatprep.subr.mxu0 %v794
    %3634 = vmatpush1.msra.mxu0 %v793
    %3635 = vmatprep.subr.mxu0 %v786
    %3636 = vmatpush1.msra.mxu0 %v785
    %3637 = vmatprep.subr.mxu0 %v778
    %3638 = vmatpush1.msra.mxu0 %v777
    %3639 = vmatprep.subr.mxu0 %v1026
    %3640 = vmatpush2.msra.mxu0 %v1025
    %3641 = vmatprep.subr.mxu0 %v1018
    %3642 = vmatpush2.msra.mxu0 %v1017
    %3643 = vmatprep.subr.mxu0 %v1010
    %3644 = vmatpush2.msra.mxu0 %v1009
    %3645 = vmatprep.subr.mxu0 %v1002
    %3646 = vmatpush2.msra.mxu0 %v1001
    %3647 = vmatprep.subr.mxu0 %v994
    %3648 = vmatpush2.msra.mxu0 %v993
    %3649 = vmatprep.subr.mxu0 %v986
    %3650 = vmatpush2.msra.mxu0 %v985
    %3651 = vmatprep.subr.mxu0 %v978
    %3652 = vmatpush2.msra.mxu0 %v977
    %3653 = vmatprep.subr.mxu0 %v970
    %3654 = vmatpush2.msra.mxu0 %v969
    %3655 = vmatprep.subr.mxu0 %v962
    %3656 = vmatpush2.msra.mxu0 %v961
    %3657 = vmatprep.subr.mxu0 %v954
    %3658 = vmatpush2.msra.mxu0 %v953
    %3659 = vmatprep.subr.mxu0 %v946
    %3660 = vmatpush2.msra.mxu0 %v945
    %3661 = vmatprep.subr.mxu0 %v938
    %3662 = vmatpush2.msra.mxu0 %v937
    %3663 = vmatprep.subr.mxu0 %v930
    %3664 = vmatpush2.msra.mxu0 %v929
    %3665 = vmatprep.subr.mxu0 %v922
    %3666 = vmatpush2.msra.mxu0 %v921
    %3667 = vmatprep.subr.mxu0 %v914
    %3668 = vmatpush2.msra.mxu0 %v913
    %3669 = vmatprep.subr.mxu0 %v906
    %3670 = vmatpush2.msra.mxu0 %v905
    %3671 = vmatprep.mubr.f32.mxu0 %v3456
    %3672 = vmatmul.mubr.f32.gmra.mxu0 %v3455
    %v3673 = vpop.f32.mrf.mxu0
    %v3674 = vadd.f32 0.0, %v3673
    %v3675 = vpop.f32.mrf.mxu0
    %v3676 = vadd.f32 0.0, %v3675
    %3677 = vdwg.mxu0
    %3678 = vmatprep.subr.mxu0 %v900
    %3679 = vmatpush1.msra.mxu0 %v899
    %3680 = vmatprep.subr.mxu0 %v892
    %3681 = vmatpush1.msra.mxu0 %v891
    %3682 = vmatprep.subr.mxu0 %v884
    %3683 = vmatpush1.msra.mxu0 %v883
    %3684 = vmatprep.subr.mxu0 %v876
    %3685 = vmatpush1.msra.mxu0 %v875
    %3686 = vmatprep.subr.mxu0 %v868
    %3687 = vmatpush1.msra.mxu0 %v867
    %3688 = vmatprep.subr.mxu0 %v860
    %3689 = vmatpush1.msra.mxu0 %v859
    %3690 = vmatprep.subr.mxu0 %v852
    %3691 = vmatpush1.msra.mxu0 %v851
    %3692 = vmatprep.subr.mxu0 %v844
    %3693 = vmatpush1.msra.mxu0 %v843
    %3694 = vmatprep.subr.mxu0 %v836
    %3695 = vmatpush1.msra.mxu0 %v835
    %3696 = vmatprep.subr.mxu0 %v828
    %3697 = vmatpush1.msra.mxu0 %v827
    %3698 = vmatprep.subr.mxu0 %v820
    %3699 = vmatpush1.msra.mxu0 %v819
    %3700 = vmatprep.subr.mxu0 %v812
    %3701 = vmatpush1.msra.mxu0 %v811
    %3702 = vmatprep.subr.mxu0 %v804
    %3703 = vmatpush1.msra.mxu0 %v803
    %3704 = vmatprep.subr.mxu0 %v796
    %3705 = vmatpush1.msra.mxu0 %v795
    %3706 = vmatprep.subr.mxu0 %v788
    %3707 = vmatpush1.msra.mxu0 %v787
    %3708 = vmatprep.subr.mxu0 %v780
    %3709 = vmatpush1.msra.mxu0 %v779
    %3710 = vmatprep.subr.mxu0 %v1028
    %3711 = vmatpush2.msra.mxu0 %v1027
    %3712 = vmatprep.subr.mxu0 %v1020
    %3713 = vmatpush2.msra.mxu0 %v1019
    %3714 = vmatprep.subr.mxu0 %v1012
    %3715 = vmatpush2.msra.mxu0 %v1011
    %3716 = vmatprep.subr.mxu0 %v1004
    %3717 = vmatpush2.msra.mxu0 %v1003
    %3718 = vmatprep.subr.mxu0 %v996
    %3719 = vmatpush2.msra.mxu0 %v995
    %3720 = vmatprep.subr.mxu0 %v988
    %3721 = vmatpush2.msra.mxu0 %v987
    %3722 = vmatprep.subr.mxu0 %v980
    %3723 = vmatpush2.msra.mxu0 %v979
    %3724 = vmatprep.subr.mxu0 %v972
    %3725 = vmatpush2.msra.mxu0 %v971
    %3726 = vmatprep.subr.mxu0 %v964
    %3727 = vmatpush2.msra.mxu0 %v963
    %3728 = vmatprep.subr.mxu0 %v956
    %3729 = vmatpush2.msra.mxu0 %v955
    %3730 = vmatprep.subr.mxu0 %v948
    %3731 = vmatpush2.msra.mxu0 %v947
    %3732 = vmatprep.subr.mxu0 %v940
    %3733 = vmatpush2.msra.mxu0 %v939
    %3734 = vmatprep.subr.mxu0 %v932
    %3735 = vmatpush2.msra.mxu0 %v931
    %3736 = vmatprep.subr.mxu0 %v924
    %3737 = vmatpush2.msra.mxu0 %v923
    %3738 = vmatprep.subr.mxu0 %v916
    %3739 = vmatpush2.msra.mxu0 %v915
    %3740 = vmatprep.subr.mxu0 %v908
    %3741 = vmatpush2.msra.mxu0 %v907
    %3742 = vmatprep.mubr.f32.mxu0 %v3456
    %3743 = vmatmul.mubr.f32.gmra.mxu0 %v3455
    %v3744 = vpop.f32.mrf.mxu0
    %v3745 = vadd.f32 0.0, %v3744
    %v3746 = vpop.f32.mrf.mxu0
    %v3747 = vadd.f32 0.0, %v3746
    %3748 = vdwg.mxu0
    %v3749 = vadd.f32 %v3457, %v3532
    %v3750 = vadd.f32 %v3458, %v3534
    %v3751 = vadd.f32 %v3459, %v3603
    %v3752 = vadd.f32 %v3460, %v3605
    %v3753 = vadd.f32 %v3461, %v3674
    %v3754 = vadd.f32 %v3462, %v3676
    %v3755 = vadd.f32 %v3463, %v3745
    %v3756 = vadd.f32 %v3464, %v3747
    %v3757 = vxor.u32 %v3749, 2147483648
    %v3758 = vxor.u32 %v3750, 2147483648
    %v3759 = vmul.f32 %v3757, 1.442695
    %v3760 = vpow.pop %v3759
    %v3761 = vmul.f32 %v3758, 1.442695
    %v3762 = vpow.pop %v3761
    %v3763 = vadd.f32 %v3760, 1.0
    %v3764 = vadd.f32 %v3762, 1.0
    %v3765 = vrcp.pop %v3763
    %v3766 = vmul.f32 1.0, %v3765
    %v3767 = vrcp.pop %v3764
    %v3768 = vmul.f32 1.0, %v3767
    %v3769 = vxor.u32 %v3751, 2147483648
    %v3770 = vxor.u32 %v3752, 2147483648
    %v3771 = vmul.f32 %v3769, 1.442695
    %v3772 = vpow.pop %v3771
    %v3773 = vmul.f32 %v3770, 1.442695
    %v3774 = vpow.pop %v3773
    %v3775 = vadd.f32 %v3772, 1.0
    %v3776 = vadd.f32 %v3774, 1.0
    %v3777 = vrcp.pop %v3775
    %v3778 = vmul.f32 1.0, %v3777
    %v3779 = vrcp.pop %v3776
    %v3780 = vmul.f32 1.0, %v3779
    %v3781 = vtanh.pop %v3753
    %v3782 = vtanh.pop %v3754
    %v3783 = vxor.u32 %v3755, 2147483648
    %v3784 = vxor.u32 %v3756, 2147483648
    %v3785 = vmul.f32 %v3783, 1.442695
    %v3786 = vpow.pop %v3785
    %v3787 = vmul.f32 %v3784, 1.442695
    %v3788 = vpow.pop %v3787
    %v3789 = vadd.f32 %v3786, 1.0
    %v3790 = vadd.f32 %v3788, 1.0
    %v3791 = vrcp.pop %v3789
    %v3792 = vmul.f32 1.0, %v3791
    %v3793 = vrcp.pop %v3790
    %v3794 = vmul.f32 1.0, %v3793
    %v3795 = vmul.f32 %v3778, %v3451
    %v3796 = vmul.f32 %v3780, %v3452
    %v3797 = vmul.f32 %v3766, %v3781
    %v3798 = vmul.f32 %v3768, %v3782
    %v3799 = vadd.f32 %v3795, %v3797
    %v3800 = vadd.f32 %v3796, %v3798
    %v3801 = vtanh.pop %v3799
    %v3802 = vtanh.pop %v3800
    %v3803 = vmul.f32 %v3792, %v3801
    %v3804 = vmul.f32 %v3794, %v3802
    %3805 = vst [vmem:[#allocation11] sm:$0xff] %v3803
    %3806 = vst [vmem:[#allocation11 + $0x8] sm:$0xff] %v3804
    // Predicated region
    $region34: #{tpu_custom_call.1} parent=1 // pred_check
      _
    $region35: #{tpu_custom_call.1} parent=1 // pred_check_branch
      %3808 = sbr.rel (0) target = $region37
    $region36: #{tpu_custom_call.1} parent=1 // pred_region
      %s3810 = ssub.s32 256, 256
      %3811 = vsyncadd [#allocation5], %s3810
      %s3813 = sshll.u32 [#allocation11], 4
      %s3814 = int_to_ptr.vmem [resolvable:$true] %s3813
      %3816 = dma.vmem_to_hbm [thread:$0]  %s3814, 256, %s4, [#allocation5]
    $region37: #{tpu_custom_call.1} parent=1 // pred_fallthru
      _
    // Predicated region
    $region38: #{tpu_custom_call.1} parent=1 // pred_check
      _
    $region39: #{tpu_custom_call.1} parent=1 // pred_check_branch
      %3818 = sbr.rel (0) target = $region41
    $region40: #{tpu_custom_call.1} parent=1 // pred_region
      %3819 = dma.done [#allocation5], 256
    $region41: #{tpu_custom_call.1} parent=1 // pred_fallthru
      _
    %3820 = vsyncpa [#allocation4], 1
    %3821 = vsyncpa [#allocation7], 1
    %3822 = vsyncpa [#allocation10], 1
    %3823 = vsyncpa [#allocation5], 1

</llo_original>
